<compile_context>
chip_gen: v7x
topology: tpu7x:2x2x1
jax: 0.10.0
libtpu: 0.0.40
codegen_flags: <defaults>
</compile_context>

<pallas_src>
import functools
import math

import jax
import jax.numpy as jnp
from jax import lax
from jax.experimental import pallas as pl
from jax.experimental.pallas import tpu as pltpu

_LANE = 128


def _round_up(n, m):
    return ((n + m - 1) // m) * m


@functools.lru_cache(maxsize=1)
def _vmem_limit_bytes():
    # ~75% of physical VMEM, capped at 96 MiB (v5e/v6e: 96 MiB, v7x: 48 MiB).
    cap = 64 * 1024 * 1024
    try:
        info = pltpu.get_tpu_info()
        cap = int(getattr(info, "vmem_capacity_bytes", cap))
    except Exception:
        pass
    return int(min(cap * 3 // 4, 96 * 1024 * 1024))


# -----------------------------------------------------------------------------
# Pass 1: 3x3 conv as shift-accumulated MXU matmuls (row-chunked) + BN partial stats
# -----------------------------------------------------------------------------
def _conv_stats_kernel(xpad_ref, w_ref, out_ref, stats_ref, *,
                       KH, KW, stride, dilation, Ho, Wo, HC, CT):
    """One image x one Cout tile per grid step.

    xpad_ref : (1, Hp, Wp, Cin_p)      bf16, halo-padded
    w_ref    : (CT, KH*KW, Cin_p, TC)  bf16, fully VMEM-resident (constant index_map)
    out_ref  : (1, Ho, Wo, TC)         bf16 raw conv output
    stats_ref: (1, 2, TC)              f32 per-image (sum, sum of squares)
    """
    cin = xpad_ref.shape[3]
    tc = out_ref.shape[3]
    c = pl.program_id(1)
    s1 = jnp.zeros((1, tc), jnp.float32)
    s2 = jnp.zeros((1, tc), jnp.float32)
    for h0 in range(0, Ho, HC):
        # Chunk accumulator lives in vregs (and the MXU result path on v7x); it is
        # written to out_ref exactly once per chunk.
        acc = jnp.zeros((HC * Wo, tc), jnp.float32)
        for i in range(KH):
            for j in range(KW):
                i0 = i * dilation
                j0 = j * dilation
                if stride == 1:
                    tap = xpad_ref[0, i0 + h0:i0 + h0 + HC, j0:j0 + Wo, :]
                else:
                    # TODO(synk): pre-split stride phases (space-to-batch) in the
                    # wrapper to keep these reads contiguous on the fast vld path.
                    hs = i0 + h0 * stride
                    tap = xpad_ref[0, hs:hs + (HC - 1) * stride + 1,
                                      j0:j0 + (Wo - 1) * stride + 1, :]
                    tap = tap[::stride, ::stride, :]
                tap = tap.reshape(HC * Wo, cin)                # bf16, lane-dense
                if CT == 1:
                    w_tap = w_ref[0, i * KW + j]
                else:
                    w_tap = w_ref[c, i * KW + j]
                acc = acc + jnp.dot(tap, w_tap,
                                    preferred_element_type=jnp.float32)
        out_ref[0, h0:h0 + HC, :, :] = acc.reshape(HC, Wo, tc).astype(out_ref.dtype)
        s1 = s1 + jnp.sum(acc, axis=0, keepdims=True)
        s2 = s2 + jnp.sum(acc * acc, axis=0, keepdims=True)
    stats_ref[:, 0:1, :] = s1[None]
    stats_ref[:, 1:2, :] = s2[None]


def conv2d_stats_pallas(xpad, w_blk, *, KH, KW, stride, dilation, Ho, Wo):
    """xpad: (N, Hp, Wp, Cin_p) bf16 (halo + channel padded).
    w_blk: (Ct, KH*KW, Cin_p, TC) bf16.
    Returns conv_raw (N, Ho, Wo, Cout_p) bf16, stats (N, 2, Cout_p) f32."""
    N, Hp, Wp, Cin = xpad.shape
    Ct, ktaps, wcin, TC = w_blk.shape
    assert ktaps == KH * KW and wcin == Cin
    Cout = Ct * TC

    # Row chunk: ~256 output rows (TC=128) so the f32 accumulator stays register-sized.
    target_rows = max(Wo, 32768 // TC)
    HC = Ho
    for cand in range(Ho, 0, -1):
        if Ho % cand == 0 and cand * Wo <= target_rows:
            HC = cand
            break

    kernel = functools.partial(_conv_stats_kernel, KH=KH, KW=KW, stride=stride,
                               dilation=dilation, Ho=Ho, Wo=Wo, HC=HC, CT=Ct)
    flops = 2 * N * Ho * Wo * KH * KW * Cin * Cout
    bytes_accessed = (xpad.size * 2 + w_blk.size * 2
                      + N * Ho * Wo * Cout * 2 + N * 2 * Cout * 4)
    conv_raw, stats = pl.pallas_call(
        kernel,
        out_shape=(jax.ShapeDtypeStruct((N, Ho, Wo, Cout), jnp.bfloat16),
                   jax.ShapeDtypeStruct((N, 2, Cout), jnp.float32)),
        grid=(N, Ct),
        in_specs=[
            # One halo-padded image per grid step (double-buffered by Pallas, and
            # resident across the inner Cout-tile axis).
            pl.BlockSpec((1, Hp, Wp, Cin), lambda n, c: (n, 0, 0, 0)),
            # Full weight with a constant block index: DMA'd once, never re-fetched.
            pl.BlockSpec((Ct, ktaps, Cin, TC), lambda n, c: (0, 0, 0, 0)),
        ],
        out_specs=(
            pl.BlockSpec((1, Ho, Wo, TC), lambda n, c: (n, 0, 0, c)),
            pl.BlockSpec((1, 2, TC), lambda n, c: (n, 0, c)),
        ),
        compiler_params=pltpu.CompilerParams(
            dimension_semantics=("parallel", "parallel"),
            vmem_limit_bytes=_vmem_limit_bytes()),
        cost_estimate=pl.CostEstimate(flops=int(flops), transcendentals=0,
                                      bytes_accessed=int(bytes_accessed)),
    )(xpad, w_blk)
    return conv_raw, stats


# -----------------------------------------------------------------------------
# Pass 2: folded BatchNorm apply (+ optional ReLU), optionally writing straight
# into a halo-padded buffer (so conv2 needs no separate jnp.pad round trip).
# -----------------------------------------------------------------------------
def _bn_apply_kernel(x_ref, scale_ref, bias_ref, o_ref, *, relu, pad):
    y = x_ref[0].astype(jnp.float32) * scale_ref[...] + bias_ref[...]
    if relu:
        y = jnp.maximum(y, 0.0)
    y = y.astype(o_ref.dtype)
    if pad == 0:
        o_ref[0] = y
    else:
        H, W = y.shape[0], y.shape[1]
        o_ref[...] = jnp.zeros_like(o_ref)            # zero halo border
        o_ref[0, pad:pad + H, pad:pad + W, :] = y      # interior


def bn_apply_pallas(x, scale, bias, *, relu, pad, out_dtype):
    """x: (N, H, W, C); scale/bias: (1, C) f32.  Returns (N, H+2p, W+2p, C)."""
    N, H, W, C = x.shape
    TC = 256 if C % 256 == 0 else _LANE
    Hp, Wp = H + 2 * pad, W + 2 * pad
    kernel = functools.partial(_bn_apply_kernel, relu=relu, pad=pad)
    out_bytes = N * Hp * Wp * C * jnp.dtype(out_dtype).itemsize
    return pl.pallas_call(
        kernel,
        out_shape=jax.ShapeDtypeStruct((N, Hp, Wp, C), out_dtype),
        grid=(N, C // TC),
        in_specs=[
            pl.BlockSpec((1, H, W, TC), lambda n, c: (n, 0, 0, c)),
            pl.BlockSpec((1, TC), lambda n, c: (0, c)),
            pl.BlockSpec((1, TC), lambda n, c: (0, c)),
        ],
        out_specs=pl.BlockSpec((1, Hp, Wp, TC), lambda n, c: (n, 0, 0, c)),
        compiler_params=pltpu.CompilerParams(
            dimension_semantics=("parallel", "parallel"),
            vmem_limit_bytes=_vmem_limit_bytes()),
        cost_estimate=pl.CostEstimate(
            flops=int(3 * N * H * W * C), transcendentals=0,
            bytes_accessed=int(x.size * x.dtype.itemsize + out_bytes + 2 * C * 4)),
    )(x, scale, bias)


# -----------------------------------------------------------------------------
# Tiny wrapper math: fold batch stats into per-channel scale / bias (f32, O(C))
# -----------------------------------------------------------------------------
def _fold_bn(stats, gamma, beta, count, eps):
    total = jnp.sum(stats, axis=0)                       # (2, C)
    mean = total[0] / count
    var = jnp.maximum(total[1] / count - mean * mean, 0.0)
    scale = gamma * lax.rsqrt(var + eps)
    bias = beta - mean * scale
    return scale[None, :], bias[None, :]


def _torch_weight_to_blocks(w_oihw, cin_p, cout_p, tc):
    # (C_out, C_in, KH, KW) -> (Ct, KH*KW, Cin_p, TC) bf16, zero-padded channels.
    co, ci, kh, kw = w_oihw.shape
    taps = jnp.transpose(w_oihw, (2, 3, 1, 0)).reshape(kh * kw, ci, co)
    taps = jnp.pad(taps, ((0, 0), (0, cin_p - ci), (0, cout_p - co)))
    ct = cout_p // tc
    taps = taps.reshape(kh * kw, cin_p, ct, tc).transpose(2, 0, 1, 3)
    return taps.astype(jnp.bfloat16)


# -----------------------------------------------------------------------------
# BasicBlock module (parameters built deterministically in-script)
# -----------------------------------------------------------------------------
class BasicBlockPallas:
    expansion = 1

    def __init__(self, inplanes, planes, stride=1, dilation=1, *, key):
        self.inplanes = inplanes
        self.planes = planes
        self.stride = stride
        self.dilation = dilation
        self.eps = 1e-5
        self.cin_p = _round_up(inplanes, _LANE)
        self.cmid_p = _round_up(planes, _LANE)
        tc = 256 if self.cmid_p % 256 == 0 else _LANE

        k1, k2 = jax.random.split(key)
        bound1 = 1.0 / math.sqrt(inplanes * 9)
        bound2 = 1.0 / math.sqrt(planes * 9)
        w1 = jax.random.uniform(k1, (planes, inplanes, 3, 3), jnp.float32,
                                -bound1, bound1)
        w2 = jax.random.uniform(k2, (planes, planes, 3, 3), jnp.float32,
                                -bound2, bound2)
        self.w1_blk = _torch_weight_to_blocks(w1, self.cin_p, self.cmid_p, tc)
        self.w2_blk = _torch_weight_to_blocks(w2, self.cmid_p, self.cmid_p, tc)

        # BatchNorm2d default init (gamma=1, beta=0, eps=1e-5).  Padded channels get
        # gamma=0/beta=0 so they normalize to exactly 0.
        self.gamma1 = jnp.zeros((self.cmid_p,), jnp.float32).at[:planes].set(1.0)
        self.beta1 = jnp.zeros((self.cmid_p,), jnp.float32)
        self.gamma2 = jnp.zeros((self.cmid_p,), jnp.float32).at[:planes].set(1.0)
        self.beta2 = jnp.zeros((self.cmid_p,), jnp.float32)

    def __call__(self, x_nchw):
        N, _, H, W = x_nchw.shape
        # NCHW -> NHWC, bf16 cast, one fused (spatial halo + lane-dense channel) pad.
        x = jnp.transpose(x_nchw, (0, 2, 3, 1)).astype(jnp.bfloat16)
        xpad = jnp.pad(x, ((0, 0), (1, 1), (1, 1),
                           (0, self.cin_p - self.inplanes)))

        # --- conv1 (k3, s1, p1) + per-image BN partial stats ------------------
        Ho1, Wo1 = H, W
        conv1_raw, stats1 = conv2d_stats_pallas(
            xpad, self.w1_blk, KH=3, KW=3, stride=1, dilation=1, Ho=Ho1, Wo=Wo1)
        scale1, bias1 = _fold_bn(stats1, self.gamma1, self.beta1,
                                 N * Ho1 * Wo1, self.eps)

        # --- bn1(train) + relu, written straight into conv2's halo-padded input
        d, s = self.dilation, self.stride
        h1p = bn_apply_pallas(conv1_raw, scale1, bias1, relu=True, pad=d,
                              out_dtype=jnp.bfloat16)

        # --- conv2 (k3, stride, pad=dilation, dilation) + BN partial stats -----
        Ho2 = (Ho1 - 1) // s + 1
        Wo2 = (Wo1 - 1) // s + 1
        conv2_raw, stats2 = conv2d_stats_pallas(
            h1p, self.w2_blk, KH=3, KW=3, stride=s, dilation=d, Ho=Ho2, Wo=Wo2)
        scale2, bias2 = _fold_bn(stats2, self.gamma2, self.beta2,
                                 N * Ho2 * Wo2, self.eps)
        out = bn_apply_pallas(conv2_raw, scale2, bias2, relu=False, pad=0,
                              out_dtype=jnp.float32)
        out = out[..., :self.planes]
        return jnp.transpose(out, (0, 3, 1, 2))                       # NHWC -> NCHW


# -----------------------------------------------------------------------------
# Pure-JAX reference mirroring the kernel numerics (bf16 conv operands/outputs,
# f32 accumulation and batch statistics).
# -----------------------------------------------------------------------------
def reference_forward(block, x_nchw):
    eps = block.eps
    dn = ("NHWC", "HWIO", "NHWC")
    x = jnp.transpose(x_nchw, (0, 2, 3, 1)).astype(jnp.bfloat16)
    x = jnp.pad(x, ((0, 0), (0, 0), (0, 0), (0, block.cin_p - block.inplanes)))

    def unblock(wblk):
        ct, taps, cin, tc = wblk.shape
        w = jnp.transpose(wblk, (1, 2, 0, 3)).reshape(taps, cin, ct * tc)
        return w.reshape(3, 3, cin, ct * tc)                          # HWIO

    w1 = unblock(block.w1_blk)
    w2 = unblock(block.w2_blk)

    def fold(y, gamma, beta):
        mean = jnp.mean(y, axis=(0, 1, 2))
        var = jnp.maximum(jnp.mean(y * y, axis=(0, 1, 2)) - mean * mean, 0.0)
        scale = gamma * lax.rsqrt(var + eps)
        return scale, beta - mean * scale

    y1 = lax.conv_general_dilated(x, w1, (1, 1), ((1, 1), (1, 1)),
                                  dimension_numbers=dn,
                                  preferred_element_type=jnp.float32)
    s1, b1 = fold(y1, block.gamma1, block.beta1)
    h = jnp.maximum(y1.astype(jnp.bfloat16).astype(jnp.float32) * s1 + b1, 0.0)
    h = h.astype(jnp.bfloat16)

    d, s = block.dilation, block.stride
    y2 = lax.conv_general_dilated(h, w2, (s, s), ((d, d), (d, d)),
                                  rhs_dilation=(d, d), dimension_numbers=dn,
                                  preferred_element_type=jnp.float32)
    s2, b2 = fold(y2, block.gamma2, block.beta2)
    out = y2.astype(jnp.bfloat16).astype(jnp.float32) * s2 + b2
    return jnp.transpose(out[..., :block.planes], (0, 3, 1, 2))


if __name__ == "__main__":
    key = jax.random.PRNGKey(0)
    kx, kp = jax.random.split(key)

    inplanes, planes = 4, 8
    x = jax.random.normal(kx, (2, inplanes, 16, 16), jnp.float32)     # NCHW like torch

    block = BasicBlockPallas(inplanes, planes, stride=1, dilation=1, key=kp)

    out = jax.block_until_ready(block(x))
    ref = jax.block_until_ready(reference_forward(block, x))

    assert out.shape == ref.shape == (2, planes, 16, 16), out.shape
    max_err = float(jnp.max(jnp.abs(out - ref)))
    # Both paths use bf16 MXU operands and bf16 intermediates; residual divergence is
    # summation-order noise far below this bound.
    assert jnp.allclose(out, ref, rtol=2e-2, atol=2e-2), max_err

    print("KERNEL_OK")
</pallas_src>

<mosaic_0001>
module attributes {stable_mosaic.version = 11 : i64} {
  func.func @_conv_stats_kernel(%arg0: i32, %arg1: i32, %arg2: memref<1x18x18x128xbf16, #tpu.memory_space<vmem>>, %arg3: memref<1x9x128x128xbf16, #tpu.memory_space<vmem>>, %arg4: memref<1x16x16x128xbf16, #tpu.memory_space<vmem>>, %arg5: memref<1x2x128xf32, #tpu.memory_space<vmem>>) attributes {dimension_semantics = [#tpu.dimension_semantics<parallel>, #tpu.dimension_semantics<parallel>], iteration_bounds = array<i64: 2, 1>, scalar_prefetch = 0 : i64, scratch_operands = 0 : i64, tpu.core_type = #tpu.core_type<tc>, window_params = [{transform_indices = @transform_0, window_bounds = array<i64: 1, 18, 18, 128>}, {pipeline_mode = #tpu.pipeline_mode<synchronous>, transform_indices = @transform_1, window_bounds = array<i64: 1, 9, 128, 128>}, {transform_indices = @transform_2, window_bounds = array<i64: 1, 16, 16, 128>}, {transform_indices = @transform_3, window_bounds = array<i64: 1, 2, 128>}]} {
    %cst = arith.constant 0.000000e+00 : f32
    %0 = vector.broadcast %cst : f32 to vector<1x128xf32>
    %cst_0 = arith.constant 0.000000e+00 : f32
    %1 = vector.broadcast %cst_0 : f32 to vector<1x128xf32>
    %cst_1 = arith.constant 0.000000e+00 : f32
    %2 = vector.broadcast %cst_1 : f32 to vector<256x128xf32>
    %c0 = arith.constant 0 : index
    %c0_2 = arith.constant 0 : index
    %c0_3 = arith.constant 0 : index
    %c0_4 = arith.constant 0 : index
    %3 = vector.load %arg2[%c0, %c0_2, %c0_3, %c0_4] : memref<1x18x18x128xbf16, #tpu.memory_space<vmem>>, vector<1x16x16x128xbf16>
    %4 = vector.shape_cast %3 : vector<1x16x16x128xbf16> to vector<16x16x128xbf16>
    %5 = vector.shape_cast %4 : vector<16x16x128xbf16> to vector<256x128xbf16>
    %c0_5 = arith.constant 0 : index
    %c0_6 = arith.constant 0 : index
    %c0_7 = arith.constant 0 : index
    %c0_8 = arith.constant 0 : index
    %6 = vector.load %arg3[%c0_5, %c0_6, %c0_7, %c0_8] : memref<1x9x128x128xbf16, #tpu.memory_space<vmem>>, vector<1x1x128x128xbf16>
    %7 = vector.shape_cast %6 : vector<1x1x128x128xbf16> to vector<128x128xbf16>
    %cst_9 = arith.constant dense<0.000000e+00> : vector<256x128xf32>
    %8 = tpu.matmul %5, %7, %cst_9 {dimension_numbers = #tpu.dot_dimension_numbers<[1], [0], [0], [1], [0, 0, 1, 1], [], []>} : vector<256x128xbf16>, vector<128x128xbf16>, vector<256x128xf32> -> vector<256x128xf32>
    %9 = arith.addf %2, %8 : vector<256x128xf32>
    %c0_10 = arith.constant 0 : index
    %c0_11 = arith.constant 0 : index
    %c1 = arith.constant 1 : index
    %c0_12 = arith.constant 0 : index
    %10 = vector.load %arg2[%c0_10, %c0_11, %c1, %c0_12] : memref<1x18x18x128xbf16, #tpu.memory_space<vmem>>, vector<1x16x16x128xbf16>
    %11 = vector.shape_cast %10 : vector<1x16x16x128xbf16> to vector<16x16x128xbf16>
    %12 = vector.shape_cast %11 : vector<16x16x128xbf16> to vector<256x128xbf16>
    %c0_13 = arith.constant 0 : index
    %c1_14 = arith.constant 1 : index
    %c0_15 = arith.constant 0 : index
    %c0_16 = arith.constant 0 : index
    %13 = vector.load %arg3[%c0_13, %c1_14, %c0_15, %c0_16] : memref<1x9x128x128xbf16, #tpu.memory_space<vmem>>, vector<1x1x128x128xbf16>
    %14 = vector.shape_cast %13 : vector<1x1x128x128xbf16> to vector<128x128xbf16>
    %cst_17 = arith.constant dense<0.000000e+00> : vector<256x128xf32>
    %15 = tpu.matmul %12, %14, %cst_17 {dimension_numbers = #tpu.dot_dimension_numbers<[1], [0], [0], [1], [0, 0, 1, 1], [], []>} : vector<256x128xbf16>, vector<128x128xbf16>, vector<256x128xf32> -> vector<256x128xf32>
    %16 = arith.addf %9, %15 : vector<256x128xf32>
    %c0_18 = arith.constant 0 : index
    %c0_19 = arith.constant 0 : index
    %c2 = arith.constant 2 : index
    %c0_20 = arith.constant 0 : index
    %17 = vector.load %arg2[%c0_18, %c0_19, %c2, %c0_20] : memref<1x18x18x128xbf16, #tpu.memory_space<vmem>>, vector<1x16x16x128xbf16>
    %18 = vector.shape_cast %17 : vector<1x16x16x128xbf16> to vector<16x16x128xbf16>
    %19 = vector.shape_cast %18 : vector<16x16x128xbf16> to vector<256x128xbf16>
    %c0_21 = arith.constant 0 : index
    %c2_22 = arith.constant 2 : index
    %c0_23 = arith.constant 0 : index
    %c0_24 = arith.constant 0 : index
    %20 = vector.load %arg3[%c0_21, %c2_22, %c0_23, %c0_24] : memref<1x9x128x128xbf16, #tpu.memory_space<vmem>>, vector<1x1x128x128xbf16>
    %21 = vector.shape_cast %20 : vector<1x1x128x128xbf16> to vector<128x128xbf16>
    %cst_25 = arith.constant dense<0.000000e+00> : vector<256x128xf32>
    %22 = tpu.matmul %19, %21, %cst_25 {dimension_numbers = #tpu.dot_dimension_numbers<[1], [0], [0], [1], [0, 0, 1, 1], [], []>} : vector<256x128xbf16>, vector<128x128xbf16>, vector<256x128xf32> -> vector<256x128xf32>
    %23 = arith.addf %16, %22 : vector<256x128xf32>
    %c0_26 = arith.constant 0 : index
    %c1_27 = arith.constant 1 : index
    %c0_28 = arith.constant 0 : index
    %c0_29 = arith.constant 0 : index
    %24 = vector.load %arg2[%c0_26, %c1_27, %c0_28, %c0_29] : memref<1x18x18x128xbf16, #tpu.memory_space<vmem>>, vector<1x16x16x128xbf16>
    %25 = vector.shape_cast %24 : vector<1x16x16x128xbf16> to vector<16x16x128xbf16>
    %26 = vector.shape_cast %25 : vector<16x16x128xbf16> to vector<256x128xbf16>
    %c0_30 = arith.constant 0 : index
    %c3 = arith.constant 3 : index
    %c0_31 = arith.constant 0 : index
    %c0_32 = arith.constant 0 : index
    %27 = vector.load %arg3[%c0_30, %c3, %c0_31, %c0_32] : memref<1x9x128x128xbf16, #tpu.memory_space<vmem>>, vector<1x1x128x128xbf16>
    %28 = vector.shape_cast %27 : vector<1x1x128x128xbf16> to vector<128x128xbf16>
    %cst_33 = arith.constant dense<0.000000e+00> : vector<256x128xf32>
    %29 = tpu.matmul %26, %28, %cst_33 {dimension_numbers = #tpu.dot_dimension_numbers<[1], [0], [0], [1], [0, 0, 1, 1], [], []>} : vector<256x128xbf16>, vector<128x128xbf16>, vector<256x128xf32> -> vector<256x128xf32>
    %30 = arith.addf %23, %29 : vector<256x128xf32>
    %c0_34 = arith.constant 0 : index
    %c1_35 = arith.constant 1 : index
    %c1_36 = arith.constant 1 : index
    %c0_37 = arith.constant 0 : index
    %31 = vector.load %arg2[%c0_34, %c1_35, %c1_36, %c0_37] : memref<1x18x18x128xbf16, #tpu.memory_space<vmem>>, vector<1x16x16x128xbf16>
    %32 = vector.shape_cast %31 : vector<1x16x16x128xbf16> to vector<16x16x128xbf16>
    %33 = vector.shape_cast %32 : vector<16x16x128xbf16> to vector<256x128xbf16>
    %c0_38 = arith.constant 0 : index
    %c4 = arith.constant 4 : index
    %c0_39 = arith.constant 0 : index
    %c0_40 = arith.constant 0 : index
    %34 = vector.load %arg3[%c0_38, %c4, %c0_39, %c0_40] : memref<1x9x128x128xbf16, #tpu.memory_space<vmem>>, vector<1x1x128x128xbf16>
    %35 = vector.shape_cast %34 : vector<1x1x128x128xbf16> to vector<128x128xbf16>
    %cst_41 = arith.constant dense<0.000000e+00> : vector<256x128xf32>
    %36 = tpu.matmul %33, %35, %cst_41 {dimension_numbers = #tpu.dot_dimension_numbers<[1], [0], [0], [1], [0, 0, 1, 1], [], []>} : vector<256x128xbf16>, vector<128x128xbf16>, vector<256x128xf32> -> vector<256x128xf32>
    %37 = arith.addf %30, %36 : vector<256x128xf32>
    %c0_42 = arith.constant 0 : index
    %c1_43 = arith.constant 1 : index
    %c2_44 = arith.constant 2 : index
    %c0_45 = arith.constant 0 : index
    %38 = vector.load %arg2[%c0_42, %c1_43, %c2_44, %c0_45] : memref<1x18x18x128xbf16, #tpu.memory_space<vmem>>, vector<1x16x16x128xbf16>
    %39 = vector.shape_cast %38 : vector<1x16x16x128xbf16> to vector<16x16x128xbf16>
    %40 = vector.shape_cast %39 : vector<16x16x128xbf16> to vector<256x128xbf16>
    %c0_46 = arith.constant 0 : index
    %c5 = arith.constant 5 : index
    %c0_47 = arith.constant 0 : index
    %c0_48 = arith.constant 0 : index
    %41 = vector.load %arg3[%c0_46, %c5, %c0_47, %c0_48] : memref<1x9x128x128xbf16, #tpu.memory_space<vmem>>, vector<1x1x128x128xbf16>
    %42 = vector.shape_cast %41 : vector<1x1x128x128xbf16> to vector<128x128xbf16>
    %cst_49 = arith.constant dense<0.000000e+00> : vector<256x128xf32>
    %43 = tpu.matmul %40, %42, %cst_49 {dimension_numbers = #tpu.dot_dimension_numbers<[1], [0], [0], [1], [0, 0, 1, 1], [], []>} : vector<256x128xbf16>, vector<128x128xbf16>, vector<256x128xf32> -> vector<256x128xf32>
    %44 = arith.addf %37, %43 : vector<256x128xf32>
    %c0_50 = arith.constant 0 : index
    %c2_51 = arith.constant 2 : index
    %c0_52 = arith.constant 0 : index
    %c0_53 = arith.constant 0 : index
    %45 = vector.load %arg2[%c0_50, %c2_51, %c0_52, %c0_53] : memref<1x18x18x128xbf16, #tpu.memory_space<vmem>>, vector<1x16x16x128xbf16>
    %46 = vector.shape_cast %45 : vector<1x16x16x128xbf16> to vector<16x16x128xbf16>
    %47 = vector.shape_cast %46 : vector<16x16x128xbf16> to vector<256x128xbf16>
    %c0_54 = arith.constant 0 : index
    %c6 = arith.constant 6 : index
    %c0_55 = arith.constant 0 : index
    %c0_56 = arith.constant 0 : index
    %48 = vector.load %arg3[%c0_54, %c6, %c0_55, %c0_56] : memref<1x9x128x128xbf16, #tpu.memory_space<vmem>>, vector<1x1x128x128xbf16>
    %49 = vector.shape_cast %48 : vector<1x1x128x128xbf16> to vector<128x128xbf16>
    %cst_57 = arith.constant dense<0.000000e+00> : vector<256x128xf32>
    %50 = tpu.matmul %47, %49, %cst_57 {dimension_numbers = #tpu.dot_dimension_numbers<[1], [0], [0], [1], [0, 0, 1, 1], [], []>} : vector<256x128xbf16>, vector<128x128xbf16>, vector<256x128xf32> -> vector<256x128xf32>
    %51 = arith.addf %44, %50 : vector<256x128xf32>
    %c0_58 = arith.constant 0 : index
    %c2_59 = arith.constant 2 : index
    %c1_60 = arith.constant 1 : index
    %c0_61 = arith.constant 0 : index
    %52 = vector.load %arg2[%c0_58, %c2_59, %c1_60, %c0_61] : memref<1x18x18x128xbf16, #tpu.memory_space<vmem>>, vector<1x16x16x128xbf16>
    %53 = vector.shape_cast %52 : vector<1x16x16x128xbf16> to vector<16x16x128xbf16>
    %54 = vector.shape_cast %53 : vector<16x16x128xbf16> to vector<256x128xbf16>
    %c0_62 = arith.constant 0 : index
    %c7 = arith.constant 7 : index
    %c0_63 = arith.constant 0 : index
    %c0_64 = arith.constant 0 : index
    %55 = vector.load %arg3[%c0_62, %c7, %c0_63, %c0_64] : memref<1x9x128x128xbf16, #tpu.memory_space<vmem>>, vector<1x1x128x128xbf16>
    %56 = vector.shape_cast %55 : vector<1x1x128x128xbf16> to vector<128x128xbf16>
    %cst_65 = arith.constant dense<0.000000e+00> : vector<256x128xf32>
    %57 = tpu.matmul %54, %56, %cst_65 {dimension_numbers = #tpu.dot_dimension_numbers<[1], [0], [0], [1], [0, 0, 1, 1], [], []>} : vector<256x128xbf16>, vector<128x128xbf16>, vector<256x128xf32> -> vector<256x128xf32>
    %58 = arith.addf %51, %57 : vector<256x128xf32>
    %c0_66 = arith.constant 0 : index
    %c2_67 = arith.constant 2 : index
    %c2_68 = arith.constant 2 : index
    %c0_69 = arith.constant 0 : index
    %59 = vector.load %arg2[%c0_66, %c2_67, %c2_68, %c0_69] : memref<1x18x18x128xbf16, #tpu.memory_space<vmem>>, vector<1x16x16x128xbf16>
    %60 = vector.shape_cast %59 : vector<1x16x16x128xbf16> to vector<16x16x128xbf16>
    %61 = vector.shape_cast %60 : vector<16x16x128xbf16> to vector<256x128xbf16>
    %c0_70 = arith.constant 0 : index
    %c8 = arith.constant 8 : index
    %c0_71 = arith.constant 0 : index
    %c0_72 = arith.constant 0 : index
    %62 = vector.load %arg3[%c0_70, %c8, %c0_71, %c0_72] : memref<1x9x128x128xbf16, #tpu.memory_space<vmem>>, vector<1x1x128x128xbf16>
    %63 = vector.shape_cast %62 : vector<1x1x128x128xbf16> to vector<128x128xbf16>
    %cst_73 = arith.constant dense<0.000000e+00> : vector<256x128xf32>
    %64 = tpu.matmul %61, %63, %cst_73 {dimension_numbers = #tpu.dot_dimension_numbers<[1], [0], [0], [1], [0, 0, 1, 1], [], []>} : vector<256x128xbf16>, vector<128x128xbf16>, vector<256x128xf32> -> vector<256x128xf32>
    %65 = arith.addf %58, %64 : vector<256x128xf32>
    %66 = vector.shape_cast %65 : vector<256x128xf32> to vector<16x16x128xf32>
    %67 = arith.truncf %66 : vector<16x16x128xf32> to vector<16x16x128xbf16>
    %c0_74 = arith.constant 0 : index
    %c0_75 = arith.constant 0 : index
    %c0_76 = arith.constant 0 : index
    %c0_77 = arith.constant 0 : index
    %68 = vector.load %arg4[%c0_74, %c0_75, %c0_76, %c0_77] : memref<1x16x16x128xbf16, #tpu.memory_space<vmem>>, vector<1x16x16x128xbf16>
    %69 = vector.shape_cast %68 : vector<1x16x16x128xbf16> to vector<16x16x128xbf16>
    %70 = vector.shape_cast %67 : vector<16x16x128xbf16> to vector<1x16x16x128xbf16>
    tpu.vector_store %arg4[%c0_74, %c0_75, %c0_76, %c0_77], %70 {strides = array<i32>} : memref<1x16x16x128xbf16, #tpu.memory_space<vmem>>, vector<1x16x16x128xbf16>,
    %cst_78 = arith.constant dense<0.000000e+00> : vector<128xf32>
    %71 = vector.multi_reduction <add>, %65, %cst_78 [0] : vector<256x128xf32> to vector<128xf32>
    %72 = vector.shape_cast %71 : vector<128xf32> to vector<1x128xf32>
    %73 = arith.addf %0, %72 : vector<1x128xf32>
    %74 = arith.mulf %65, %65 : vector<256x128xf32>
    %cst_79 = arith.constant dense<0.000000e+00> : vector<128xf32>
    %75 = vector.multi_reduction <add>, %74, %cst_79 [0] : vector<256x128xf32> to vector<128xf32>
    %76 = vector.shape_cast %75 : vector<128xf32> to vector<1x128xf32>
    %77 = arith.addf %1, %76 : vector<1x128xf32>
    %78 = vector.shape_cast %73 : vector<1x128xf32> to vector<1x1x128xf32>
    %c0_80 = arith.constant 0 : index
    %c0_81 = arith.constant 0 : index
    %c0_82 = arith.constant 0 : index
    %79 = vector.load %arg5[%c0_80, %c0_81, %c0_82] : memref<1x2x128xf32, #tpu.memory_space<vmem>>, vector<1x1x128xf32>
    tpu.vector_store %arg5[%c0_80, %c0_81, %c0_82], %78 {strides = array<i32>} : memref<1x2x128xf32, #tpu.memory_space<vmem>>, vector<1x1x128xf32>,
    %80 = vector.shape_cast %77 : vector<1x128xf32> to vector<1x1x128xf32>
    %c0_83 = arith.constant 0 : index
    %c1_84 = arith.constant 1 : index
    %c0_85 = arith.constant 0 : index
    %81 = vector.load %arg5[%c0_83, %c1_84, %c0_85] : memref<1x2x128xf32, #tpu.memory_space<vmem>>, vector<1x1x128xf32>
    tpu.vector_store %arg5[%c0_83, %c1_84, %c0_85], %80 {strides = array<i32>} : memref<1x2x128xf32, #tpu.memory_space<vmem>>, vector<1x1x128xf32>,
    return
  }
  func.func @transform_0(%arg0: i32, %arg1: i32) -> (i32, i32, i32, i32) {
    %c0_i32 = arith.constant 0 : i32
    %c0_i32_0 = arith.constant 0 : i32
    %c0_i32_1 = arith.constant 0 : i32
    %c0_i32_2 = arith.constant 0 : i32
    return %arg0, %c0_i32, %c0_i32_0, %c0_i32_1 : i32, i32, i32, i32
  }
  func.func @transform_1(%arg0: i32, %arg1: i32) -> (i32, i32, i32, i32) {
    %c0_i32 = arith.constant 0 : i32
    %c0_i32_0 = arith.constant 0 : i32
    %c0_i32_1 = arith.constant 0 : i32
    %c0_i32_2 = arith.constant 0 : i32
    %c0_i32_3 = arith.constant 0 : i32
    return %c0_i32, %c0_i32_0, %c0_i32_1, %c0_i32_2 : i32, i32, i32, i32
  }
  func.func @transform_2(%arg0: i32, %arg1: i32) -> (i32, i32, i32, i32) {
    %c0_i32 = arith.constant 0 : i32
    %c0_i32_0 = arith.constant 0 : i32
    %c0_i32_1 = arith.constant 0 : i32
    return %arg0, %c0_i32, %c0_i32_0, %arg1 : i32, i32, i32, i32
  }
  func.func @transform_3(%arg0: i32, %arg1: i32) -> (i32, i32, i32) {
    %c0_i32 = arith.constant 0 : i32
    %c0_i32_0 = arith.constant 0 : i32
    return %arg0, %c0_i32, %arg1 : i32, i32, i32
  }
}

</mosaic_0001>

<llo_original>
// kernel: tpu_custom_call.1
$region0: #{tpu_custom_call.1}
  #allocation0 [shape = 'u32[]', space=smem, size = 0x4, offset = 0x4, fixed_abs, tag = 'smem constant byte address 0x4 - core index']
  #allocation1 [shape = 'u32[144,128]{1,0:T(1,128)}', space=vmem, size = 0x12000, scoped, tag = 'internal scratch']
  %s0 = inlined_call_operand.vmem [shape: bf16[2,18,18,128], index: 0, kind: input, shape index: {}]
  %s1 = inlined_call_operand.vmem [shape: bf16[1,9,128,128], index: 1, kind: input, shape index: {}]
  %s2 = inlined_call_operand.hbm [shape: bf16[2,16,16,128], index: 2, kind: output, shape index: {0}]
  %s3 = inlined_call_operand.hbm [shape: f32[2,2,128], index: 3, kind: output, shape index: {1}]
  %4 = xla_tuple %s2, %s3
  %s5 = sld [smem:[#allocation0]]
  $region49: #{tpu_custom_call.1} parent=0
    _
  %s7 = ssub.s32 1, %s5
  %s8 = scalar_select 0, %s7, %s5
  $region1: #{tpu_custom_call.1} parent=0
    #allocation2 [shape = 'u8[131072]{0}', space=vmem, size = 0x20000, scoped, tag = 'output window, operand 0']
    #allocation3 [shape = 's32[2]{0}', space=sflag, size = 0x8, scoped, tag = 'scoped memory for tpu_custom_call.1']
    #allocation4 [shape = 'u8[2048]{0}', space=vmem, size = 0x800, scoped, tag = 'output window, operand 1']
    #allocation5 [shape = 's32[2]{0}', space=sflag, size = 0x8, scoped, tag = 'scoped memory for tpu_custom_call.1']
    %9 = vsyncpa [#allocation3], 0
    %s10 = scalar_lea.sflag [#allocation3], 1
    %11 = vsyncpa %s10, 0
    %12 = vsyncpa [#allocation5], 0
    %s13 = scalar_lea.sflag [#allocation5], 1
    %14 = vsyncpa %s13, 0
    loop: start=0, step=1, limit=4
    $region2: #{tpu_custom_call.1} parent=1 // loop_pre_header
      _
    $region3: #{tpu_custom_call.1} parent=1 // loop_header
      %s16 = sphi 0, %s20
      %p17 = scmp.ge.s32.totalorder %s16, 4
      %s23 = sphi 0, %s35
      %s24 = sphi 0, %s31
      %s25 = sphi 0, %s23
      %s26 = sphi 0, %s24
      %s27 = sphi 0, %s25
      %s28 = sphi 0, %s26
      %s38 = sphi 0, %s40
      %s41 = sphi 0, %s38
      %s42 = sphi 0, %s41
      %s58 = sphi 0, %s42
      %s62 = sphi 0, %s62
      %s64 = sphi 0, %s62
      %s65 = sphi 0, %s64
      %s79 = sphi 0, %s65
      %s87 = sphi 0, %s89
      %s90 = sphi 0, %s87
      %s91 = sphi 0, %s90
      %s107 = sphi 0, %s91
      %s115 = sphi 0, %s117
      %s118 = sphi 0, %s115
      %s119 = sphi 0, %s118
      %s135 = sphi 0, %s119
    $region4: #{tpu_custom_call.1} parent=1 // loop_header_branch
      %19 = sbr.rel (%p17) target = $region8
    $region5: #{tpu_custom_call.1} parent=1 // loop_body
      %s21 = ssub.s32 %s16, 1
      %s22 = ssub.s32 %s16, 2
      %s29 = sadd.s32 1, %s24
      %p30 = scmp.ge.s32.totalorder %s29, 1
      %s31 = scalar_select %p30, 0, %s29
      %s32 = sadd.s32 1, %s23
      %s33 = scalar_select %p30, %s32, %s23
      %p34 = scmp.ge.s32.totalorder %s33, 2
      %s35 = scalar_select %p34, 0, %s33
      %s36 = ssub.s32 %s23, %s35
      %p37 = scmp.eq.s32.totalorder %s36, 0
      %s39 = sadd.s32 %s38, 1
      %s40 = scalar_select %p37, %s38, %s39
      %p43 = pneg %p37
      %p44 = scmp.eq.s32.totalorder %s16, 1
      %p45 = por %p43, %p44
      %p46 = scmp.ne.s32.totalorder %s38, %s41
      %p47 = scmp.eq.s32.totalorder %s16, 0
      %p48 = por %p46, %p47
      %p49 = scmp.ne.s32.totalorder %s38, %s41
      %p50 = scmp.eq.s32.totalorder %s21, 1
      %p51 = por %p49, %p50
      %p52 = scmp.ne.s32.totalorder %s41, %s42
      %p53 = scmp.eq.s32.totalorder %s21, 0
      %p54 = por %p52, %p53
      %p55 = scmp.ne.s32.totalorder %s41, %s42
      %p56 = scmp.eq.s32.totalorder %s22, 1
      %p57 = por %p55, %p56
      %p59 = scmp.ne.s32.totalorder %s42, %s58
      %p60 = scmp.eq.s32.totalorder %s22, 0
      %p61 = por %p59, %p60
      %s63 = sadd.s32 %s62, 1
      %p66 = scmp.eq.s32.totalorder %s16, 1
      %p67 = scmp.ne.s32.totalorder %s62, %s64
      %p68 = scmp.eq.s32.totalorder %s16, 0
      %p69 = por %p67, %p68
      %p70 = scmp.ne.s32.totalorder %s62, %s64
      %p71 = scmp.eq.s32.totalorder %s21, 1
      %p72 = por %p70, %p71
      %p73 = scmp.ne.s32.totalorder %s64, %s65
      %p74 = scmp.eq.s32.totalorder %s21, 0
      %p75 = por %p73, %p74
      %p76 = scmp.ne.s32.totalorder %s64, %s65
      %p77 = scmp.eq.s32.totalorder %s22, 1
      %p78 = por %p76, %p77
      %p80 = scmp.ne.s32.totalorder %s65, %s79
      %p81 = scmp.eq.s32.totalorder %s22, 0
      %p82 = por %p80, %p81
      %s83 = ssub.s32 %s23, %s35
      %s84 = ssub.s32 %s24, %s31
      %s85 = sor.u32 %s83, %s84
      %p86 = scmp.eq.s32.totalorder %s85, 0
      %s88 = sadd.s32 %s87, 1
      %s89 = scalar_select %p86, %s87, %s88
      %p92 = pneg %p86
      %p93 = scmp.eq.s32.totalorder %s16, 1
      %p94 = por %p92, %p93
      %p95 = scmp.ne.s32.totalorder %s87, %s90
      %p96 = scmp.eq.s32.totalorder %s16, 0
      %p97 = por %p95, %p96
      %p98 = scmp.ne.s32.totalorder %s87, %s90
      %p99 = scmp.eq.s32.totalorder %s21, 1
      %p100 = por %p98, %p99
      %p101 = scmp.ne.s32.totalorder %s90, %s91
      %p102 = scmp.eq.s32.totalorder %s21, 0
      %p103 = por %p101, %p102
      %p104 = scmp.ne.s32.totalorder %s90, %s91
      %p105 = scmp.eq.s32.totalorder %s22, 1
      %p106 = por %p104, %p105
      %p108 = scmp.ne.s32.totalorder %s91, %s107
      %p109 = scmp.eq.s32.totalorder %s22, 0
      %p110 = por %p108, %p109
      %s111 = ssub.s32 %s23, %s35
      %s112 = ssub.s32 %s24, %s31
      %s113 = sor.u32 %s111, %s112
      %p114 = scmp.eq.s32.totalorder %s113, 0
      %s116 = sadd.s32 %s115, 1
      %s117 = scalar_select %p114, %s115, %s116
      %p120 = pneg %p114
      %p121 = scmp.eq.s32.totalorder %s16, 1
      %p122 = por %p120, %p121
      %p123 = scmp.ne.s32.totalorder %s115, %s118
      %p124 = scmp.eq.s32.totalorder %s16, 0
      %p125 = por %p123, %p124
      %p126 = scmp.ne.s32.totalorder %s115, %s118
      %p127 = scmp.eq.s32.totalorder %s21, 1
      %p128 = por %p126, %p127
      %p129 = scmp.ne.s32.totalorder %s118, %s119
      %p130 = scmp.eq.s32.totalorder %s21, 0
      %p131 = por %p129, %p130
      %p132 = scmp.ne.s32.totalorder %s118, %s119
      %p133 = scmp.eq.s32.totalorder %s22, 1
      %p134 = por %p132, %p133
      %p136 = scmp.ne.s32.totalorder %s119, %s135
      %p137 = scmp.eq.s32.totalorder %s22, 0
      %p138 = por %p136, %p137
      %p139 = scmp.le.s32.totalorder 1, %s16
      %p140 = scmp.lt.s32.totalorder %s16, 3
      %p141 = pnand %p139, %p140
      %p142 = pneg %p141
      // Predicated region
      $region9: #{tpu_custom_call.1} parent=5 // pred_check
        _
      $region10: #{tpu_custom_call.1} parent=5 // pred_check_branch
        %144 = sbr.rel (%p141) target = $region12
      $region11: #{tpu_custom_call.1} parent=5 // pred_region
        %s145 = ssub.s32 %s16, 1
        // Predicated region
        $region13: #{tpu_custom_call.1} parent=11 // pred_check
          %p146 = pneg %p75
        $region14: #{tpu_custom_call.1} parent=11 // pred_check_branch
          %148 = sbr.rel (%p146) target = $region16
        $region15: #{tpu_custom_call.1} parent=11 // pred_region
          _
        $region16: #{tpu_custom_call.1} parent=11 // pred_fallthru
          _
      $region12: #{tpu_custom_call.1} parent=5 // pred_fallthru
        _
      %p149 = scmp.lt.s32.totalorder %s16, 2
      // Predicated region
      $region17: #{tpu_custom_call.1} parent=5 // pred_check
        %p150 = pneg %p149
      $region18: #{tpu_custom_call.1} parent=5 // pred_check_branch
        %152 = sbr.rel (%p150) target = $region20
      $region19: #{tpu_custom_call.1} parent=5 // pred_region
        // Predicated region
        $region21: #{tpu_custom_call.1} parent=19 // pred_check
          %p153 = pneg %p48
        $region22: #{tpu_custom_call.1} parent=19 // pred_check_branch
          %155 = sbr.rel (%p153) target = $region24
        $region23: #{tpu_custom_call.1} parent=19 // pred_region
          %p156 = scmp.lt.s32.totalorder %s23, 1
          %s157 = scalar_select %p156, %s23, 1
          %s158 = smul.addr %s157, 54
          %s159 = smul.addr %s158, 4
          %s160 = scalar_lea.vmem %s0, %s159
        $region24: #{tpu_custom_call.1} parent=19 // pred_fallthru
          _
      $region20: #{tpu_custom_call.1} parent=5 // pred_fallthru
        _
      %p161 = scmp.le.s32.totalorder 1, %s16
      %p162 = scmp.lt.s32.totalorder %s16, 3
      %p163 = pnand %p161, %p162
      %p164 = pneg %p163
      // Predicated region
      $region25: #{tpu_custom_call.1} parent=5 // pred_check
        _
      $region26: #{tpu_custom_call.1} parent=5 // pred_check_branch
        %166 = sbr.rel (%p163) target = $region28
      $region27: #{tpu_custom_call.1} parent=5 // pred_region
        %s167 = ssub.s32 %s16, 1
        %p168 = scmp.lt.s32.totalorder %s25, 1
        %s169 = scalar_select %p168, %s25, 1
        %s170 = smul.addr %s169, 54
        %s171 = smul.addr %s170, 4
        %s172 = scalar_lea.vmem %s0, %s171
        %p173 = pneg %p54
        %p174 = pneg %p51
        %p175 = pneg %p75
        %p176 = pneg %p72
        %p177 = pneg %p103
        %p178 = pneg %p100
        %s179 = sand.u32 %s90, 1
        %s180 = scalar_lea.sflag [#allocation3], %s179
        %s181 = sand.u32 %s90, 1
        %s182 = smul.addr %s181, 128
        %s183 = scalar_lea.vmem [#allocation2], %s182
        %p184 = pneg %p131
        %p185 = pneg %p128
        %s186 = sand.u32 %s118, 1
        %s187 = scalar_lea.sflag [#allocation5], %s186
        %s188 = sand.u32 %s118, 1
        %s189 = smul.addr %s188, 2
        %s190 = scalar_lea.vmem [#allocation4], %s189
        %p191 = scmp.lt.s32.totalorder %s25, 1
        %s192 = scalar_select %p191, %s25, 1
        %s193 = smul.addr %s192, 54
        %s194 = smul.addr %s193, 4
        %s195 = scalar_lea.vmem %s0, %s194
        %v197 = vld [vmem:[%s195] sm:$0xf]
        %v198 = vld [vmem:[%s195 + $0x4] sm:$0xf]
        %v199 = vld [vmem:[%s195 + $0xc] sm:$0xf]
        %v200 = vld [vmem:[%s195 + $0x10] sm:$0xf]
        %v201 = vld [vmem:[%s195 + $0x18] sm:$0xf]
        %v202 = vld [vmem:[%s195 + $0x1c] sm:$0xf]
        %v203 = vld [vmem:[%s195 + $0x24] sm:$0xf]
        %v204 = vld [vmem:[%s195 + $0x28] sm:$0xf]
        %v205 = vld [vmem:[%s195 + $0x30] sm:$0xf]
        %v206 = vld [vmem:[%s195 + $0x34] sm:$0xf]
        %v207 = vld [vmem:[%s195 + $0x3c] sm:$0xf]
        %v208 = vld [vmem:[%s195 + $0x40] sm:$0xf]
        %v209 = vld [vmem:[%s195 + $0x48] sm:$0xf]
        %v210 = vld [vmem:[%s195 + $0x4c] sm:$0xf]
        %v211 = vld [vmem:[%s195 + $0x54] sm:$0xf]
        %v212 = vld [vmem:[%s195 + $0x58] sm:$0xf]
        %v213 = vld [vmem:[%s195 + $0x60] sm:$0xf]
        %v214 = vld [vmem:[%s195 + $0x64] sm:$0xf]
        %v215 = vld [vmem:[%s195 + $0x6c] sm:$0xf]
        %v216 = vld [vmem:[%s195 + $0x70] sm:$0xf]
        %v217 = vld [vmem:[%s195 + $0x78] sm:$0xf]
        %v218 = vld [vmem:[%s195 + $0x7c] sm:$0xf]
        %v219 = vld [vmem:[%s195 + $0x84] sm:$0xf]
        %v220 = vld [vmem:[%s195 + $0x88] sm:$0xf]
        %v221 = vld [vmem:[%s195 + $0x90] sm:$0xf]
        %v222 = vld [vmem:[%s195 + $0x94] sm:$0xf]
        %v223 = vld [vmem:[%s195 + $0x9c] sm:$0xf]
        %v224 = vld [vmem:[%s195 + $0xa0] sm:$0xf]
        %v225 = vld [vmem:[%s195 + $0xa8] sm:$0xf]
        %v226 = vld [vmem:[%s195 + $0xac] sm:$0xf]
        %v227 = vld [vmem:[%s195 + $0xb4] sm:$0xf]
        %v228 = vld [vmem:[%s195 + $0xb8] sm:$0xf]
        %v229 = vld [vmem:[%s1] sm:$0xf]
        %v230 = vld [vmem:[%s1 + $0x4] sm:$0xf]
        %v231 = vld [vmem:[%s1 + $0x8] sm:$0xf]
        %v232 = vld [vmem:[%s1 + $0xc] sm:$0xf]
        %v233 = vld [vmem:[%s1 + $0x10] sm:$0xf]
        %v234 = vld [vmem:[%s1 + $0x14] sm:$0xf]
        %v235 = vld [vmem:[%s1 + $0x18] sm:$0xf]
        %v236 = vld [vmem:[%s1 + $0x1c] sm:$0xf]
        %v237 = vld [vmem:[%s1 + $0x20] sm:$0xf]
        %v238 = vld [vmem:[%s1 + $0x24] sm:$0xf]
        %v239 = vld [vmem:[%s1 + $0x28] sm:$0xf]
        %v240 = vld [vmem:[%s1 + $0x2c] sm:$0xf]
        %v241 = vld [vmem:[%s1 + $0x30] sm:$0xf]
        %v242 = vld [vmem:[%s1 + $0x34] sm:$0xf]
        %v243 = vld [vmem:[%s1 + $0x38] sm:$0xf]
        %v244 = vld [vmem:[%s1 + $0x3c] sm:$0xf]
        %v245 = vld [vmem:[%s195 + $0x8] sm:$0x1]
        %v246 = vld [vmem:[%s195 + $0x14] sm:$0x1]
        %v247 = vld [vmem:[%s195 + $0x20] sm:$0x1]
        %v248 = vld [vmem:[%s195 + $0x2c] sm:$0x1]
        %v249 = vld [vmem:[%s195 + $0x38] sm:$0x1]
        %v250 = vld [vmem:[%s195 + $0x44] sm:$0x1]
        %v251 = vld [vmem:[%s195 + $0x50] sm:$0x1]
        %v252 = vld [vmem:[%s195 + $0x5c] sm:$0x1]
        %v253 = vld [vmem:[%s195 + $0x68] sm:$0x1]
        %v254 = vld [vmem:[%s195 + $0x74] sm:$0x1]
        %v255 = vld [vmem:[%s195 + $0x80] sm:$0x1]
        %v256 = vld [vmem:[%s195 + $0x8c] sm:$0x1]
        %v257 = vld [vmem:[%s195 + $0x98] sm:$0x1]
        %v258 = vld [vmem:[%s195 + $0xa4] sm:$0x1]
        %v259 = vld [vmem:[%s195 + $0xb0] sm:$0x1]
        %v260 = vld [vmem:[%s195 + $0xbc] sm:$0x1]
        %vm261 = vsmask.f32 3328
        %vm262 = vsmask.f32 7440
        %vm263 = vmor %vm261, %vm262
        %v265 = vshrl.u32 %v197, 16
        %v267 = vrot.slane %v265, 4
        %v268 = vshll.u32 %v197, 16
        %v270 = vrot.slane %v268, 5
        %v271 = vor.u32 %v267, %v270
        %v272 = vrot.slane %v271, 4
        %v274 = vshll.u32 %v198, 16
        %v276 = vrot.slane %v274, 5
        %v277 = vsel %vm263, %v272, %v276
        %v278 = vshrl.u32 %v198, 16
        %v280 = vrot.slane %v278, 4
        %v281 = vor.u32 %v280, %v276
        %v282 = vrot.slane %v281, 4
        %v284 = vshll.u32 %v245, 16
        %v286 = vrot.slane %v284, 5
        %v287 = vsel %vm263, %v282, %v286
        %v289 = vshrl.u32 %v199, 16
        %v291 = vrot.slane %v289, 4
        %v292 = vshll.u32 %v199, 16
        %v294 = vrot.slane %v292, 5
        %v295 = vor.u32 %v291, %v294
        %v296 = vrot.slane %v295, 4
        %v298 = vshll.u32 %v200, 16
        %v300 = vrot.slane %v298, 5
        %v301 = vsel %vm263, %v296, %v300
        %v302 = vshrl.u32 %v200, 16
        %v304 = vrot.slane %v302, 4
        %v305 = vor.u32 %v304, %v300
        %v306 = vrot.slane %v305, 4
        %v308 = vshll.u32 %v246, 16
        %v310 = vrot.slane %v308, 5
        %v311 = vsel %vm263, %v306, %v310
        %v313 = vshrl.u32 %v201, 16
        %v315 = vrot.slane %v313, 4
        %v316 = vshll.u32 %v201, 16
        %v318 = vrot.slane %v316, 5
        %v319 = vor.u32 %v315, %v318
        %v320 = vrot.slane %v319, 4
        %v322 = vshll.u32 %v202, 16
        %v324 = vrot.slane %v322, 5
        %v325 = vsel %vm263, %v320, %v324
        %v326 = vshrl.u32 %v202, 16
        %v328 = vrot.slane %v326, 4
        %v329 = vor.u32 %v328, %v324
        %v330 = vrot.slane %v329, 4
        %v332 = vshll.u32 %v247, 16
        %v334 = vrot.slane %v332, 5
        %v335 = vsel %vm263, %v330, %v334
        %v337 = vshrl.u32 %v203, 16
        %v339 = vrot.slane %v337, 4
        %v340 = vshll.u32 %v203, 16
        %v342 = vrot.slane %v340, 5
        %v343 = vor.u32 %v339, %v342
        %v344 = vrot.slane %v343, 4
        %v346 = vshll.u32 %v204, 16
        %v348 = vrot.slane %v346, 5
        %v349 = vsel %vm263, %v344, %v348
        %v350 = vshrl.u32 %v204, 16
        %v352 = vrot.slane %v350, 4
        %v353 = vor.u32 %v352, %v348
        %v354 = vrot.slane %v353, 4
        %v356 = vshll.u32 %v248, 16
        %v358 = vrot.slane %v356, 5
        %v359 = vsel %vm263, %v354, %v358
        %v361 = vshrl.u32 %v205, 16
        %v363 = vrot.slane %v361, 4
        %v364 = vshll.u32 %v205, 16
        %v366 = vrot.slane %v364, 5
        %v367 = vor.u32 %v363, %v366
        %v368 = vrot.slane %v367, 4
        %v370 = vshll.u32 %v206, 16
        %v372 = vrot.slane %v370, 5
        %v373 = vsel %vm263, %v368, %v372
        %v374 = vshrl.u32 %v206, 16
        %v376 = vrot.slane %v374, 4
        %v377 = vor.u32 %v376, %v372
        %v378 = vrot.slane %v377, 4
        %v380 = vshll.u32 %v249, 16
        %v382 = vrot.slane %v380, 5
        %v383 = vsel %vm263, %v378, %v382
        %v385 = vshrl.u32 %v207, 16
        %v387 = vrot.slane %v385, 4
        %v388 = vshll.u32 %v207, 16
        %v390 = vrot.slane %v388, 5
        %v391 = vor.u32 %v387, %v390
        %v392 = vrot.slane %v391, 4
        %v394 = vshll.u32 %v208, 16
        %v396 = vrot.slane %v394, 5
        %v397 = vsel %vm263, %v392, %v396
        %v398 = vshrl.u32 %v208, 16
        %v400 = vrot.slane %v398, 4
        %v401 = vor.u32 %v400, %v396
        %v402 = vrot.slane %v401, 4
        %v404 = vshll.u32 %v250, 16
        %v406 = vrot.slane %v404, 5
        %v407 = vsel %vm263, %v402, %v406
        %v409 = vshrl.u32 %v209, 16
        %v411 = vrot.slane %v409, 4
        %v412 = vshll.u32 %v209, 16
        %v414 = vrot.slane %v412, 5
        %v415 = vor.u32 %v411, %v414
        %v416 = vrot.slane %v415, 4
        %v418 = vshll.u32 %v210, 16
        %v420 = vrot.slane %v418, 5
        %v421 = vsel %vm263, %v416, %v420
        %v422 = vshrl.u32 %v210, 16
        %v424 = vrot.slane %v422, 4
        %v425 = vor.u32 %v424, %v420
        %v426 = vrot.slane %v425, 4
        %v428 = vshll.u32 %v251, 16
        %v430 = vrot.slane %v428, 5
        %v431 = vsel %vm263, %v426, %v430
        %v433 = vshrl.u32 %v211, 16
        %v435 = vrot.slane %v433, 4
        %v436 = vshll.u32 %v211, 16
        %v438 = vrot.slane %v436, 5
        %v439 = vor.u32 %v435, %v438
        %v440 = vrot.slane %v439, 4
        %v442 = vshll.u32 %v212, 16
        %v444 = vrot.slane %v442, 5
        %v445 = vsel %vm263, %v440, %v444
        %v446 = vshrl.u32 %v212, 16
        %v448 = vrot.slane %v446, 4
        %v449 = vor.u32 %v448, %v444
        %v450 = vrot.slane %v449, 4
        %v452 = vshll.u32 %v252, 16
        %v454 = vrot.slane %v452, 5
        %v455 = vsel %vm263, %v450, %v454
        %v457 = vshrl.u32 %v213, 16
        %v459 = vrot.slane %v457, 4
        %v460 = vshll.u32 %v213, 16
        %v462 = vrot.slane %v460, 5
        %v463 = vor.u32 %v459, %v462
        %v464 = vrot.slane %v463, 4
        %v466 = vshll.u32 %v214, 16
        %v468 = vrot.slane %v466, 5
        %v469 = vsel %vm263, %v464, %v468
        %v470 = vshrl.u32 %v214, 16
        %v472 = vrot.slane %v470, 4
        %v473 = vor.u32 %v472, %v468
        %v474 = vrot.slane %v473, 4
        %v476 = vshll.u32 %v253, 16
        %v478 = vrot.slane %v476, 5
        %v479 = vsel %vm263, %v474, %v478
        %v481 = vshrl.u32 %v215, 16
        %v483 = vrot.slane %v481, 4
        %v484 = vshll.u32 %v215, 16
        %v486 = vrot.slane %v484, 5
        %v487 = vor.u32 %v483, %v486
        %v488 = vrot.slane %v487, 4
        %v490 = vshll.u32 %v216, 16
        %v492 = vrot.slane %v490, 5
        %v493 = vsel %vm263, %v488, %v492
        %v494 = vshrl.u32 %v216, 16
        %v496 = vrot.slane %v494, 4
        %v497 = vor.u32 %v496, %v492
        %v498 = vrot.slane %v497, 4
        %v500 = vshll.u32 %v254, 16
        %v502 = vrot.slane %v500, 5
        %v503 = vsel %vm263, %v498, %v502
        %v505 = vshrl.u32 %v217, 16
        %v507 = vrot.slane %v505, 4
        %v508 = vshll.u32 %v217, 16
        %v510 = vrot.slane %v508, 5
        %v511 = vor.u32 %v507, %v510
        %v512 = vrot.slane %v511, 4
        %v514 = vshll.u32 %v218, 16
        %v516 = vrot.slane %v514, 5
        %v517 = vsel %vm263, %v512, %v516
        %v518 = vshrl.u32 %v218, 16
        %v520 = vrot.slane %v518, 4
        %v521 = vor.u32 %v520, %v516
        %v522 = vrot.slane %v521, 4
        %v524 = vshll.u32 %v255, 16
        %v526 = vrot.slane %v524, 5
        %v527 = vsel %vm263, %v522, %v526
        %v529 = vshrl.u32 %v219, 16
        %v531 = vrot.slane %v529, 4
        %v532 = vshll.u32 %v219, 16
        %v534 = vrot.slane %v532, 5
        %v535 = vor.u32 %v531, %v534
        %v536 = vrot.slane %v535, 4
        %v538 = vshll.u32 %v220, 16
        %v540 = vrot.slane %v538, 5
        %v541 = vsel %vm263, %v536, %v540
        %v542 = vshrl.u32 %v220, 16
        %v544 = vrot.slane %v542, 4
        %v545 = vor.u32 %v544, %v540
        %v546 = vrot.slane %v545, 4
        %v548 = vshll.u32 %v256, 16
        %v550 = vrot.slane %v548, 5
        %v551 = vsel %vm263, %v546, %v550
        %v553 = vshrl.u32 %v221, 16
        %v555 = vrot.slane %v553, 4
        %v556 = vshll.u32 %v221, 16
        %v558 = vrot.slane %v556, 5
        %v559 = vor.u32 %v555, %v558
        %v560 = vrot.slane %v559, 4
        %v562 = vshll.u32 %v222, 16
        %v564 = vrot.slane %v562, 5
        %v565 = vsel %vm263, %v560, %v564
        %v566 = vshrl.u32 %v222, 16
        %v568 = vrot.slane %v566, 4
        %v569 = vor.u32 %v568, %v564
        %v570 = vrot.slane %v569, 4
        %v572 = vshll.u32 %v257, 16
        %v574 = vrot.slane %v572, 5
        %v575 = vsel %vm263, %v570, %v574
        %v577 = vshrl.u32 %v223, 16
        %v579 = vrot.slane %v577, 4
        %v580 = vshll.u32 %v223, 16
        %v582 = vrot.slane %v580, 5
        %v583 = vor.u32 %v579, %v582
        %v584 = vrot.slane %v583, 4
        %v586 = vshll.u32 %v224, 16
        %v588 = vrot.slane %v586, 5
        %v589 = vsel %vm263, %v584, %v588
        %v590 = vshrl.u32 %v224, 16
        %v592 = vrot.slane %v590, 4
        %v593 = vor.u32 %v592, %v588
        %v594 = vrot.slane %v593, 4
        %v596 = vshll.u32 %v258, 16
        %v598 = vrot.slane %v596, 5
        %v599 = vsel %vm263, %v594, %v598
        %v601 = vshrl.u32 %v225, 16
        %v603 = vrot.slane %v601, 4
        %v604 = vshll.u32 %v225, 16
        %v606 = vrot.slane %v604, 5
        %v607 = vor.u32 %v603, %v606
        %v608 = vrot.slane %v607, 4
        %v610 = vshll.u32 %v226, 16
        %v612 = vrot.slane %v610, 5
        %v613 = vsel %vm263, %v608, %v612
        %v614 = vshrl.u32 %v226, 16
        %v616 = vrot.slane %v614, 4
        %v617 = vor.u32 %v616, %v612
        %v618 = vrot.slane %v617, 4
        %v620 = vshll.u32 %v259, 16
        %v622 = vrot.slane %v620, 5
        %v623 = vsel %vm263, %v618, %v622
        %v625 = vshrl.u32 %v227, 16
        %v627 = vrot.slane %v625, 4
        %v628 = vshll.u32 %v227, 16
        %v630 = vrot.slane %v628, 5
        %v631 = vor.u32 %v627, %v630
        %v632 = vrot.slane %v631, 4
        %v634 = vshll.u32 %v228, 16
        %v636 = vrot.slane %v634, 5
        %v637 = vsel %vm263, %v632, %v636
        %v638 = vshrl.u32 %v228, 16
        %v640 = vrot.slane %v638, 4
        %v641 = vor.u32 %v640, %v636
        %v642 = vrot.slane %v641, 4
        %v644 = vshll.u32 %v260, 16
        %v646 = vrot.slane %v644, 5
        %v647 = vsel %vm263, %v642, %v646
        %s648 = scalar_lea.vmem %s1, 64
        %v649 = vld [vmem:[%s648] sm:$0xf]
        %v650 = vld [vmem:[%s648 + $0x4] sm:$0xf]
        %v651 = vld [vmem:[%s648 + $0x8] sm:$0xf]
        %v652 = vld [vmem:[%s648 + $0xc] sm:$0xf]
        %v653 = vld [vmem:[%s648 + $0x10] sm:$0xf]
        %v654 = vld [vmem:[%s648 + $0x14] sm:$0xf]
        %v655 = vld [vmem:[%s648 + $0x18] sm:$0xf]
        %v656 = vld [vmem:[%s648 + $0x1c] sm:$0xf]
        %v657 = vld [vmem:[%s648 + $0x20] sm:$0xf]
        %v658 = vld [vmem:[%s648 + $0x24] sm:$0xf]
        %v659 = vld [vmem:[%s648 + $0x28] sm:$0xf]
        %v660 = vld [vmem:[%s648 + $0x2c] sm:$0xf]
        %v661 = vld [vmem:[%s648 + $0x30] sm:$0xf]
        %v662 = vld [vmem:[%s648 + $0x34] sm:$0xf]
        %v663 = vld [vmem:[%s648 + $0x38] sm:$0xf]
        %v664 = vld [vmem:[%s648 + $0x3c] sm:$0xf]
        %v665 = vunpack.c.l.b16 %v277
        %v666 = vunpack.c.l.b16 %v287
        %v667 = vunpack.c.l.b16 %v301
        %v668 = vunpack.c.l.b16 %v311
        %v669 = vunpack.c.l.b16 %v325
        %v670 = vunpack.c.l.b16 %v335
        %v671 = vunpack.c.l.b16 %v349
        %v672 = vunpack.c.l.b16 %v359
        %v673 = vunpack.c.l.b16 %v373
        %v674 = vunpack.c.l.b16 %v383
        %v675 = vunpack.c.l.b16 %v397
        %v676 = vunpack.c.l.b16 %v407
        %v677 = vunpack.c.l.b16 %v421
        %v678 = vunpack.c.l.b16 %v431
        %v679 = vunpack.c.l.b16 %v445
        %v680 = vunpack.c.l.b16 %v455
        %v681 = vunpack.c.l.b16 %v469
        %v682 = vunpack.c.l.b16 %v479
        %v683 = vunpack.c.l.b16 %v493
        %v684 = vunpack.c.l.b16 %v503
        %v685 = vunpack.c.l.b16 %v517
        %v686 = vunpack.c.l.b16 %v527
        %v687 = vunpack.c.l.b16 %v541
        %v688 = vunpack.c.l.b16 %v551
        %v689 = vunpack.c.l.b16 %v565
        %v690 = vunpack.c.l.b16 %v575
        %v691 = vunpack.c.l.b16 %v589
        %v692 = vunpack.c.l.b16 %v599
        %v693 = vunpack.c.l.b16 %v613
        %v694 = vunpack.c.l.b16 %v623
        %v695 = vunpack.c.l.b16 %v637
        %v696 = vunpack.c.l.b16 %v647
        %v697 = vpack.c.b16 %v666, %v665
        %v698 = vpack.c.b16 %v668, %v667
        %v699 = vpack.c.b16 %v670, %v669
        %v700 = vpack.c.b16 %v672, %v671
        %v701 = vpack.c.b16 %v674, %v673
        %v702 = vpack.c.b16 %v676, %v675
        %v703 = vpack.c.b16 %v678, %v677
        %v704 = vpack.c.b16 %v680, %v679
        %v705 = vpack.c.b16 %v682, %v681
        %v706 = vpack.c.b16 %v684, %v683
        %v707 = vpack.c.b16 %v686, %v685
        %v708 = vpack.c.b16 %v688, %v687
        %v709 = vpack.c.b16 %v690, %v689
        %v710 = vpack.c.b16 %v692, %v691
        %v711 = vpack.c.b16 %v694, %v693
        %v712 = vpack.c.b16 %v696, %v695
        %v745 = vunpack.c.l.b16 %v649
        %v746 = vunpack.c.l.b16 %v650
        %v747 = vunpack.c.l.b16 %v651
        %v748 = vunpack.c.l.b16 %v652
        %v749 = vunpack.c.l.b16 %v653
        %v750 = vunpack.c.l.b16 %v654
        %v751 = vunpack.c.l.b16 %v655
        %v752 = vunpack.c.l.b16 %v656
        %v753 = vunpack.c.l.b16 %v657
        %v754 = vunpack.c.l.b16 %v658
        %v755 = vunpack.c.l.b16 %v659
        %v756 = vunpack.c.l.b16 %v660
        %v757 = vunpack.c.l.b16 %v661
        %v758 = vunpack.c.l.b16 %v662
        %v759 = vunpack.c.l.b16 %v663
        %v760 = vunpack.c.l.b16 %v664
        %v761 = vpack.c.b16 %v746, %v745
        %v762 = vpack.c.b16 %v748, %v747
        %v763 = vpack.c.b16 %v750, %v749
        %v764 = vpack.c.b16 %v752, %v751
        %v765 = vpack.c.b16 %v754, %v753
        %v766 = vpack.c.b16 %v756, %v755
        %v767 = vpack.c.b16 %v758, %v757
        %v768 = vpack.c.b16 %v760, %v759
        %777 = vmatprep.subr.bf16.mxu0 0
        %778 = vmatpush1.bf16.msra.mxu0 %v761
        %779 = vmatprep.subr.bf16.mxu0 0
        %780 = vmatpush1.bf16.msra.mxu0 %v762
        %781 = vmatprep.subr.bf16.mxu0 0
        %782 = vmatpush1.bf16.msra.mxu0 %v763
        %783 = vmatprep.subr.bf16.mxu0 0
        %784 = vmatpush1.bf16.msra.mxu0 %v764
        %785 = vmatprep.subr.bf16.mxu0 0
        %786 = vmatpush1.bf16.msra.mxu0 %v765
        %787 = vmatprep.subr.bf16.mxu0 0
        %788 = vmatpush1.bf16.msra.mxu0 %v766
        %789 = vmatprep.subr.bf16.mxu0 0
        %790 = vmatpush1.bf16.msra.mxu0 %v767
        %791 = vmatprep.subr.bf16.mxu0 0
        %792 = vmatpush1.bf16.msra.mxu0 %v768
        %793 = vmatprep.subr.bf16.mxu0 0
        %794 = vmatpush1.bf16.msra.mxu0 0
        %795 = vmatprep.subr.bf16.mxu0 0
        %796 = vmatpush1.bf16.msra.mxu0 0
        %797 = vmatprep.subr.bf16.mxu0 0
        %798 = vmatpush1.bf16.msra.mxu0 0
        %799 = vmatprep.subr.bf16.mxu0 0
        %800 = vmatpush1.bf16.msra.mxu0 0
        %801 = vmatprep.subr.bf16.mxu0 0
        %802 = vmatpush1.bf16.msra.mxu0 0
        %803 = vmatprep.subr.bf16.mxu0 0
        %804 = vmatpush1.bf16.msra.mxu0 0
        %805 = vmatprep.subr.bf16.mxu0 0
        %806 = vmatpush1.bf16.msra.mxu0 0
        %807 = vmatprep.subr.bf16.mxu0 0
        %808 = vmatpush1.bf16.msra.mxu0 0
        %809 = vmatprep.mubr.bf16.mxu0 0
        %810 = vmatmul.mubr.bf16.gmra.mrb[0].mxu0 %v697
        %v811 = vpop.f32.mrb[0].mxu0
        %v812 = vadd.f32 0.0, %v811
        %v813 = vpop.f32.mrb[0].mxu0
        %v814 = vpop.f32.mrb[0].mxu0
        %v815 = vadd.f32 0.0, %v814
        %v816 = vpop.f32.mrb[0].mxu0
        %817 = vmatprep.mubr.bf16.mxu0 0
        %818 = vmatmul.mubr.bf16.gmra.mrb[0].mxu0 %v698
        %v819 = vpop.f32.mrb[0].mxu0
        %v820 = vadd.f32 0.0, %v819
        %v821 = vpop.f32.mrb[0].mxu0
        %v822 = vpop.f32.mrb[0].mxu0
        %v823 = vadd.f32 0.0, %v822
        %v824 = vpop.f32.mrb[0].mxu0
        %825 = vmatprep.mubr.bf16.mxu0 0
        %826 = vmatmul.mubr.bf16.gmra.mrb[0].mxu0 %v699
        %v827 = vpop.f32.mrb[0].mxu0
        %v828 = vadd.f32 0.0, %v827
        %v829 = vpop.f32.mrb[0].mxu0
        %v830 = vpop.f32.mrb[0].mxu0
        %v831 = vadd.f32 0.0, %v830
        %v832 = vpop.f32.mrb[0].mxu0
        %833 = vmatprep.mubr.bf16.mxu0 0
        %834 = vmatmul.mubr.bf16.gmra.mrb[0].mxu0 %v700
        %v835 = vpop.f32.mrb[0].mxu0
        %v836 = vadd.f32 0.0, %v835
        %v837 = vpop.f32.mrb[0].mxu0
        %v838 = vpop.f32.mrb[0].mxu0
        %v839 = vadd.f32 0.0, %v838
        %v840 = vpop.f32.mrb[0].mxu0
        %841 = vmatprep.mubr.bf16.mxu0 0
        %842 = vmatmul.mubr.bf16.gmra.mrb[0].mxu0 %v701
        %v843 = vpop.f32.mrb[0].mxu0
        %v844 = vadd.f32 0.0, %v843
        %v845 = vpop.f32.mrb[0].mxu0
        %v846 = vpop.f32.mrb[0].mxu0
        %v847 = vadd.f32 0.0, %v846
        %v848 = vpop.f32.mrb[0].mxu0
        %849 = vmatprep.mubr.bf16.mxu0 0
        %850 = vmatmul.mubr.bf16.gmra.mrb[0].mxu0 %v702
        %v851 = vpop.f32.mrb[0].mxu0
        %v852 = vadd.f32 0.0, %v851
        %v853 = vpop.f32.mrb[0].mxu0
        %v854 = vpop.f32.mrb[0].mxu0
        %v855 = vadd.f32 0.0, %v854
        %v856 = vpop.f32.mrb[0].mxu0
        %857 = vmatprep.mubr.bf16.mxu0 0
        %858 = vmatmul.mubr.bf16.gmra.mrb[0].mxu0 %v703
        %v859 = vpop.f32.mrb[0].mxu0
        %v860 = vadd.f32 0.0, %v859
        %v861 = vpop.f32.mrb[0].mxu0
        %v862 = vpop.f32.mrb[0].mxu0
        %v863 = vadd.f32 0.0, %v862
        %v864 = vpop.f32.mrb[0].mxu0
        %865 = vmatprep.mubr.bf16.mxu0 0
        %866 = vmatmul.mubr.bf16.gmra.mrb[0].mxu0 %v704
        %v867 = vpop.f32.mrb[0].mxu0
        %v868 = vadd.f32 0.0, %v867
        %v869 = vpop.f32.mrb[0].mxu0
        %v870 = vpop.f32.mrb[0].mxu0
        %v871 = vadd.f32 0.0, %v870
        %v872 = vpop.f32.mrb[0].mxu0
        %873 = vmatprep.mubr.bf16.mxu0 0
        %874 = vmatmul.mubr.bf16.gmra.mrb[0].mxu0 %v705
        %v875 = vpop.f32.mrb[0].mxu0
        %v876 = vadd.f32 0.0, %v875
        %v877 = vpop.f32.mrb[0].mxu0
        %v878 = vpop.f32.mrb[0].mxu0
        %v879 = vadd.f32 0.0, %v878
        %v880 = vpop.f32.mrb[0].mxu0
        %881 = vmatprep.mubr.bf16.mxu0 0
        %882 = vmatmul.mubr.bf16.gmra.mrb[0].mxu0 %v706
        %v883 = vpop.f32.mrb[0].mxu0
        %v884 = vadd.f32 0.0, %v883
        %v885 = vpop.f32.mrb[0].mxu0
        %v886 = vpop.f32.mrb[0].mxu0
        %v887 = vadd.f32 0.0, %v886
        %v888 = vpop.f32.mrb[0].mxu0
        %889 = vmatprep.mubr.bf16.mxu0 0
        %890 = vmatmul.mubr.bf16.gmra.mrb[0].mxu0 %v707
        %v891 = vpop.f32.mrb[0].mxu0
        %v892 = vadd.f32 0.0, %v891
        %v893 = vpop.f32.mrb[0].mxu0
        %v894 = vpop.f32.mrb[0].mxu0
        %v895 = vadd.f32 0.0, %v894
        %v896 = vpop.f32.mrb[0].mxu0
        %897 = vmatprep.mubr.bf16.mxu0 0
        %898 = vmatmul.mubr.bf16.gmra.mrb[0].mxu0 %v708
        %v899 = vpop.f32.mrb[0].mxu0
        %v900 = vadd.f32 0.0, %v899
        %v901 = vpop.f32.mrb[0].mxu0
        %v902 = vpop.f32.mrb[0].mxu0
        %v903 = vadd.f32 0.0, %v902
        %v904 = vpop.f32.mrb[0].mxu0
        %905 = vmatprep.mubr.bf16.mxu0 0
        %906 = vmatmul.mubr.bf16.gmra.mrb[0].mxu0 %v709
        %v907 = vpop.f32.mrb[0].mxu0
        %v908 = vadd.f32 0.0, %v907
        %v909 = vpop.f32.mrb[0].mxu0
        %v910 = vpop.f32.mrb[0].mxu0
        %v911 = vadd.f32 0.0, %v910
        %v912 = vpop.f32.mrb[0].mxu0
        %913 = vmatprep.mubr.bf16.mxu0 0
        %914 = vmatmul.mubr.bf16.gmra.mrb[0].mxu0 %v710
        %v915 = vpop.f32.mrb[0].mxu0
        %v916 = vadd.f32 0.0, %v915
        %v917 = vpop.f32.mrb[0].mxu0
        %v918 = vpop.f32.mrb[0].mxu0
        %v919 = vadd.f32 0.0, %v918
        %v920 = vpop.f32.mrb[0].mxu0
        %921 = vmatprep.mubr.bf16.mxu0 0
        %922 = vmatmul.mubr.bf16.gmra.mrb[0].mxu0 %v711
        %v923 = vpop.f32.mrb[0].mxu0
        %v924 = vadd.f32 0.0, %v923
        %v925 = vpop.f32.mrb[0].mxu0
        %v926 = vpop.f32.mrb[0].mxu0
        %v927 = vadd.f32 0.0, %v926
        %v928 = vpop.f32.mrb[0].mxu0
        %929 = vmatprep.mubr.bf16.mxu0 0
        %930 = vmatmul.mubr.bf16.gmra.mrb[0].mxu0 %v712
        %v931 = vpop.f32.mrb[0].mxu0
        %v932 = vadd.f32 0.0, %v931
        %v933 = vpop.f32.mrb[0].mxu0
        %v934 = vpop.f32.mrb[0].mxu0
        %v935 = vadd.f32 0.0, %v934
        %v936 = vpop.f32.mrb[0].mxu0
        %937 = vdwg.mxu0
        %v970 = vunpack.c.l.b16 %v197
        %v971 = vunpack.c.l.b16 %v198
        %v972 = vunpack.c.l.b16 %v199
        %v973 = vunpack.c.l.b16 %v200
        %v974 = vunpack.c.l.b16 %v201
        %v975 = vunpack.c.l.b16 %v202
        %v976 = vunpack.c.l.b16 %v203
        %v977 = vunpack.c.l.b16 %v204
        %v978 = vunpack.c.l.b16 %v205
        %v979 = vunpack.c.l.b16 %v206
        %v980 = vunpack.c.l.b16 %v207
        %v981 = vunpack.c.l.b16 %v208
        %v982 = vunpack.c.l.b16 %v209
        %v983 = vunpack.c.l.b16 %v210
        %v984 = vunpack.c.l.b16 %v211
        %v985 = vunpack.c.l.b16 %v212
        %v986 = vunpack.c.l.b16 %v213
        %v987 = vunpack.c.l.b16 %v214
        %v988 = vunpack.c.l.b16 %v215
        %v989 = vunpack.c.l.b16 %v216
        %v990 = vunpack.c.l.b16 %v217
        %v991 = vunpack.c.l.b16 %v218
        %v992 = vunpack.c.l.b16 %v219
        %v993 = vunpack.c.l.b16 %v220
        %v994 = vunpack.c.l.b16 %v221
        %v995 = vunpack.c.l.b16 %v222
        %v996 = vunpack.c.l.b16 %v223
        %v997 = vunpack.c.l.b16 %v224
        %v998 = vunpack.c.l.b16 %v225
        %v999 = vunpack.c.l.b16 %v226
        %v1000 = vunpack.c.l.b16 %v227
        %v1001 = vunpack.c.l.b16 %v228
        %v1002 = vpack.c.b16 %v971, %v970
        %v1003 = vpack.c.b16 %v973, %v972
        %v1004 = vpack.c.b16 %v975, %v974
        %v1005 = vpack.c.b16 %v977, %v976
        %v1006 = vpack.c.b16 %v979, %v978
        %v1007 = vpack.c.b16 %v981, %v980
        %v1008 = vpack.c.b16 %v983, %v982
        %v1009 = vpack.c.b16 %v985, %v984
        %v1010 = vpack.c.b16 %v987, %v986
        %v1011 = vpack.c.b16 %v989, %v988
        %v1012 = vpack.c.b16 %v991, %v990
        %v1013 = vpack.c.b16 %v993, %v992
        %v1014 = vpack.c.b16 %v995, %v994
        %v1015 = vpack.c.b16 %v997, %v996
        %v1016 = vpack.c.b16 %v999, %v998
        %v1017 = vpack.c.b16 %v1001, %v1000
        %v1050 = vunpack.c.l.b16 %v229
        %v1051 = vunpack.c.l.b16 %v230
        %v1052 = vunpack.c.l.b16 %v231
        %v1053 = vunpack.c.l.b16 %v232
        %v1054 = vunpack.c.l.b16 %v233
        %v1055 = vunpack.c.l.b16 %v234
        %v1056 = vunpack.c.l.b16 %v235
        %v1057 = vunpack.c.l.b16 %v236
        %v1058 = vunpack.c.l.b16 %v237
        %v1059 = vunpack.c.l.b16 %v238
        %v1060 = vunpack.c.l.b16 %v239
        %v1061 = vunpack.c.l.b16 %v240
        %v1062 = vunpack.c.l.b16 %v241
        %v1063 = vunpack.c.l.b16 %v242
        %v1064 = vunpack.c.l.b16 %v243
        %v1065 = vunpack.c.l.b16 %v244
        %v1066 = vpack.c.b16 %v1051, %v1050
        %v1067 = vpack.c.b16 %v1053, %v1052
        %v1068 = vpack.c.b16 %v1055, %v1054
        %v1069 = vpack.c.b16 %v1057, %v1056
        %v1070 = vpack.c.b16 %v1059, %v1058
        %v1071 = vpack.c.b16 %v1061, %v1060
        %v1072 = vpack.c.b16 %v1063, %v1062
        %v1073 = vpack.c.b16 %v1065, %v1064
        %1082 = vmatprep.subr.bf16.mxu0 0
        %1083 = vmatpush1.bf16.msra.mxu0 %v1066
        %1084 = vmatprep.subr.bf16.mxu0 0
        %1085 = vmatpush1.bf16.msra.mxu0 %v1067
        %1086 = vmatprep.subr.bf16.mxu0 0
        %1087 = vmatpush1.bf16.msra.mxu0 %v1068
        %1088 = vmatprep.subr.bf16.mxu0 0
        %1089 = vmatpush1.bf16.msra.mxu0 %v1069
        %1090 = vmatprep.subr.bf16.mxu0 0
        %1091 = vmatpush1.bf16.msra.mxu0 %v1070
        %1092 = vmatprep.subr.bf16.mxu0 0
        %1093 = vmatpush1.bf16.msra.mxu0 %v1071
        %1094 = vmatprep.subr.bf16.mxu0 0
        %1095 = vmatpush1.bf16.msra.mxu0 %v1072
        %1096 = vmatprep.subr.bf16.mxu0 0
        %1097 = vmatpush1.bf16.msra.mxu0 %v1073
        %1098 = vmatprep.subr.bf16.mxu0 0
        %1099 = vmatpush1.bf16.msra.mxu0 0
        %1100 = vmatprep.subr.bf16.mxu0 0
        %1101 = vmatpush1.bf16.msra.mxu0 0
        %1102 = vmatprep.subr.bf16.mxu0 0
        %1103 = vmatpush1.bf16.msra.mxu0 0
        %1104 = vmatprep.subr.bf16.mxu0 0
        %1105 = vmatpush1.bf16.msra.mxu0 0
        %1106 = vmatprep.subr.bf16.mxu0 0
        %1107 = vmatpush1.bf16.msra.mxu0 0
        %1108 = vmatprep.subr.bf16.mxu0 0
        %1109 = vmatpush1.bf16.msra.mxu0 0
        %1110 = vmatprep.subr.bf16.mxu0 0
        %1111 = vmatpush1.bf16.msra.mxu0 0
        %1112 = vmatprep.subr.bf16.mxu0 0
        %1113 = vmatpush1.bf16.msra.mxu0 0
        %1114 = vmatprep.mubr.bf16.mxu0 0
        %1115 = vmatmul.mubr.bf16.gmra.mrb[0].mxu0 %v1002
        %v1116 = vpop.f32.mrb[0].mxu0
        %v1117 = vadd.f32 %v812, %v1116
        %v1118 = vpop.f32.mrb[0].mxu0
        %v1119 = vpop.f32.mrb[0].mxu0
        %v1120 = vadd.f32 %v815, %v1119
        %v1121 = vpop.f32.mrb[0].mxu0
        %1122 = vmatprep.mubr.bf16.mxu0 0
        %1123 = vmatmul.mubr.bf16.gmra.mrb[0].mxu0 %v1003
        %v1124 = vpop.f32.mrb[0].mxu0
        %v1125 = vadd.f32 %v820, %v1124
        %v1126 = vpop.f32.mrb[0].mxu0
        %v1127 = vpop.f32.mrb[0].mxu0
        %v1128 = vadd.f32 %v823, %v1127
        %v1129 = vpop.f32.mrb[0].mxu0
        %1130 = vmatprep.mubr.bf16.mxu0 0
        %1131 = vmatmul.mubr.bf16.gmra.mrb[0].mxu0 %v1004
        %v1132 = vpop.f32.mrb[0].mxu0
        %v1133 = vadd.f32 %v828, %v1132
        %v1134 = vpop.f32.mrb[0].mxu0
        %v1135 = vpop.f32.mrb[0].mxu0
        %v1136 = vadd.f32 %v831, %v1135
        %v1137 = vpop.f32.mrb[0].mxu0
        %1138 = vmatprep.mubr.bf16.mxu0 0
        %1139 = vmatmul.mubr.bf16.gmra.mrb[0].mxu0 %v1005
        %v1140 = vpop.f32.mrb[0].mxu0
        %v1141 = vadd.f32 %v836, %v1140
        %v1142 = vpop.f32.mrb[0].mxu0
        %v1143 = vpop.f32.mrb[0].mxu0
        %v1144 = vadd.f32 %v839, %v1143
        %v1145 = vpop.f32.mrb[0].mxu0
        %1146 = vmatprep.mubr.bf16.mxu0 0
        %1147 = vmatmul.mubr.bf16.gmra.mrb[0].mxu0 %v1006
        %v1148 = vpop.f32.mrb[0].mxu0
        %v1149 = vadd.f32 %v844, %v1148
        %v1150 = vpop.f32.mrb[0].mxu0
        %v1151 = vpop.f32.mrb[0].mxu0
        %v1152 = vadd.f32 %v847, %v1151
        %v1153 = vpop.f32.mrb[0].mxu0
        %1154 = vmatprep.mubr.bf16.mxu0 0
        %1155 = vmatmul.mubr.bf16.gmra.mrb[0].mxu0 %v1007
        %v1156 = vpop.f32.mrb[0].mxu0
        %v1157 = vadd.f32 %v852, %v1156
        %v1158 = vpop.f32.mrb[0].mxu0
        %v1159 = vpop.f32.mrb[0].mxu0
        %v1160 = vadd.f32 %v855, %v1159
        %v1161 = vpop.f32.mrb[0].mxu0
        %1162 = vmatprep.mubr.bf16.mxu0 0
        %1163 = vmatmul.mubr.bf16.gmra.mrb[0].mxu0 %v1008
        %v1164 = vpop.f32.mrb[0].mxu0
        %v1165 = vadd.f32 %v860, %v1164
        %v1166 = vpop.f32.mrb[0].mxu0
        %v1167 = vpop.f32.mrb[0].mxu0
        %v1168 = vadd.f32 %v863, %v1167
        %v1169 = vpop.f32.mrb[0].mxu0
        %1170 = vmatprep.mubr.bf16.mxu0 0
        %1171 = vmatmul.mubr.bf16.gmra.mrb[0].mxu0 %v1009
        %v1172 = vpop.f32.mrb[0].mxu0
        %v1173 = vadd.f32 %v868, %v1172
        %v1174 = vpop.f32.mrb[0].mxu0
        %v1175 = vpop.f32.mrb[0].mxu0
        %v1176 = vadd.f32 %v871, %v1175
        %v1177 = vpop.f32.mrb[0].mxu0
        %1178 = vmatprep.mubr.bf16.mxu0 0
        %1179 = vmatmul.mubr.bf16.gmra.mrb[0].mxu0 %v1010
        %v1180 = vpop.f32.mrb[0].mxu0
        %v1181 = vadd.f32 %v876, %v1180
        %v1182 = vpop.f32.mrb[0].mxu0
        %v1183 = vpop.f32.mrb[0].mxu0
        %v1184 = vadd.f32 %v879, %v1183
        %v1185 = vpop.f32.mrb[0].mxu0
        %1186 = vmatprep.mubr.bf16.mxu0 0
        %1187 = vmatmul.mubr.bf16.gmra.mrb[0].mxu0 %v1011
        %v1188 = vpop.f32.mrb[0].mxu0
        %v1189 = vadd.f32 %v884, %v1188
        %v1190 = vpop.f32.mrb[0].mxu0
        %v1191 = vpop.f32.mrb[0].mxu0
        %v1192 = vadd.f32 %v887, %v1191
        %v1193 = vpop.f32.mrb[0].mxu0
        %1194 = vmatprep.mubr.bf16.mxu0 0
        %1195 = vmatmul.mubr.bf16.gmra.mrb[0].mxu0 %v1012
        %v1196 = vpop.f32.mrb[0].mxu0
        %v1197 = vadd.f32 %v892, %v1196
        %v1198 = vpop.f32.mrb[0].mxu0
        %v1199 = vpop.f32.mrb[0].mxu0
        %v1200 = vadd.f32 %v895, %v1199
        %v1201 = vpop.f32.mrb[0].mxu0
        %1202 = vmatprep.mubr.bf16.mxu0 0
        %1203 = vmatmul.mubr.bf16.gmra.mrb[0].mxu0 %v1013
        %v1204 = vpop.f32.mrb[0].mxu0
        %v1205 = vadd.f32 %v900, %v1204
        %v1206 = vpop.f32.mrb[0].mxu0
        %v1207 = vpop.f32.mrb[0].mxu0
        %v1208 = vadd.f32 %v903, %v1207
        %v1209 = vpop.f32.mrb[0].mxu0
        %1210 = vmatprep.mubr.bf16.mxu0 0
        %1211 = vmatmul.mubr.bf16.gmra.mrb[0].mxu0 %v1014
        %v1212 = vpop.f32.mrb[0].mxu0
        %v1213 = vadd.f32 %v908, %v1212
        %v1214 = vpop.f32.mrb[0].mxu0
        %v1215 = vpop.f32.mrb[0].mxu0
        %v1216 = vadd.f32 %v911, %v1215
        %v1217 = vpop.f32.mrb[0].mxu0
        %1218 = vmatprep.mubr.bf16.mxu0 0
        %1219 = vmatmul.mubr.bf16.gmra.mrb[0].mxu0 %v1015
        %v1220 = vpop.f32.mrb[0].mxu0
        %v1221 = vadd.f32 %v916, %v1220
        %v1222 = vpop.f32.mrb[0].mxu0
        %v1223 = vpop.f32.mrb[0].mxu0
        %v1224 = vadd.f32 %v919, %v1223
        %v1225 = vpop.f32.mrb[0].mxu0
        %1226 = vmatprep.mubr.bf16.mxu0 0
        %1227 = vmatmul.mubr.bf16.gmra.mrb[0].mxu0 %v1016
        %v1228 = vpop.f32.mrb[0].mxu0
        %v1229 = vadd.f32 %v924, %v1228
        %v1230 = vpop.f32.mrb[0].mxu0
        %v1231 = vpop.f32.mrb[0].mxu0
        %v1232 = vadd.f32 %v927, %v1231
        %v1233 = vpop.f32.mrb[0].mxu0
        %1234 = vmatprep.mubr.bf16.mxu0 0
        %1235 = vmatmul.mubr.bf16.gmra.mrb[0].mxu0 %v1017
        %v1236 = vpop.f32.mrb[0].mxu0
        %v1237 = vadd.f32 %v932, %v1236
        %v1238 = vpop.f32.mrb[0].mxu0
        %v1239 = vpop.f32.mrb[0].mxu0
        %v1240 = vadd.f32 %v935, %v1239
        %v1241 = vpop.f32.mrb[0].mxu0
        %1242 = vdwg.mxu0
        %v1243 = vld [vmem:[%s195] sm:$0xe]
        %v1244 = vld [vmem:[%s195 + $0xc] sm:$0xe]
        %v1245 = vld [vmem:[%s195 + $0x18] sm:$0xe]
        %v1246 = vld [vmem:[%s195 + $0x24] sm:$0xe]
        %v1247 = vld [vmem:[%s195 + $0x30] sm:$0xe]
        %v1248 = vld [vmem:[%s195 + $0x3c] sm:$0xe]
        %v1249 = vld [vmem:[%s195 + $0x48] sm:$0xe]
        %v1250 = vld [vmem:[%s195 + $0x54] sm:$0xe]
        %v1251 = vld [vmem:[%s195 + $0x60] sm:$0xe]
        %v1252 = vld [vmem:[%s195 + $0x6c] sm:$0xe]
        %v1253 = vld [vmem:[%s195 + $0x78] sm:$0xe]
        %v1254 = vld [vmem:[%s195 + $0x84] sm:$0xe]
        %v1255 = vld [vmem:[%s195 + $0x90] sm:$0xe]
        %v1256 = vld [vmem:[%s195 + $0x9c] sm:$0xe]
        %v1257 = vld [vmem:[%s195 + $0xa8] sm:$0xe]
        %v1258 = vld [vmem:[%s195 + $0xb4] sm:$0xe]
        %vm1291 = vcmask 1042432
        %vm1292 = vcmask 1046532
        %vm1293 = vmor %vm1291, %vm1292
        %v1294 = vrot.slane %v1243, 5
        %v1295 = vrot.slane %v1294, 4
        %v1296 = vrot.slane %v198, 5
        %v1297 = vsel %vm1293, %v1295, %v1296
        %v1298 = vrot.slane %v1296, 4
        %v1299 = vrot.slane %v245, 5
        %v1300 = vsel %vm1293, %v1298, %v1299
        %v1301 = vrot.slane %v1244, 5
        %v1302 = vrot.slane %v1301, 4
        %v1303 = vrot.slane %v200, 5
        %v1304 = vsel %vm1293, %v1302, %v1303
        %v1305 = vrot.slane %v1303, 4
        %v1306 = vrot.slane %v246, 5
        %v1307 = vsel %vm1293, %v1305, %v1306
        %v1308 = vrot.slane %v1245, 5
        %v1309 = vrot.slane %v1308, 4
        %v1310 = vrot.slane %v202, 5
        %v1311 = vsel %vm1293, %v1309, %v1310
        %v1312 = vrot.slane %v1310, 4
        %v1313 = vrot.slane %v247, 5
        %v1314 = vsel %vm1293, %v1312, %v1313
        %v1315 = vrot.slane %v1246, 5
        %v1316 = vrot.slane %v1315, 4
        %v1317 = vrot.slane %v204, 5
        %v1318 = vsel %vm1293, %v1316, %v1317
        %v1319 = vrot.slane %v1317, 4
        %v1320 = vrot.slane %v248, 5
        %v1321 = vsel %vm1293, %v1319, %v1320
        %v1322 = vrot.slane %v1247, 5
        %v1323 = vrot.slane %v1322, 4
        %v1324 = vrot.slane %v206, 5
        %v1325 = vsel %vm1293, %v1323, %v1324
        %v1326 = vrot.slane %v1324, 4
        %v1327 = vrot.slane %v249, 5
        %v1328 = vsel %vm1293, %v1326, %v1327
        %v1329 = vrot.slane %v1248, 5
        %v1330 = vrot.slane %v1329, 4
        %v1331 = vrot.slane %v208, 5
        %v1332 = vsel %vm1293, %v1330, %v1331
        %v1333 = vrot.slane %v1331, 4
        %v1334 = vrot.slane %v250, 5
        %v1335 = vsel %vm1293, %v1333, %v1334
        %v1336 = vrot.slane %v1249, 5
        %v1337 = vrot.slane %v1336, 4
        %v1338 = vrot.slane %v210, 5
        %v1339 = vsel %vm1293, %v1337, %v1338
        %v1340 = vrot.slane %v1338, 4
        %v1341 = vrot.slane %v251, 5
        %v1342 = vsel %vm1293, %v1340, %v1341
        %v1343 = vrot.slane %v1250, 5
        %v1344 = vrot.slane %v1343, 4
        %v1345 = vrot.slane %v212, 5
        %v1346 = vsel %vm1293, %v1344, %v1345
        %v1347 = vrot.slane %v1345, 4
        %v1348 = vrot.slane %v252, 5
        %v1349 = vsel %vm1293, %v1347, %v1348
        %v1350 = vrot.slane %v1251, 5
        %v1351 = vrot.slane %v1350, 4
        %v1352 = vrot.slane %v214, 5
        %v1353 = vsel %vm1293, %v1351, %v1352
        %v1354 = vrot.slane %v1352, 4
        %v1355 = vrot.slane %v253, 5
        %v1356 = vsel %vm1293, %v1354, %v1355
        %v1357 = vrot.slane %v1252, 5
        %v1358 = vrot.slane %v1357, 4
        %v1359 = vrot.slane %v216, 5
        %v1360 = vsel %vm1293, %v1358, %v1359
        %v1361 = vrot.slane %v1359, 4
        %v1362 = vrot.slane %v254, 5
        %v1363 = vsel %vm1293, %v1361, %v1362
        %v1364 = vrot.slane %v1253, 5
        %v1365 = vrot.slane %v1364, 4
        %v1366 = vrot.slane %v218, 5
        %v1367 = vsel %vm1293, %v1365, %v1366
        %v1368 = vrot.slane %v1366, 4
        %v1369 = vrot.slane %v255, 5
        %v1370 = vsel %vm1293, %v1368, %v1369
        %v1371 = vrot.slane %v1254, 5
        %v1372 = vrot.slane %v1371, 4
        %v1373 = vrot.slane %v220, 5
        %v1374 = vsel %vm1293, %v1372, %v1373
        %v1375 = vrot.slane %v1373, 4
        %v1376 = vrot.slane %v256, 5
        %v1377 = vsel %vm1293, %v1375, %v1376
        %v1378 = vrot.slane %v1255, 5
        %v1379 = vrot.slane %v1378, 4
        %v1380 = vrot.slane %v222, 5
        %v1381 = vsel %vm1293, %v1379, %v1380
        %v1382 = vrot.slane %v1380, 4
        %v1383 = vrot.slane %v257, 5
        %v1384 = vsel %vm1293, %v1382, %v1383
        %v1385 = vrot.slane %v1256, 5
        %v1386 = vrot.slane %v1385, 4
        %v1387 = vrot.slane %v224, 5
        %v1388 = vsel %vm1293, %v1386, %v1387
        %v1389 = vrot.slane %v1387, 4
        %v1390 = vrot.slane %v258, 5
        %v1391 = vsel %vm1293, %v1389, %v1390
        %v1392 = vrot.slane %v1257, 5
        %v1393 = vrot.slane %v1392, 4
        %v1394 = vrot.slane %v226, 5
        %v1395 = vsel %vm1293, %v1393, %v1394
        %v1396 = vrot.slane %v1394, 4
        %v1397 = vrot.slane %v259, 5
        %v1398 = vsel %vm1293, %v1396, %v1397
        %v1399 = vrot.slane %v1258, 5
        %v1400 = vrot.slane %v1399, 4
        %v1401 = vrot.slane %v228, 5
        %v1402 = vsel %vm1293, %v1400, %v1401
        %v1403 = vrot.slane %v1401, 4
        %v1404 = vrot.slane %v260, 5
        %v1405 = vsel %vm1293, %v1403, %v1404
        %s1406 = scalar_lea.vmem %s1, 128
        %v1407 = vld [vmem:[%s1406] sm:$0xf]
        %v1408 = vld [vmem:[%s1406 + $0x4] sm:$0xf]
        %v1409 = vld [vmem:[%s1406 + $0x8] sm:$0xf]
        %v1410 = vld [vmem:[%s1406 + $0xc] sm:$0xf]
        %v1411 = vld [vmem:[%s1406 + $0x10] sm:$0xf]
        %v1412 = vld [vmem:[%s1406 + $0x14] sm:$0xf]
        %v1413 = vld [vmem:[%s1406 + $0x18] sm:$0xf]
        %v1414 = vld [vmem:[%s1406 + $0x1c] sm:$0xf]
        %v1415 = vld [vmem:[%s1406 + $0x20] sm:$0xf]
        %v1416 = vld [vmem:[%s1406 + $0x24] sm:$0xf]
        %v1417 = vld [vmem:[%s1406 + $0x28] sm:$0xf]
        %v1418 = vld [vmem:[%s1406 + $0x2c] sm:$0xf]
        %v1419 = vld [vmem:[%s1406 + $0x30] sm:$0xf]
        %v1420 = vld [vmem:[%s1406 + $0x34] sm:$0xf]
        %v1421 = vld [vmem:[%s1406 + $0x38] sm:$0xf]
        %v1422 = vld [vmem:[%s1406 + $0x3c] sm:$0xf]
        %v1423 = vunpack.c.l.b16 %v1297
        %v1424 = vunpack.c.l.b16 %v1300
        %v1425 = vunpack.c.l.b16 %v1304
        %v1426 = vunpack.c.l.b16 %v1307
        %v1427 = vunpack.c.l.b16 %v1311
        %v1428 = vunpack.c.l.b16 %v1314
        %v1429 = vunpack.c.l.b16 %v1318
        %v1430 = vunpack.c.l.b16 %v1321
        %v1431 = vunpack.c.l.b16 %v1325
        %v1432 = vunpack.c.l.b16 %v1328
        %v1433 = vunpack.c.l.b16 %v1332
        %v1434 = vunpack.c.l.b16 %v1335
        %v1435 = vunpack.c.l.b16 %v1339
        %v1436 = vunpack.c.l.b16 %v1342
        %v1437 = vunpack.c.l.b16 %v1346
        %v1438 = vunpack.c.l.b16 %v1349
        %v1439 = vunpack.c.l.b16 %v1353
        %v1440 = vunpack.c.l.b16 %v1356
        %v1441 = vunpack.c.l.b16 %v1360
        %v1442 = vunpack.c.l.b16 %v1363
        %v1443 = vunpack.c.l.b16 %v1367
        %v1444 = vunpack.c.l.b16 %v1370
        %v1445 = vunpack.c.l.b16 %v1374
        %v1446 = vunpack.c.l.b16 %v1377
        %v1447 = vunpack.c.l.b16 %v1381
        %v1448 = vunpack.c.l.b16 %v1384
        %v1449 = vunpack.c.l.b16 %v1388
        %v1450 = vunpack.c.l.b16 %v1391
        %v1451 = vunpack.c.l.b16 %v1395
        %v1452 = vunpack.c.l.b16 %v1398
        %v1453 = vunpack.c.l.b16 %v1402
        %v1454 = vunpack.c.l.b16 %v1405
        %v1455 = vpack.c.b16 %v1424, %v1423
        %v1456 = vpack.c.b16 %v1426, %v1425
        %v1457 = vpack.c.b16 %v1428, %v1427
        %v1458 = vpack.c.b16 %v1430, %v1429
        %v1459 = vpack.c.b16 %v1432, %v1431
        %v1460 = vpack.c.b16 %v1434, %v1433
        %v1461 = vpack.c.b16 %v1436, %v1435
        %v1462 = vpack.c.b16 %v1438, %v1437
        %v1463 = vpack.c.b16 %v1440, %v1439
        %v1464 = vpack.c.b16 %v1442, %v1441
        %v1465 = vpack.c.b16 %v1444, %v1443
        %v1466 = vpack.c.b16 %v1446, %v1445
        %v1467 = vpack.c.b16 %v1448, %v1447
        %v1468 = vpack.c.b16 %v1450, %v1449
        %v1469 = vpack.c.b16 %v1452, %v1451
        %v1470 = vpack.c.b16 %v1454, %v1453
        %v1503 = vunpack.c.l.b16 %v1407
        %v1504 = vunpack.c.l.b16 %v1408
        %v1505 = vunpack.c.l.b16 %v1409
        %v1506 = vunpack.c.l.b16 %v1410
        %v1507 = vunpack.c.l.b16 %v1411
        %v1508 = vunpack.c.l.b16 %v1412
        %v1509 = vunpack.c.l.b16 %v1413
        %v1510 = vunpack.c.l.b16 %v1414
        %v1511 = vunpack.c.l.b16 %v1415
        %v1512 = vunpack.c.l.b16 %v1416
        %v1513 = vunpack.c.l.b16 %v1417
        %v1514 = vunpack.c.l.b16 %v1418
        %v1515 = vunpack.c.l.b16 %v1419
        %v1516 = vunpack.c.l.b16 %v1420
        %v1517 = vunpack.c.l.b16 %v1421
        %v1518 = vunpack.c.l.b16 %v1422
        %v1519 = vpack.c.b16 %v1504, %v1503
        %v1520 = vpack.c.b16 %v1506, %v1505
        %v1521 = vpack.c.b16 %v1508, %v1507
        %v1522 = vpack.c.b16 %v1510, %v1509
        %v1523 = vpack.c.b16 %v1512, %v1511
        %v1524 = vpack.c.b16 %v1514, %v1513
        %v1525 = vpack.c.b16 %v1516, %v1515
        %v1526 = vpack.c.b16 %v1518, %v1517
        %1535 = vmatprep.subr.bf16.mxu0 0
        %1536 = vmatpush1.bf16.msra.mxu0 %v1519
        %1537 = vmatprep.subr.bf16.mxu0 0
        %1538 = vmatpush1.bf16.msra.mxu0 %v1520
        %1539 = vmatprep.subr.bf16.mxu0 0
        %1540 = vmatpush1.bf16.msra.mxu0 %v1521
        %1541 = vmatprep.subr.bf16.mxu0 0
        %1542 = vmatpush1.bf16.msra.mxu0 %v1522
        %1543 = vmatprep.subr.bf16.mxu0 0
        %1544 = vmatpush1.bf16.msra.mxu0 %v1523
        %1545 = vmatprep.subr.bf16.mxu0 0
        %1546 = vmatpush1.bf16.msra.mxu0 %v1524
        %1547 = vmatprep.subr.bf16.mxu0 0
        %1548 = vmatpush1.bf16.msra.mxu0 %v1525
        %1549 = vmatprep.subr.bf16.mxu0 0
        %1550 = vmatpush1.bf16.msra.mxu0 %v1526
        %1551 = vmatprep.subr.bf16.mxu0 0
        %1552 = vmatpush1.bf16.msra.mxu0 0
        %1553 = vmatprep.subr.bf16.mxu0 0
        %1554 = vmatpush1.bf16.msra.mxu0 0
        %1555 = vmatprep.subr.bf16.mxu0 0
        %1556 = vmatpush1.bf16.msra.mxu0 0
        %1557 = vmatprep.subr.bf16.mxu0 0
        %1558 = vmatpush1.bf16.msra.mxu0 0
        %1559 = vmatprep.subr.bf16.mxu0 0
        %1560 = vmatpush1.bf16.msra.mxu0 0
        %1561 = vmatprep.subr.bf16.mxu0 0
        %1562 = vmatpush1.bf16.msra.mxu0 0
        %1563 = vmatprep.subr.bf16.mxu0 0
        %1564 = vmatpush1.bf16.msra.mxu0 0
        %1565 = vmatprep.subr.bf16.mxu0 0
        %1566 = vmatpush1.bf16.msra.mxu0 0
        %1567 = vmatprep.mubr.bf16.mxu0 0
        %1568 = vmatmul.mubr.bf16.gmra.mrb[0].mxu0 %v1455
        %v1569 = vpop.f32.mrb[0].mxu0
        %v1570 = vadd.f32 0.0, %v1569
        %v1571 = vpop.f32.mrb[0].mxu0
        %v1572 = vpop.f32.mrb[0].mxu0
        %v1573 = vadd.f32 0.0, %v1572
        %v1574 = vpop.f32.mrb[0].mxu0
        %1575 = vmatprep.mubr.bf16.mxu0 0
        %1576 = vmatmul.mubr.bf16.gmra.mrb[0].mxu0 %v1456
        %v1577 = vpop.f32.mrb[0].mxu0
        %v1578 = vadd.f32 0.0, %v1577
        %v1579 = vpop.f32.mrb[0].mxu0
        %v1580 = vpop.f32.mrb[0].mxu0
        %v1581 = vadd.f32 0.0, %v1580
        %v1582 = vpop.f32.mrb[0].mxu0
        %1583 = vmatprep.mubr.bf16.mxu0 0
        %1584 = vmatmul.mubr.bf16.gmra.mrb[0].mxu0 %v1457
        %v1585 = vpop.f32.mrb[0].mxu0
        %v1586 = vadd.f32 0.0, %v1585
        %v1587 = vpop.f32.mrb[0].mxu0
        %v1588 = vpop.f32.mrb[0].mxu0
        %v1589 = vadd.f32 0.0, %v1588
        %v1590 = vpop.f32.mrb[0].mxu0
        %1591 = vmatprep.mubr.bf16.mxu0 0
        %1592 = vmatmul.mubr.bf16.gmra.mrb[0].mxu0 %v1458
        %v1593 = vpop.f32.mrb[0].mxu0
        %v1594 = vadd.f32 0.0, %v1593
        %v1595 = vpop.f32.mrb[0].mxu0
        %v1596 = vpop.f32.mrb[0].mxu0
        %v1597 = vadd.f32 0.0, %v1596
        %v1598 = vpop.f32.mrb[0].mxu0
        %1599 = vmatprep.mubr.bf16.mxu0 0
        %1600 = vmatmul.mubr.bf16.gmra.mrb[0].mxu0 %v1459
        %v1601 = vpop.f32.mrb[0].mxu0
        %v1602 = vadd.f32 0.0, %v1601
        %v1603 = vpop.f32.mrb[0].mxu0
        %v1604 = vpop.f32.mrb[0].mxu0
        %v1605 = vadd.f32 0.0, %v1604
        %v1606 = vpop.f32.mrb[0].mxu0
        %1607 = vmatprep.mubr.bf16.mxu0 0
        %1608 = vmatmul.mubr.bf16.gmra.mrb[0].mxu0 %v1460
        %v1609 = vpop.f32.mrb[0].mxu0
        %v1610 = vadd.f32 0.0, %v1609
        %v1611 = vpop.f32.mrb[0].mxu0
        %v1612 = vpop.f32.mrb[0].mxu0
        %v1613 = vadd.f32 0.0, %v1612
        %v1614 = vpop.f32.mrb[0].mxu0
        %1615 = vmatprep.mubr.bf16.mxu0 0
        %1616 = vmatmul.mubr.bf16.gmra.mrb[0].mxu0 %v1461
        %v1617 = vpop.f32.mrb[0].mxu0
        %v1618 = vadd.f32 0.0, %v1617
        %v1619 = vpop.f32.mrb[0].mxu0
        %v1620 = vpop.f32.mrb[0].mxu0
        %v1621 = vadd.f32 0.0, %v1620
        %v1622 = vpop.f32.mrb[0].mxu0
        %1623 = vmatprep.mubr.bf16.mxu0 0
        %1624 = vmatmul.mubr.bf16.gmra.mrb[0].mxu0 %v1462
        %v1625 = vpop.f32.mrb[0].mxu0
        %v1626 = vadd.f32 0.0, %v1625
        %v1627 = vpop.f32.mrb[0].mxu0
        %v1628 = vpop.f32.mrb[0].mxu0
        %v1629 = vadd.f32 0.0, %v1628
        %v1630 = vpop.f32.mrb[0].mxu0
        %1631 = vmatprep.mubr.bf16.mxu0 0
        %1632 = vmatmul.mubr.bf16.gmra.mrb[0].mxu0 %v1463
        %v1633 = vpop.f32.mrb[0].mxu0
        %v1634 = vadd.f32 0.0, %v1633
        %v1635 = vpop.f32.mrb[0].mxu0
        %v1636 = vpop.f32.mrb[0].mxu0
        %v1637 = vadd.f32 0.0, %v1636
        %v1638 = vpop.f32.mrb[0].mxu0
        %1639 = vmatprep.mubr.bf16.mxu0 0
        %1640 = vmatmul.mubr.bf16.gmra.mrb[0].mxu0 %v1464
        %v1641 = vpop.f32.mrb[0].mxu0
        %v1642 = vadd.f32 0.0, %v1641
        %v1643 = vpop.f32.mrb[0].mxu0
        %v1644 = vpop.f32.mrb[0].mxu0
        %v1645 = vadd.f32 0.0, %v1644
        %v1646 = vpop.f32.mrb[0].mxu0
        %1647 = vmatprep.mubr.bf16.mxu0 0
        %1648 = vmatmul.mubr.bf16.gmra.mrb[0].mxu0 %v1465
        %v1649 = vpop.f32.mrb[0].mxu0
        %v1650 = vadd.f32 0.0, %v1649
        %v1651 = vpop.f32.mrb[0].mxu0
        %v1652 = vpop.f32.mrb[0].mxu0
        %v1653 = vadd.f32 0.0, %v1652
        %v1654 = vpop.f32.mrb[0].mxu0
        %1655 = vmatprep.mubr.bf16.mxu0 0
        %1656 = vmatmul.mubr.bf16.gmra.mrb[0].mxu0 %v1466
        %v1657 = vpop.f32.mrb[0].mxu0
        %v1658 = vadd.f32 0.0, %v1657
        %v1659 = vpop.f32.mrb[0].mxu0
        %v1660 = vpop.f32.mrb[0].mxu0
        %v1661 = vadd.f32 0.0, %v1660
        %v1662 = vpop.f32.mrb[0].mxu0
        %1663 = vmatprep.mubr.bf16.mxu0 0
        %1664 = vmatmul.mubr.bf16.gmra.mrb[0].mxu0 %v1467
        %v1665 = vpop.f32.mrb[0].mxu0
        %v1666 = vadd.f32 0.0, %v1665
        %v1667 = vpop.f32.mrb[0].mxu0
        %v1668 = vpop.f32.mrb[0].mxu0
        %v1669 = vadd.f32 0.0, %v1668
        %v1670 = vpop.f32.mrb[0].mxu0
        %1671 = vmatprep.mubr.bf16.mxu0 0
        %1672 = vmatmul.mubr.bf16.gmra.mrb[0].mxu0 %v1468
        %v1673 = vpop.f32.mrb[0].mxu0
        %v1674 = vadd.f32 0.0, %v1673
        %v1675 = vpop.f32.mrb[0].mxu0
        %v1676 = vpop.f32.mrb[0].mxu0
        %v1677 = vadd.f32 0.0, %v1676
        %v1678 = vpop.f32.mrb[0].mxu0
        %1679 = vmatprep.mubr.bf16.mxu0 0
        %1680 = vmatmul.mubr.bf16.gmra.mrb[0].mxu0 %v1469
        %v1681 = vpop.f32.mrb[0].mxu0
        %v1682 = vadd.f32 0.0, %v1681
        %v1683 = vpop.f32.mrb[0].mxu0
        %v1684 = vpop.f32.mrb[0].mxu0
        %v1685 = vadd.f32 0.0, %v1684
        %v1686 = vpop.f32.mrb[0].mxu0
        %1687 = vmatprep.mubr.bf16.mxu0 0
        %1688 = vmatmul.mubr.bf16.gmra.mrb[0].mxu0 %v1470
        %v1689 = vpop.f32.mrb[0].mxu0
        %v1690 = vadd.f32 0.0, %v1689
        %v1691 = vpop.f32.mrb[0].mxu0
        %v1692 = vpop.f32.mrb[0].mxu0
        %v1693 = vadd.f32 0.0, %v1692
        %v1694 = vpop.f32.mrb[0].mxu0
        %1695 = vdwg.mxu0
        %v1696 = vadd.f32 %v1117, %v1570
        %v1697 = vadd.f32 %v1120, %v1573
        %v1698 = vadd.f32 %v1125, %v1578
        %v1699 = vadd.f32 %v1128, %v1581
        %v1700 = vadd.f32 %v1133, %v1586
        %v1701 = vadd.f32 %v1136, %v1589
        %v1702 = vadd.f32 %v1141, %v1594
        %v1703 = vadd.f32 %v1144, %v1597
        %v1704 = vadd.f32 %v1149, %v1602
        %v1705 = vadd.f32 %v1152, %v1605
        %v1706 = vadd.f32 %v1157, %v1610
        %v1707 = vadd.f32 %v1160, %v1613
        %v1708 = vadd.f32 %v1165, %v1618
        %v1709 = vadd.f32 %v1168, %v1621
        %v1710 = vadd.f32 %v1173, %v1626
        %v1711 = vadd.f32 %v1176, %v1629
        %v1712 = vadd.f32 %v1181, %v1634
        %v1713 = vadd.f32 %v1184, %v1637
        %v1714 = vadd.f32 %v1189, %v1642
        %v1715 = vadd.f32 %v1192, %v1645
        %v1716 = vadd.f32 %v1197, %v1650
        %v1717 = vadd.f32 %v1200, %v1653
        %v1718 = vadd.f32 %v1205, %v1658
        %v1719 = vadd.f32 %v1208, %v1661
        %v1720 = vadd.f32 %v1213, %v1666
        %v1721 = vadd.f32 %v1216, %v1669
        %v1722 = vadd.f32 %v1221, %v1674
        %v1723 = vadd.f32 %v1224, %v1677
        %v1724 = vadd.f32 %v1229, %v1682
        %v1725 = vadd.f32 %v1232, %v1685
        %v1726 = vadd.f32 %v1237, %v1690
        %v1727 = vadd.f32 %v1240, %v1693
        %s1728 = scalar_lea.vmem %s195, 12
        %v1729 = vld [vmem:[%s1728] sm:$0xf]
        %v1730 = vld [vmem:[%s1728 + $0x4] sm:$0xf]
        %v1731 = vld [vmem:[%s1728 + $0xc] sm:$0xf]
        %v1732 = vld [vmem:[%s1728 + $0x10] sm:$0xf]
        %v1733 = vld [vmem:[%s1728 + $0x18] sm:$0xf]
        %v1734 = vld [vmem:[%s1728 + $0x1c] sm:$0xf]
        %v1735 = vld [vmem:[%s1728 + $0x24] sm:$0xf]
        %v1736 = vld [vmem:[%s1728 + $0x28] sm:$0xf]
        %v1737 = vld [vmem:[%s1728 + $0x30] sm:$0xf]
        %v1738 = vld [vmem:[%s1728 + $0x34] sm:$0xf]
        %v1739 = vld [vmem:[%s1728 + $0x3c] sm:$0xf]
        %v1740 = vld [vmem:[%s1728 + $0x40] sm:$0xf]
        %v1741 = vld [vmem:[%s1728 + $0x48] sm:$0xf]
        %v1742 = vld [vmem:[%s1728 + $0x4c] sm:$0xf]
        %v1743 = vld [vmem:[%s1728 + $0x54] sm:$0xf]
        %v1744 = vld [vmem:[%s1728 + $0x58] sm:$0xf]
        %v1745 = vld [vmem:[%s1728 + $0x60] sm:$0xf]
        %v1746 = vld [vmem:[%s1728 + $0x64] sm:$0xf]
        %v1747 = vld [vmem:[%s1728 + $0x6c] sm:$0xf]
        %v1748 = vld [vmem:[%s1728 + $0x70] sm:$0xf]
        %v1749 = vld [vmem:[%s1728 + $0x78] sm:$0xf]
        %v1750 = vld [vmem:[%s1728 + $0x7c] sm:$0xf]
        %v1751 = vld [vmem:[%s1728 + $0x84] sm:$0xf]
        %v1752 = vld [vmem:[%s1728 + $0x88] sm:$0xf]
        %v1753 = vld [vmem:[%s1728 + $0x90] sm:$0xf]
        %v1754 = vld [vmem:[%s1728 + $0x94] sm:$0xf]
        %v1755 = vld [vmem:[%s1728 + $0x9c] sm:$0xf]
        %v1756 = vld [vmem:[%s1728 + $0xa0] sm:$0xf]
        %v1757 = vld [vmem:[%s1728 + $0xa8] sm:$0xf]
        %v1758 = vld [vmem:[%s1728 + $0xac] sm:$0xf]
        %v1759 = vld [vmem:[%s1728 + $0xb4] sm:$0xf]
        %v1760 = vld [vmem:[%s1728 + $0xb8] sm:$0xf]
        %s1761 = scalar_lea.vmem %s1, 192
        %v1762 = vld [vmem:[%s1761] sm:$0xf]
        %v1763 = vld [vmem:[%s1761 + $0x4] sm:$0xf]
        %v1764 = vld [vmem:[%s1761 + $0x8] sm:$0xf]
        %v1765 = vld [vmem:[%s1761 + $0xc] sm:$0xf]
        %v1766 = vld [vmem:[%s1761 + $0x10] sm:$0xf]
        %v1767 = vld [vmem:[%s1761 + $0x14] sm:$0xf]
        %v1768 = vld [vmem:[%s1761 + $0x18] sm:$0xf]
        %v1769 = vld [vmem:[%s1761 + $0x1c] sm:$0xf]
        %v1770 = vld [vmem:[%s1761 + $0x20] sm:$0xf]
        %v1771 = vld [vmem:[%s1761 + $0x24] sm:$0xf]
        %v1772 = vld [vmem:[%s1761 + $0x28] sm:$0xf]
        %v1773 = vld [vmem:[%s1761 + $0x2c] sm:$0xf]
        %v1774 = vld [vmem:[%s1761 + $0x30] sm:$0xf]
        %v1775 = vld [vmem:[%s1761 + $0x34] sm:$0xf]
        %v1776 = vld [vmem:[%s1761 + $0x38] sm:$0xf]
        %v1777 = vld [vmem:[%s1761 + $0x3c] sm:$0xf]
        %v1810 = vunpack.c.l.b16 %v1729
        %v1811 = vunpack.c.l.b16 %v1730
        %v1812 = vunpack.c.l.b16 %v1731
        %v1813 = vunpack.c.l.b16 %v1732
        %v1814 = vunpack.c.l.b16 %v1733
        %v1815 = vunpack.c.l.b16 %v1734
        %v1816 = vunpack.c.l.b16 %v1735
        %v1817 = vunpack.c.l.b16 %v1736
        %v1818 = vunpack.c.l.b16 %v1737
        %v1819 = vunpack.c.l.b16 %v1738
        %v1820 = vunpack.c.l.b16 %v1739
        %v1821 = vunpack.c.l.b16 %v1740
        %v1822 = vunpack.c.l.b16 %v1741
        %v1823 = vunpack.c.l.b16 %v1742
        %v1824 = vunpack.c.l.b16 %v1743
        %v1825 = vunpack.c.l.b16 %v1744
        %v1826 = vunpack.c.l.b16 %v1745
        %v1827 = vunpack.c.l.b16 %v1746
        %v1828 = vunpack.c.l.b16 %v1747
        %v1829 = vunpack.c.l.b16 %v1748
        %v1830 = vunpack.c.l.b16 %v1749
        %v1831 = vunpack.c.l.b16 %v1750
        %v1832 = vunpack.c.l.b16 %v1751
        %v1833 = vunpack.c.l.b16 %v1752
        %v1834 = vunpack.c.l.b16 %v1753
        %v1835 = vunpack.c.l.b16 %v1754
        %v1836 = vunpack.c.l.b16 %v1755
        %v1837 = vunpack.c.l.b16 %v1756
        %v1838 = vunpack.c.l.b16 %v1757
        %v1839 = vunpack.c.l.b16 %v1758
        %v1840 = vunpack.c.l.b16 %v1759
        %v1841 = vunpack.c.l.b16 %v1760
        %v1842 = vpack.c.b16 %v1811, %v1810
        %v1843 = vpack.c.b16 %v1813, %v1812
        %v1844 = vpack.c.b16 %v1815, %v1814
        %v1845 = vpack.c.b16 %v1817, %v1816
        %v1846 = vpack.c.b16 %v1819, %v1818
        %v1847 = vpack.c.b16 %v1821, %v1820
        %v1848 = vpack.c.b16 %v1823, %v1822
        %v1849 = vpack.c.b16 %v1825, %v1824
        %v1850 = vpack.c.b16 %v1827, %v1826
        %v1851 = vpack.c.b16 %v1829, %v1828
        %v1852 = vpack.c.b16 %v1831, %v1830
        %v1853 = vpack.c.b16 %v1833, %v1832
        %v1854 = vpack.c.b16 %v1835, %v1834
        %v1855 = vpack.c.b16 %v1837, %v1836
        %v1856 = vpack.c.b16 %v1839, %v1838
        %v1857 = vpack.c.b16 %v1841, %v1840
        %v1890 = vunpack.c.l.b16 %v1762
        %v1891 = vunpack.c.l.b16 %v1763
        %v1892 = vunpack.c.l.b16 %v1764
        %v1893 = vunpack.c.l.b16 %v1765
        %v1894 = vunpack.c.l.b16 %v1766
        %v1895 = vunpack.c.l.b16 %v1767
        %v1896 = vunpack.c.l.b16 %v1768
        %v1897 = vunpack.c.l.b16 %v1769
        %v1898 = vunpack.c.l.b16 %v1770
        %v1899 = vunpack.c.l.b16 %v1771
        %v1900 = vunpack.c.l.b16 %v1772
        %v1901 = vunpack.c.l.b16 %v1773
        %v1902 = vunpack.c.l.b16 %v1774
        %v1903 = vunpack.c.l.b16 %v1775
        %v1904 = vunpack.c.l.b16 %v1776
        %v1905 = vunpack.c.l.b16 %v1777
        %v1906 = vpack.c.b16 %v1891, %v1890
        %v1907 = vpack.c.b16 %v1893, %v1892
        %v1908 = vpack.c.b16 %v1895, %v1894
        %v1909 = vpack.c.b16 %v1897, %v1896
        %v1910 = vpack.c.b16 %v1899, %v1898
        %v1911 = vpack.c.b16 %v1901, %v1900
        %v1912 = vpack.c.b16 %v1903, %v1902
        %v1913 = vpack.c.b16 %v1905, %v1904
        %1922 = vmatprep.subr.bf16.mxu0 0
        %1923 = vmatpush1.bf16.msra.mxu0 %v1906
        %1924 = vmatprep.subr.bf16.mxu0 0
        %1925 = vmatpush1.bf16.msra.mxu0 %v1907
        %1926 = vmatprep.subr.bf16.mxu0 0
        %1927 = vmatpush1.bf16.msra.mxu0 %v1908
        %1928 = vmatprep.subr.bf16.mxu0 0
        %1929 = vmatpush1.bf16.msra.mxu0 %v1909
        %1930 = vmatprep.subr.bf16.mxu0 0
        %1931 = vmatpush1.bf16.msra.mxu0 %v1910
        %1932 = vmatprep.subr.bf16.mxu0 0
        %1933 = vmatpush1.bf16.msra.mxu0 %v1911
        %1934 = vmatprep.subr.bf16.mxu0 0
        %1935 = vmatpush1.bf16.msra.mxu0 %v1912
        %1936 = vmatprep.subr.bf16.mxu0 0
        %1937 = vmatpush1.bf16.msra.mxu0 %v1913
        %1938 = vmatprep.subr.bf16.mxu0 0
        %1939 = vmatpush1.bf16.msra.mxu0 0
        %1940 = vmatprep.subr.bf16.mxu0 0
        %1941 = vmatpush1.bf16.msra.mxu0 0
        %1942 = vmatprep.subr.bf16.mxu0 0
        %1943 = vmatpush1.bf16.msra.mxu0 0
        %1944 = vmatprep.subr.bf16.mxu0 0
        %1945 = vmatpush1.bf16.msra.mxu0 0
        %1946 = vmatprep.subr.bf16.mxu0 0
        %1947 = vmatpush1.bf16.msra.mxu0 0
        %1948 = vmatprep.subr.bf16.mxu0 0
        %1949 = vmatpush1.bf16.msra.mxu0 0
        %1950 = vmatprep.subr.bf16.mxu0 0
        %1951 = vmatpush1.bf16.msra.mxu0 0
        %1952 = vmatprep.subr.bf16.mxu0 0
        %1953 = vmatpush1.bf16.msra.mxu0 0
        %1954 = vmatprep.mubr.bf16.mxu0 0
        %1955 = vmatmul.mubr.bf16.gmra.mrb[0].mxu0 %v1842
        %v1956 = vpop.f32.mrb[0].mxu0
        %v1957 = vadd.f32 0.0, %v1956
        %v1958 = vpop.f32.mrb[0].mxu0
        %v1959 = vpop.f32.mrb[0].mxu0
        %v1960 = vadd.f32 0.0, %v1959
        %v1961 = vpop.f32.mrb[0].mxu0
        %1962 = vmatprep.mubr.bf16.mxu0 0
        %1963 = vmatmul.mubr.bf16.gmra.mrb[0].mxu0 %v1843
        %v1964 = vpop.f32.mrb[0].mxu0
        %v1965 = vadd.f32 0.0, %v1964
        %v1966 = vpop.f32.mrb[0].mxu0
        %v1967 = vpop.f32.mrb[0].mxu0
        %v1968 = vadd.f32 0.0, %v1967
        %v1969 = vpop.f32.mrb[0].mxu0
        %1970 = vmatprep.mubr.bf16.mxu0 0
        %1971 = vmatmul.mubr.bf16.gmra.mrb[0].mxu0 %v1844
        %v1972 = vpop.f32.mrb[0].mxu0
        %v1973 = vadd.f32 0.0, %v1972
        %v1974 = vpop.f32.mrb[0].mxu0
        %v1975 = vpop.f32.mrb[0].mxu0
        %v1976 = vadd.f32 0.0, %v1975
        %v1977 = vpop.f32.mrb[0].mxu0
        %1978 = vmatprep.mubr.bf16.mxu0 0
        %1979 = vmatmul.mubr.bf16.gmra.mrb[0].mxu0 %v1845
        %v1980 = vpop.f32.mrb[0].mxu0
        %v1981 = vadd.f32 0.0, %v1980
        %v1982 = vpop.f32.mrb[0].mxu0
        %v1983 = vpop.f32.mrb[0].mxu0
        %v1984 = vadd.f32 0.0, %v1983
        %v1985 = vpop.f32.mrb[0].mxu0
        %1986 = vmatprep.mubr.bf16.mxu0 0
        %1987 = vmatmul.mubr.bf16.gmra.mrb[0].mxu0 %v1846
        %v1988 = vpop.f32.mrb[0].mxu0
        %v1989 = vadd.f32 0.0, %v1988
        %v1990 = vpop.f32.mrb[0].mxu0
        %v1991 = vpop.f32.mrb[0].mxu0
        %v1992 = vadd.f32 0.0, %v1991
        %v1993 = vpop.f32.mrb[0].mxu0
        %1994 = vmatprep.mubr.bf16.mxu0 0
        %1995 = vmatmul.mubr.bf16.gmra.mrb[0].mxu0 %v1847
        %v1996 = vpop.f32.mrb[0].mxu0
        %v1997 = vadd.f32 0.0, %v1996
        %v1998 = vpop.f32.mrb[0].mxu0
        %v1999 = vpop.f32.mrb[0].mxu0
        %v2000 = vadd.f32 0.0, %v1999
        %v2001 = vpop.f32.mrb[0].mxu0
        %2002 = vmatprep.mubr.bf16.mxu0 0
        %2003 = vmatmul.mubr.bf16.gmra.mrb[0].mxu0 %v1848
        %v2004 = vpop.f32.mrb[0].mxu0
        %v2005 = vadd.f32 0.0, %v2004
        %v2006 = vpop.f32.mrb[0].mxu0
        %v2007 = vpop.f32.mrb[0].mxu0
        %v2008 = vadd.f32 0.0, %v2007
        %v2009 = vpop.f32.mrb[0].mxu0
        %2010 = vmatprep.mubr.bf16.mxu0 0
        %2011 = vmatmul.mubr.bf16.gmra.mrb[0].mxu0 %v1849
        %v2012 = vpop.f32.mrb[0].mxu0
        %v2013 = vadd.f32 0.0, %v2012
        %v2014 = vpop.f32.mrb[0].mxu0
        %v2015 = vpop.f32.mrb[0].mxu0
        %v2016 = vadd.f32 0.0, %v2015
        %v2017 = vpop.f32.mrb[0].mxu0
        %2018 = vmatprep.mubr.bf16.mxu0 0
        %2019 = vmatmul.mubr.bf16.gmra.mrb[0].mxu0 %v1850
        %v2020 = vpop.f32.mrb[0].mxu0
        %v2021 = vadd.f32 0.0, %v2020
        %v2022 = vpop.f32.mrb[0].mxu0
        %v2023 = vpop.f32.mrb[0].mxu0
        %v2024 = vadd.f32 0.0, %v2023
        %v2025 = vpop.f32.mrb[0].mxu0
        %2026 = vmatprep.mubr.bf16.mxu0 0
        %2027 = vmatmul.mubr.bf16.gmra.mrb[0].mxu0 %v1851
        %v2028 = vpop.f32.mrb[0].mxu0
        %v2029 = vadd.f32 0.0, %v2028
        %v2030 = vpop.f32.mrb[0].mxu0
        %v2031 = vpop.f32.mrb[0].mxu0
        %v2032 = vadd.f32 0.0, %v2031
        %v2033 = vpop.f32.mrb[0].mxu0
        %2034 = vmatprep.mubr.bf16.mxu0 0
        %2035 = vmatmul.mubr.bf16.gmra.mrb[0].mxu0 %v1852
        %v2036 = vpop.f32.mrb[0].mxu0
        %v2037 = vadd.f32 0.0, %v2036
        %v2038 = vpop.f32.mrb[0].mxu0
        %v2039 = vpop.f32.mrb[0].mxu0
        %v2040 = vadd.f32 0.0, %v2039
        %v2041 = vpop.f32.mrb[0].mxu0
        %2042 = vmatprep.mubr.bf16.mxu0 0
        %2043 = vmatmul.mubr.bf16.gmra.mrb[0].mxu0 %v1853
        %v2044 = vpop.f32.mrb[0].mxu0
        %v2045 = vadd.f32 0.0, %v2044
        %v2046 = vpop.f32.mrb[0].mxu0
        %v2047 = vpop.f32.mrb[0].mxu0
        %v2048 = vadd.f32 0.0, %v2047
        %v2049 = vpop.f32.mrb[0].mxu0
        %2050 = vmatprep.mubr.bf16.mxu0 0
        %2051 = vmatmul.mubr.bf16.gmra.mrb[0].mxu0 %v1854
        %v2052 = vpop.f32.mrb[0].mxu0
        %v2053 = vadd.f32 0.0, %v2052
        %v2054 = vpop.f32.mrb[0].mxu0
        %v2055 = vpop.f32.mrb[0].mxu0
        %v2056 = vadd.f32 0.0, %v2055
        %v2057 = vpop.f32.mrb[0].mxu0
        %2058 = vmatprep.mubr.bf16.mxu0 0
        %2059 = vmatmul.mubr.bf16.gmra.mrb[0].mxu0 %v1855
        %v2060 = vpop.f32.mrb[0].mxu0
        %v2061 = vadd.f32 0.0, %v2060
        %v2062 = vpop.f32.mrb[0].mxu0
        %v2063 = vpop.f32.mrb[0].mxu0
        %v2064 = vadd.f32 0.0, %v2063
        %v2065 = vpop.f32.mrb[0].mxu0
        %2066 = vmatprep.mubr.bf16.mxu0 0
        %2067 = vmatmul.mubr.bf16.gmra.mrb[0].mxu0 %v1856
        %v2068 = vpop.f32.mrb[0].mxu0
        %v2069 = vadd.f32 0.0, %v2068
        %v2070 = vpop.f32.mrb[0].mxu0
        %v2071 = vpop.f32.mrb[0].mxu0
        %v2072 = vadd.f32 0.0, %v2071
        %v2073 = vpop.f32.mrb[0].mxu0
        %2074 = vmatprep.mubr.bf16.mxu0 0
        %2075 = vmatmul.mubr.bf16.gmra.mrb[0].mxu0 %v1857
        %v2076 = vpop.f32.mrb[0].mxu0
        %v2077 = vadd.f32 0.0, %v2076
        %v2078 = vpop.f32.mrb[0].mxu0
        %v2079 = vpop.f32.mrb[0].mxu0
        %v2080 = vadd.f32 0.0, %v2079
        %v2081 = vpop.f32.mrb[0].mxu0
        %2082 = vdwg.mxu0
        %v2083 = vadd.f32 %v1696, %v1957
        %v2084 = vadd.f32 %v1697, %v1960
        %v2085 = vadd.f32 %v1698, %v1965
        %v2086 = vadd.f32 %v1699, %v1968
        %v2087 = vadd.f32 %v1700, %v1973
        %v2088 = vadd.f32 %v1701, %v1976
        %v2089 = vadd.f32 %v1702, %v1981
        %v2090 = vadd.f32 %v1703, %v1984
        %v2091 = vadd.f32 %v1704, %v1989
        %v2092 = vadd.f32 %v1705, %v1992
        %v2093 = vadd.f32 %v1706, %v1997
        %v2094 = vadd.f32 %v1707, %v2000
        %v2095 = vadd.f32 %v1708, %v2005
        %v2096 = vadd.f32 %v1709, %v2008
        %v2097 = vadd.f32 %v1710, %v2013
        %v2098 = vadd.f32 %v1711, %v2016
        %v2099 = vadd.f32 %v1712, %v2021
        %v2100 = vadd.f32 %v1713, %v2024
        %v2101 = vadd.f32 %v1714, %v2029
        %v2102 = vadd.f32 %v1715, %v2032
        %v2103 = vadd.f32 %v1716, %v2037
        %v2104 = vadd.f32 %v1717, %v2040
        %v2105 = vadd.f32 %v1718, %v2045
        %v2106 = vadd.f32 %v1719, %v2048
        %v2107 = vadd.f32 %v1720, %v2053
        %v2108 = vadd.f32 %v1721, %v2056
        %v2109 = vadd.f32 %v1722, %v2061
        %v2110 = vadd.f32 %v1723, %v2064
        %v2111 = vadd.f32 %v1724, %v2069
        %v2112 = vadd.f32 %v1725, %v2072
        %v2113 = vadd.f32 %v1726, %v2077
        %v2114 = vadd.f32 %v1727, %v2080
        %v2115 = vld [vmem:[%s1728] sm:$0xf]
        %v2116 = vld [vmem:[%s1728 + $0x4] sm:$0xf]
        %v2117 = vld [vmem:[%s1728 + $0x8] sm:$0x1]
        %v2118 = vld [vmem:[%s1728 + $0xc] sm:$0xf]
        %v2119 = vld [vmem:[%s1728 + $0x10] sm:$0xf]
        %v2120 = vld [vmem:[%s1728 + $0x14] sm:$0x1]
        %v2121 = vld [vmem:[%s1728 + $0x18] sm:$0xf]
        %v2122 = vld [vmem:[%s1728 + $0x1c] sm:$0xf]
        %v2123 = vld [vmem:[%s1728 + $0x20] sm:$0x1]
        %v2124 = vld [vmem:[%s1728 + $0x24] sm:$0xf]
        %v2125 = vld [vmem:[%s1728 + $0x28] sm:$0xf]
        %v2126 = vld [vmem:[%s1728 + $0x2c] sm:$0x1]
        %v2127 = vld [vmem:[%s1728 + $0x30] sm:$0xf]
        %v2128 = vld [vmem:[%s1728 + $0x34] sm:$0xf]
        %v2129 = vld [vmem:[%s1728 + $0x38] sm:$0x1]
        %v2130 = vld [vmem:[%s1728 + $0x3c] sm:$0xf]
        %v2131 = vld [vmem:[%s1728 + $0x40] sm:$0xf]
        %v2132 = vld [vmem:[%s1728 + $0x44] sm:$0x1]
        %v2133 = vld [vmem:[%s1728 + $0x48] sm:$0xf]
        %v2134 = vld [vmem:[%s1728 + $0x4c] sm:$0xf]
        %v2135 = vld [vmem:[%s1728 + $0x50] sm:$0x1]
        %v2136 = vld [vmem:[%s1728 + $0x54] sm:$0xf]
        %v2137 = vld [vmem:[%s1728 + $0x58] sm:$0xf]
        %v2138 = vld [vmem:[%s1728 + $0x5c] sm:$0x1]
        %v2139 = vld [vmem:[%s1728 + $0x60] sm:$0xf]
        %v2140 = vld [vmem:[%s1728 + $0x64] sm:$0xf]
        %v2141 = vld [vmem:[%s1728 + $0x68] sm:$0x1]
        %v2142 = vld [vmem:[%s1728 + $0x6c] sm:$0xf]
        %v2143 = vld [vmem:[%s1728 + $0x70] sm:$0xf]
        %v2144 = vld [vmem:[%s1728 + $0x74] sm:$0x1]
        %v2145 = vld [vmem:[%s1728 + $0x78] sm:$0xf]
        %v2146 = vld [vmem:[%s1728 + $0x7c] sm:$0xf]
        %v2147 = vld [vmem:[%s1728 + $0x80] sm:$0x1]
        %v2148 = vld [vmem:[%s1728 + $0x84] sm:$0xf]
        %v2149 = vld [vmem:[%s1728 + $0x88] sm:$0xf]
        %v2150 = vld [vmem:[%s1728 + $0x8c] sm:$0x1]
        %v2151 = vld [vmem:[%s1728 + $0x90] sm:$0xf]
        %v2152 = vld [vmem:[%s1728 + $0x94] sm:$0xf]
        %v2153 = vld [vmem:[%s1728 + $0x98] sm:$0x1]
        %v2154 = vld [vmem:[%s1728 + $0x9c] sm:$0xf]
        %v2155 = vld [vmem:[%s1728 + $0xa0] sm:$0xf]
        %v2156 = vld [vmem:[%s1728 + $0xa4] sm:$0x1]
        %v2157 = vld [vmem:[%s1728 + $0xa8] sm:$0xf]
        %v2158 = vld [vmem:[%s1728 + $0xac] sm:$0xf]
        %v2159 = vld [vmem:[%s1728 + $0xb0] sm:$0x1]
        %v2160 = vld [vmem:[%s1728 + $0xb4] sm:$0xf]
        %v2161 = vld [vmem:[%s1728 + $0xb8] sm:$0xf]
        %v2162 = vld [vmem:[%s1728 + $0xbc] sm:$0x1]
        %v2164 = vshrl.u32 %v2115, 16
        %v2166 = vrot.slane %v2164, 4
        %v2167 = vshll.u32 %v2115, 16
        %v2169 = vrot.slane %v2167, 5
        %v2170 = vor.u32 %v2166, %v2169
        %v2171 = vrot.slane %v2170, 4
        %v2173 = vshll.u32 %v2116, 16
        %v2175 = vrot.slane %v2173, 5
        %v2176 = vsel %vm263, %v2171, %v2175
        %v2177 = vshrl.u32 %v2116, 16
        %v2179 = vrot.slane %v2177, 4
        %v2180 = vor.u32 %v2179, %v2175
        %v2181 = vrot.slane %v2180, 4
        %v2183 = vshll.u32 %v2117, 16
        %v2185 = vrot.slane %v2183, 5
        %v2186 = vsel %vm263, %v2181, %v2185
        %v2188 = vshrl.u32 %v2118, 16
        %v2190 = vrot.slane %v2188, 4
        %v2191 = vshll.u32 %v2118, 16
        %v2193 = vrot.slane %v2191, 5
        %v2194 = vor.u32 %v2190, %v2193
        %v2195 = vrot.slane %v2194, 4
        %v2197 = vshll.u32 %v2119, 16
        %v2199 = vrot.slane %v2197, 5
        %v2200 = vsel %vm263, %v2195, %v2199
        %v2201 = vshrl.u32 %v2119, 16
        %v2203 = vrot.slane %v2201, 4
        %v2204 = vor.u32 %v2203, %v2199
        %v2205 = vrot.slane %v2204, 4
        %v2207 = vshll.u32 %v2120, 16
        %v2209 = vrot.slane %v2207, 5
        %v2210 = vsel %vm263, %v2205, %v2209
        %v2212 = vshrl.u32 %v2121, 16
        %v2214 = vrot.slane %v2212, 4
        %v2215 = vshll.u32 %v2121, 16
        %v2217 = vrot.slane %v2215, 5
        %v2218 = vor.u32 %v2214, %v2217
        %v2219 = vrot.slane %v2218, 4
        %v2221 = vshll.u32 %v2122, 16
        %v2223 = vrot.slane %v2221, 5
        %v2224 = vsel %vm263, %v2219, %v2223
        %v2225 = vshrl.u32 %v2122, 16
        %v2227 = vrot.slane %v2225, 4
        %v2228 = vor.u32 %v2227, %v2223
        %v2229 = vrot.slane %v2228, 4
        %v2231 = vshll.u32 %v2123, 16
        %v2233 = vrot.slane %v2231, 5
        %v2234 = vsel %vm263, %v2229, %v2233
        %v2236 = vshrl.u32 %v2124, 16
        %v2238 = vrot.slane %v2236, 4
        %v2239 = vshll.u32 %v2124, 16
        %v2241 = vrot.slane %v2239, 5
        %v2242 = vor.u32 %v2238, %v2241
        %v2243 = vrot.slane %v2242, 4
        %v2245 = vshll.u32 %v2125, 16
        %v2247 = vrot.slane %v2245, 5
        %v2248 = vsel %vm263, %v2243, %v2247
        %v2249 = vshrl.u32 %v2125, 16
        %v2251 = vrot.slane %v2249, 4
        %v2252 = vor.u32 %v2251, %v2247
        %v2253 = vrot.slane %v2252, 4
        %v2255 = vshll.u32 %v2126, 16
        %v2257 = vrot.slane %v2255, 5
        %v2258 = vsel %vm263, %v2253, %v2257
        %v2260 = vshrl.u32 %v2127, 16
        %v2262 = vrot.slane %v2260, 4
        %v2263 = vshll.u32 %v2127, 16
        %v2265 = vrot.slane %v2263, 5
        %v2266 = vor.u32 %v2262, %v2265
        %v2267 = vrot.slane %v2266, 4
        %v2269 = vshll.u32 %v2128, 16
        %v2271 = vrot.slane %v2269, 5
        %v2272 = vsel %vm263, %v2267, %v2271
        %v2273 = vshrl.u32 %v2128, 16
        %v2275 = vrot.slane %v2273, 4
        %v2276 = vor.u32 %v2275, %v2271
        %v2277 = vrot.slane %v2276, 4
        %v2279 = vshll.u32 %v2129, 16
        %v2281 = vrot.slane %v2279, 5
        %v2282 = vsel %vm263, %v2277, %v2281
        %v2284 = vshrl.u32 %v2130, 16
        %v2286 = vrot.slane %v2284, 4
        %v2287 = vshll.u32 %v2130, 16
        %v2289 = vrot.slane %v2287, 5
        %v2290 = vor.u32 %v2286, %v2289
        %v2291 = vrot.slane %v2290, 4
        %v2293 = vshll.u32 %v2131, 16
        %v2295 = vrot.slane %v2293, 5
        %v2296 = vsel %vm263, %v2291, %v2295
        %v2297 = vshrl.u32 %v2131, 16
        %v2299 = vrot.slane %v2297, 4
        %v2300 = vor.u32 %v2299, %v2295
        %v2301 = vrot.slane %v2300, 4
        %v2303 = vshll.u32 %v2132, 16
        %v2305 = vrot.slane %v2303, 5
        %v2306 = vsel %vm263, %v2301, %v2305
        %v2308 = vshrl.u32 %v2133, 16
        %v2310 = vrot.slane %v2308, 4
        %v2311 = vshll.u32 %v2133, 16
        %v2313 = vrot.slane %v2311, 5
        %v2314 = vor.u32 %v2310, %v2313
        %v2315 = vrot.slane %v2314, 4
        %v2317 = vshll.u32 %v2134, 16
        %v2319 = vrot.slane %v2317, 5
        %v2320 = vsel %vm263, %v2315, %v2319
        %v2321 = vshrl.u32 %v2134, 16
        %v2323 = vrot.slane %v2321, 4
        %v2324 = vor.u32 %v2323, %v2319
        %v2325 = vrot.slane %v2324, 4
        %v2327 = vshll.u32 %v2135, 16
        %v2329 = vrot.slane %v2327, 5
        %v2330 = vsel %vm263, %v2325, %v2329
        %v2332 = vshrl.u32 %v2136, 16
        %v2334 = vrot.slane %v2332, 4
        %v2335 = vshll.u32 %v2136, 16
        %v2337 = vrot.slane %v2335, 5
        %v2338 = vor.u32 %v2334, %v2337
        %v2339 = vrot.slane %v2338, 4
        %v2341 = vshll.u32 %v2137, 16
        %v2343 = vrot.slane %v2341, 5
        %v2344 = vsel %vm263, %v2339, %v2343
        %v2345 = vshrl.u32 %v2137, 16
        %v2347 = vrot.slane %v2345, 4
        %v2348 = vor.u32 %v2347, %v2343
        %v2349 = vrot.slane %v2348, 4
        %v2351 = vshll.u32 %v2138, 16
        %v2353 = vrot.slane %v2351, 5
        %v2354 = vsel %vm263, %v2349, %v2353
        %v2356 = vshrl.u32 %v2139, 16
        %v2358 = vrot.slane %v2356, 4
        %v2359 = vshll.u32 %v2139, 16
        %v2361 = vrot.slane %v2359, 5
        %v2362 = vor.u32 %v2358, %v2361
        %v2363 = vrot.slane %v2362, 4
        %v2365 = vshll.u32 %v2140, 16
        %v2367 = vrot.slane %v2365, 5
        %v2368 = vsel %vm263, %v2363, %v2367
        %v2369 = vshrl.u32 %v2140, 16
        %v2371 = vrot.slane %v2369, 4
        %v2372 = vor.u32 %v2371, %v2367
        %v2373 = vrot.slane %v2372, 4
        %v2375 = vshll.u32 %v2141, 16
        %v2377 = vrot.slane %v2375, 5
        %v2378 = vsel %vm263, %v2373, %v2377
        %v2380 = vshrl.u32 %v2142, 16
        %v2382 = vrot.slane %v2380, 4
        %v2383 = vshll.u32 %v2142, 16
        %v2385 = vrot.slane %v2383, 5
        %v2386 = vor.u32 %v2382, %v2385
        %v2387 = vrot.slane %v2386, 4
        %v2389 = vshll.u32 %v2143, 16
        %v2391 = vrot.slane %v2389, 5
        %v2392 = vsel %vm263, %v2387, %v2391
        %v2393 = vshrl.u32 %v2143, 16
        %v2395 = vrot.slane %v2393, 4
        %v2396 = vor.u32 %v2395, %v2391
        %v2397 = vrot.slane %v2396, 4
        %v2399 = vshll.u32 %v2144, 16
        %v2401 = vrot.slane %v2399, 5
        %v2402 = vsel %vm263, %v2397, %v2401
        %v2404 = vshrl.u32 %v2145, 16
        %v2406 = vrot.slane %v2404, 4
        %v2407 = vshll.u32 %v2145, 16
        %v2409 = vrot.slane %v2407, 5
        %v2410 = vor.u32 %v2406, %v2409
        %v2411 = vrot.slane %v2410, 4
        %v2413 = vshll.u32 %v2146, 16
        %v2415 = vrot.slane %v2413, 5
        %v2416 = vsel %vm263, %v2411, %v2415
        %v2417 = vshrl.u32 %v2146, 16
        %v2419 = vrot.slane %v2417, 4
        %v2420 = vor.u32 %v2419, %v2415
        %v2421 = vrot.slane %v2420, 4
        %v2423 = vshll.u32 %v2147, 16
        %v2425 = vrot.slane %v2423, 5
        %v2426 = vsel %vm263, %v2421, %v2425
        %v2428 = vshrl.u32 %v2148, 16
        %v2430 = vrot.slane %v2428, 4
        %v2431 = vshll.u32 %v2148, 16
        %v2433 = vrot.slane %v2431, 5
        %v2434 = vor.u32 %v2430, %v2433
        %v2435 = vrot.slane %v2434, 4
        %v2437 = vshll.u32 %v2149, 16
        %v2439 = vrot.slane %v2437, 5
        %v2440 = vsel %vm263, %v2435, %v2439
        %v2441 = vshrl.u32 %v2149, 16
        %v2443 = vrot.slane %v2441, 4
        %v2444 = vor.u32 %v2443, %v2439
        %v2445 = vrot.slane %v2444, 4
        %v2447 = vshll.u32 %v2150, 16
        %v2449 = vrot.slane %v2447, 5
        %v2450 = vsel %vm263, %v2445, %v2449
        %v2452 = vshrl.u32 %v2151, 16
        %v2454 = vrot.slane %v2452, 4
        %v2455 = vshll.u32 %v2151, 16
        %v2457 = vrot.slane %v2455, 5
        %v2458 = vor.u32 %v2454, %v2457
        %v2459 = vrot.slane %v2458, 4
        %v2461 = vshll.u32 %v2152, 16
        %v2463 = vrot.slane %v2461, 5
        %v2464 = vsel %vm263, %v2459, %v2463
        %v2465 = vshrl.u32 %v2152, 16
        %v2467 = vrot.slane %v2465, 4
        %v2468 = vor.u32 %v2467, %v2463
        %v2469 = vrot.slane %v2468, 4
        %v2471 = vshll.u32 %v2153, 16
        %v2473 = vrot.slane %v2471, 5
        %v2474 = vsel %vm263, %v2469, %v2473
        %v2476 = vshrl.u32 %v2154, 16
        %v2478 = vrot.slane %v2476, 4
        %v2479 = vshll.u32 %v2154, 16
        %v2481 = vrot.slane %v2479, 5
        %v2482 = vor.u32 %v2478, %v2481
        %v2483 = vrot.slane %v2482, 4
        %v2485 = vshll.u32 %v2155, 16
        %v2487 = vrot.slane %v2485, 5
        %v2488 = vsel %vm263, %v2483, %v2487
        %v2489 = vshrl.u32 %v2155, 16
        %v2491 = vrot.slane %v2489, 4
        %v2492 = vor.u32 %v2491, %v2487
        %v2493 = vrot.slane %v2492, 4
        %v2495 = vshll.u32 %v2156, 16
        %v2497 = vrot.slane %v2495, 5
        %v2498 = vsel %vm263, %v2493, %v2497
        %v2500 = vshrl.u32 %v2157, 16
        %v2502 = vrot.slane %v2500, 4
        %v2503 = vshll.u32 %v2157, 16
        %v2505 = vrot.slane %v2503, 5
        %v2506 = vor.u32 %v2502, %v2505
        %v2507 = vrot.slane %v2506, 4
        %v2509 = vshll.u32 %v2158, 16
        %v2511 = vrot.slane %v2509, 5
        %v2512 = vsel %vm263, %v2507, %v2511
        %v2513 = vshrl.u32 %v2158, 16
        %v2515 = vrot.slane %v2513, 4
        %v2516 = vor.u32 %v2515, %v2511
        %v2517 = vrot.slane %v2516, 4
        %v2519 = vshll.u32 %v2159, 16
        %v2521 = vrot.slane %v2519, 5
        %v2522 = vsel %vm263, %v2517, %v2521
        %v2524 = vshrl.u32 %v2160, 16
        %v2526 = vrot.slane %v2524, 4
        %v2527 = vshll.u32 %v2160, 16
        %v2529 = vrot.slane %v2527, 5
        %v2530 = vor.u32 %v2526, %v2529
        %v2531 = vrot.slane %v2530, 4
        %v2533 = vshll.u32 %v2161, 16
        %v2535 = vrot.slane %v2533, 5
        %v2536 = vsel %vm263, %v2531, %v2535
        %v2537 = vshrl.u32 %v2161, 16
        %v2539 = vrot.slane %v2537, 4
        %v2540 = vor.u32 %v2539, %v2535
        %v2541 = vrot.slane %v2540, 4
        %v2543 = vshll.u32 %v2162, 16
        %v2545 = vrot.slane %v2543, 5
        %v2546 = vsel %vm263, %v2541, %v2545
        %s2547 = scalar_lea.vmem %s1, 256
        %v2548 = vld [vmem:[%s2547] sm:$0xf]
        %v2549 = vld [vmem:[%s2547 + $0x4] sm:$0xf]
        %v2550 = vld [vmem:[%s2547 + $0x8] sm:$0xf]
        %v2551 = vld [vmem:[%s2547 + $0xc] sm:$0xf]
        %v2552 = vld [vmem:[%s2547 + $0x10] sm:$0xf]
        %v2553 = vld [vmem:[%s2547 + $0x14] sm:$0xf]
        %v2554 = vld [vmem:[%s2547 + $0x18] sm:$0xf]
        %v2555 = vld [vmem:[%s2547 + $0x1c] sm:$0xf]
        %v2556 = vld [vmem:[%s2547 + $0x20] sm:$0xf]
        %v2557 = vld [vmem:[%s2547 + $0x24] sm:$0xf]
        %v2558 = vld [vmem:[%s2547 + $0x28] sm:$0xf]
        %v2559 = vld [vmem:[%s2547 + $0x2c] sm:$0xf]
        %v2560 = vld [vmem:[%s2547 + $0x30] sm:$0xf]
        %v2561 = vld [vmem:[%s2547 + $0x34] sm:$0xf]
        %v2562 = vld [vmem:[%s2547 + $0x38] sm:$0xf]
        %v2563 = vld [vmem:[%s2547 + $0x3c] sm:$0xf]
        %v2564 = vunpack.c.l.b16 %v2176
        %v2565 = vunpack.c.l.b16 %v2186
        %v2566 = vunpack.c.l.b16 %v2200
        %v2567 = vunpack.c.l.b16 %v2210
        %v2568 = vunpack.c.l.b16 %v2224
        %v2569 = vunpack.c.l.b16 %v2234
        %v2570 = vunpack.c.l.b16 %v2248
        %v2571 = vunpack.c.l.b16 %v2258
        %v2572 = vunpack.c.l.b16 %v2272
        %v2573 = vunpack.c.l.b16 %v2282
        %v2574 = vunpack.c.l.b16 %v2296
        %v2575 = vunpack.c.l.b16 %v2306
        %v2576 = vunpack.c.l.b16 %v2320
        %v2577 = vunpack.c.l.b16 %v2330
        %v2578 = vunpack.c.l.b16 %v2344
        %v2579 = vunpack.c.l.b16 %v2354
        %v2580 = vunpack.c.l.b16 %v2368
        %v2581 = vunpack.c.l.b16 %v2378
        %v2582 = vunpack.c.l.b16 %v2392
        %v2583 = vunpack.c.l.b16 %v2402
        %v2584 = vunpack.c.l.b16 %v2416
        %v2585 = vunpack.c.l.b16 %v2426
        %v2586 = vunpack.c.l.b16 %v2440
        %v2587 = vunpack.c.l.b16 %v2450
        %v2588 = vunpack.c.l.b16 %v2464
        %v2589 = vunpack.c.l.b16 %v2474
        %v2590 = vunpack.c.l.b16 %v2488
        %v2591 = vunpack.c.l.b16 %v2498
        %v2592 = vunpack.c.l.b16 %v2512
        %v2593 = vunpack.c.l.b16 %v2522
        %v2594 = vunpack.c.l.b16 %v2536
        %v2595 = vunpack.c.l.b16 %v2546
        %v2596 = vpack.c.b16 %v2565, %v2564
        %v2597 = vpack.c.b16 %v2567, %v2566
        %v2598 = vpack.c.b16 %v2569, %v2568
        %v2599 = vpack.c.b16 %v2571, %v2570
        %v2600 = vpack.c.b16 %v2573, %v2572
        %v2601 = vpack.c.b16 %v2575, %v2574
        %v2602 = vpack.c.b16 %v2577, %v2576
        %v2603 = vpack.c.b16 %v2579, %v2578
        %v2604 = vpack.c.b16 %v2581, %v2580
        %v2605 = vpack.c.b16 %v2583, %v2582
        %v2606 = vpack.c.b16 %v2585, %v2584
        %v2607 = vpack.c.b16 %v2587, %v2586
        %v2608 = vpack.c.b16 %v2589, %v2588
        %v2609 = vpack.c.b16 %v2591, %v2590
        %v2610 = vpack.c.b16 %v2593, %v2592
        %v2611 = vpack.c.b16 %v2595, %v2594
        %v2644 = vunpack.c.l.b16 %v2548
        %v2645 = vunpack.c.l.b16 %v2549
        %v2646 = vunpack.c.l.b16 %v2550
        %v2647 = vunpack.c.l.b16 %v2551
        %v2648 = vunpack.c.l.b16 %v2552
        %v2649 = vunpack.c.l.b16 %v2553
        %v2650 = vunpack.c.l.b16 %v2554
        %v2651 = vunpack.c.l.b16 %v2555
        %v2652 = vunpack.c.l.b16 %v2556
        %v2653 = vunpack.c.l.b16 %v2557
        %v2654 = vunpack.c.l.b16 %v2558
        %v2655 = vunpack.c.l.b16 %v2559
        %v2656 = vunpack.c.l.b16 %v2560
        %v2657 = vunpack.c.l.b16 %v2561
        %v2658 = vunpack.c.l.b16 %v2562
        %v2659 = vunpack.c.l.b16 %v2563
        %v2660 = vpack.c.b16 %v2645, %v2644
        %v2661 = vpack.c.b16 %v2647, %v2646
        %v2662 = vpack.c.b16 %v2649, %v2648
        %v2663 = vpack.c.b16 %v2651, %v2650
        %v2664 = vpack.c.b16 %v2653, %v2652
        %v2665 = vpack.c.b16 %v2655, %v2654
        %v2666 = vpack.c.b16 %v2657, %v2656
        %v2667 = vpack.c.b16 %v2659, %v2658
        %2676 = vmatprep.subr.bf16.mxu0 0
        %2677 = vmatpush1.bf16.msra.mxu0 %v2660
        %2678 = vmatprep.subr.bf16.mxu0 0
        %2679 = vmatpush1.bf16.msra.mxu0 %v2661
        %2680 = vmatprep.subr.bf16.mxu0 0
        %2681 = vmatpush1.bf16.msra.mxu0 %v2662
        %2682 = vmatprep.subr.bf16.mxu0 0
        %2683 = vmatpush1.bf16.msra.mxu0 %v2663
        %2684 = vmatprep.subr.bf16.mxu0 0
        %2685 = vmatpush1.bf16.msra.mxu0 %v2664
        %2686 = vmatprep.subr.bf16.mxu0 0
        %2687 = vmatpush1.bf16.msra.mxu0 %v2665
        %2688 = vmatprep.subr.bf16.mxu0 0
        %2689 = vmatpush1.bf16.msra.mxu0 %v2666
        %2690 = vmatprep.subr.bf16.mxu0 0
        %2691 = vmatpush1.bf16.msra.mxu0 %v2667
        %2692 = vmatprep.subr.bf16.mxu0 0
        %2693 = vmatpush1.bf16.msra.mxu0 0
        %2694 = vmatprep.subr.bf16.mxu0 0
        %2695 = vmatpush1.bf16.msra.mxu0 0
        %2696 = vmatprep.subr.bf16.mxu0 0
        %2697 = vmatpush1.bf16.msra.mxu0 0
        %2698 = vmatprep.subr.bf16.mxu0 0
        %2699 = vmatpush1.bf16.msra.mxu0 0
        %2700 = vmatprep.subr.bf16.mxu0 0
        %2701 = vmatpush1.bf16.msra.mxu0 0
        %2702 = vmatprep.subr.bf16.mxu0 0
        %2703 = vmatpush1.bf16.msra.mxu0 0
        %2704 = vmatprep.subr.bf16.mxu0 0
        %2705 = vmatpush1.bf16.msra.mxu0 0
        %2706 = vmatprep.subr.bf16.mxu0 0
        %2707 = vmatpush1.bf16.msra.mxu0 0
        %2708 = vmatprep.mubr.bf16.mxu0 0
        %2709 = vmatmul.mubr.bf16.gmra.mrb[0].mxu0 %v2596
        %v2710 = vpop.f32.mrb[0].mxu0
        %v2711 = vadd.f32 0.0, %v2710
        %v2712 = vpop.f32.mrb[0].mxu0
        %v2713 = vpop.f32.mrb[0].mxu0
        %v2714 = vadd.f32 0.0, %v2713
        %v2715 = vpop.f32.mrb[0].mxu0
        %2716 = vmatprep.mubr.bf16.mxu0 0
        %2717 = vmatmul.mubr.bf16.gmra.mrb[0].mxu0 %v2597
        %v2718 = vpop.f32.mrb[0].mxu0
        %v2719 = vadd.f32 0.0, %v2718
        %v2720 = vpop.f32.mrb[0].mxu0
        %v2721 = vpop.f32.mrb[0].mxu0
        %v2722 = vadd.f32 0.0, %v2721
        %v2723 = vpop.f32.mrb[0].mxu0
        %2724 = vmatprep.mubr.bf16.mxu0 0
        %2725 = vmatmul.mubr.bf16.gmra.mrb[0].mxu0 %v2598
        %v2726 = vpop.f32.mrb[0].mxu0
        %v2727 = vadd.f32 0.0, %v2726
        %v2728 = vpop.f32.mrb[0].mxu0
        %v2729 = vpop.f32.mrb[0].mxu0
        %v2730 = vadd.f32 0.0, %v2729
        %v2731 = vpop.f32.mrb[0].mxu0
        %2732 = vmatprep.mubr.bf16.mxu0 0
        %2733 = vmatmul.mubr.bf16.gmra.mrb[0].mxu0 %v2599
        %v2734 = vpop.f32.mrb[0].mxu0
        %v2735 = vadd.f32 0.0, %v2734
        %v2736 = vpop.f32.mrb[0].mxu0
        %v2737 = vpop.f32.mrb[0].mxu0
        %v2738 = vadd.f32 0.0, %v2737
        %v2739 = vpop.f32.mrb[0].mxu0
        %2740 = vmatprep.mubr.bf16.mxu0 0
        %2741 = vmatmul.mubr.bf16.gmra.mrb[0].mxu0 %v2600
        %v2742 = vpop.f32.mrb[0].mxu0
        %v2743 = vadd.f32 0.0, %v2742
        %v2744 = vpop.f32.mrb[0].mxu0
        %v2745 = vpop.f32.mrb[0].mxu0
        %v2746 = vadd.f32 0.0, %v2745
        %v2747 = vpop.f32.mrb[0].mxu0
        %2748 = vmatprep.mubr.bf16.mxu0 0
        %2749 = vmatmul.mubr.bf16.gmra.mrb[0].mxu0 %v2601
        %v2750 = vpop.f32.mrb[0].mxu0
        %v2751 = vadd.f32 0.0, %v2750
        %v2752 = vpop.f32.mrb[0].mxu0
        %v2753 = vpop.f32.mrb[0].mxu0
        %v2754 = vadd.f32 0.0, %v2753
        %v2755 = vpop.f32.mrb[0].mxu0
        %2756 = vmatprep.mubr.bf16.mxu0 0
        %2757 = vmatmul.mubr.bf16.gmra.mrb[0].mxu0 %v2602
        %v2758 = vpop.f32.mrb[0].mxu0
        %v2759 = vadd.f32 0.0, %v2758
        %v2760 = vpop.f32.mrb[0].mxu0
        %v2761 = vpop.f32.mrb[0].mxu0
        %v2762 = vadd.f32 0.0, %v2761
        %v2763 = vpop.f32.mrb[0].mxu0
        %2764 = vmatprep.mubr.bf16.mxu0 0
        %2765 = vmatmul.mubr.bf16.gmra.mrb[0].mxu0 %v2603
        %v2766 = vpop.f32.mrb[0].mxu0
        %v2767 = vadd.f32 0.0, %v2766
        %v2768 = vpop.f32.mrb[0].mxu0
        %v2769 = vpop.f32.mrb[0].mxu0
        %v2770 = vadd.f32 0.0, %v2769
        %v2771 = vpop.f32.mrb[0].mxu0
        %2772 = vmatprep.mubr.bf16.mxu0 0
        %2773 = vmatmul.mubr.bf16.gmra.mrb[0].mxu0 %v2604
        %v2774 = vpop.f32.mrb[0].mxu0
        %v2775 = vadd.f32 0.0, %v2774
        %v2776 = vpop.f32.mrb[0].mxu0
        %v2777 = vpop.f32.mrb[0].mxu0
        %v2778 = vadd.f32 0.0, %v2777
        %v2779 = vpop.f32.mrb[0].mxu0
        %2780 = vmatprep.mubr.bf16.mxu0 0
        %2781 = vmatmul.mubr.bf16.gmra.mrb[0].mxu0 %v2605
        %v2782 = vpop.f32.mrb[0].mxu0
        %v2783 = vadd.f32 0.0, %v2782
        %v2784 = vpop.f32.mrb[0].mxu0
        %v2785 = vpop.f32.mrb[0].mxu0
        %v2786 = vadd.f32 0.0, %v2785
        %v2787 = vpop.f32.mrb[0].mxu0
        %2788 = vmatprep.mubr.bf16.mxu0 0
        %2789 = vmatmul.mubr.bf16.gmra.mrb[0].mxu0 %v2606
        %v2790 = vpop.f32.mrb[0].mxu0
        %v2791 = vadd.f32 0.0, %v2790
        %v2792 = vpop.f32.mrb[0].mxu0
        %v2793 = vpop.f32.mrb[0].mxu0
        %v2794 = vadd.f32 0.0, %v2793
        %v2795 = vpop.f32.mrb[0].mxu0
        %2796 = vmatprep.mubr.bf16.mxu0 0
        %2797 = vmatmul.mubr.bf16.gmra.mrb[0].mxu0 %v2607
        %v2798 = vpop.f32.mrb[0].mxu0
        %v2799 = vadd.f32 0.0, %v2798
        %v2800 = vpop.f32.mrb[0].mxu0
        %v2801 = vpop.f32.mrb[0].mxu0
        %v2802 = vadd.f32 0.0, %v2801
        %v2803 = vpop.f32.mrb[0].mxu0
        %2804 = vmatprep.mubr.bf16.mxu0 0
        %2805 = vmatmul.mubr.bf16.gmra.mrb[0].mxu0 %v2608
        %v2806 = vpop.f32.mrb[0].mxu0
        %v2807 = vadd.f32 0.0, %v2806
        %v2808 = vpop.f32.mrb[0].mxu0
        %v2809 = vpop.f32.mrb[0].mxu0
        %v2810 = vadd.f32 0.0, %v2809
        %v2811 = vpop.f32.mrb[0].mxu0
        %2812 = vmatprep.mubr.bf16.mxu0 0
        %2813 = vmatmul.mubr.bf16.gmra.mrb[0].mxu0 %v2609
        %v2814 = vpop.f32.mrb[0].mxu0
        %v2815 = vadd.f32 0.0, %v2814
        %v2816 = vpop.f32.mrb[0].mxu0
        %v2817 = vpop.f32.mrb[0].mxu0
        %v2818 = vadd.f32 0.0, %v2817
        %v2819 = vpop.f32.mrb[0].mxu0
        %2820 = vmatprep.mubr.bf16.mxu0 0
        %2821 = vmatmul.mubr.bf16.gmra.mrb[0].mxu0 %v2610
        %v2822 = vpop.f32.mrb[0].mxu0
        %v2823 = vadd.f32 0.0, %v2822
        %v2824 = vpop.f32.mrb[0].mxu0
        %v2825 = vpop.f32.mrb[0].mxu0
        %v2826 = vadd.f32 0.0, %v2825
        %v2827 = vpop.f32.mrb[0].mxu0
        %2828 = vmatprep.mubr.bf16.mxu0 0
        %2829 = vmatmul.mubr.bf16.gmra.mrb[0].mxu0 %v2611
        %v2830 = vpop.f32.mrb[0].mxu0
        %v2831 = vadd.f32 0.0, %v2830
        %v2832 = vpop.f32.mrb[0].mxu0
        %v2833 = vpop.f32.mrb[0].mxu0
        %v2834 = vadd.f32 0.0, %v2833
        %v2835 = vpop.f32.mrb[0].mxu0
        %2836 = vdwg.mxu0
        %v2837 = vadd.f32 %v2083, %v2711
        %v2838 = vadd.f32 %v2084, %v2714
        %v2839 = vadd.f32 %v2085, %v2719
        %v2840 = vadd.f32 %v2086, %v2722
        %v2841 = vadd.f32 %v2087, %v2727
        %v2842 = vadd.f32 %v2088, %v2730
        %v2843 = vadd.f32 %v2089, %v2735
        %v2844 = vadd.f32 %v2090, %v2738
        %v2845 = vadd.f32 %v2091, %v2743
        %v2846 = vadd.f32 %v2092, %v2746
        %v2847 = vadd.f32 %v2093, %v2751
        %v2848 = vadd.f32 %v2094, %v2754
        %v2849 = vadd.f32 %v2095, %v2759
        %v2850 = vadd.f32 %v2096, %v2762
        %v2851 = vadd.f32 %v2097, %v2767
        %v2852 = vadd.f32 %v2098, %v2770
        %v2853 = vadd.f32 %v2099, %v2775
        %v2854 = vadd.f32 %v2100, %v2778
        %v2855 = vadd.f32 %v2101, %v2783
        %v2856 = vadd.f32 %v2102, %v2786
        %v2857 = vadd.f32 %v2103, %v2791
        %v2858 = vadd.f32 %v2104, %v2794
        %v2859 = vadd.f32 %v2105, %v2799
        %v2860 = vadd.f32 %v2106, %v2802
        %v2861 = vadd.f32 %v2107, %v2807
        %v2862 = vadd.f32 %v2108, %v2810
        %v2863 = vadd.f32 %v2109, %v2815
        %v2864 = vadd.f32 %v2110, %v2818
        %v2865 = vadd.f32 %v2111, %v2823
        %v2866 = vadd.f32 %v2112, %v2826
        %v2867 = vadd.f32 %v2113, %v2831
        %v2868 = vadd.f32 %v2114, %v2834
        %v2869 = vld [vmem:[%s1728] sm:$0xe]
        %v2870 = vld [vmem:[%s1728 + $0xc] sm:$0xe]
        %v2871 = vld [vmem:[%s1728 + $0x18] sm:$0xe]
        %v2872 = vld [vmem:[%s1728 + $0x24] sm:$0xe]
        %v2873 = vld [vmem:[%s1728 + $0x30] sm:$0xe]
        %v2874 = vld [vmem:[%s1728 + $0x3c] sm:$0xe]
        %v2875 = vld [vmem:[%s1728 + $0x48] sm:$0xe]
        %v2876 = vld [vmem:[%s1728 + $0x54] sm:$0xe]
        %v2877 = vld [vmem:[%s1728 + $0x60] sm:$0xe]
        %v2878 = vld [vmem:[%s1728 + $0x6c] sm:$0xe]
        %v2879 = vld [vmem:[%s1728 + $0x78] sm:$0xe]
        %v2880 = vld [vmem:[%s1728 + $0x84] sm:$0xe]
        %v2881 = vld [vmem:[%s1728 + $0x90] sm:$0xe]
        %v2882 = vld [vmem:[%s1728 + $0x9c] sm:$0xe]
        %v2883 = vld [vmem:[%s1728 + $0xa8] sm:$0xe]
        %v2884 = vld [vmem:[%s1728 + $0xb4] sm:$0xe]
        %v2933 = vrot.slane %v2869, 5
        %v2934 = vrot.slane %v2933, 4
        %v2935 = vrot.slane %v2116, 5
        %v2936 = vsel %vm1293, %v2934, %v2935
        %v2937 = vrot.slane %v2935, 4
        %v2938 = vrot.slane %v2117, 5
        %v2939 = vsel %vm1293, %v2937, %v2938
        %v2940 = vrot.slane %v2870, 5
        %v2941 = vrot.slane %v2940, 4
        %v2942 = vrot.slane %v2119, 5
        %v2943 = vsel %vm1293, %v2941, %v2942
        %v2944 = vrot.slane %v2942, 4
        %v2945 = vrot.slane %v2120, 5
        %v2946 = vsel %vm1293, %v2944, %v2945
        %v2947 = vrot.slane %v2871, 5
        %v2948 = vrot.slane %v2947, 4
        %v2949 = vrot.slane %v2122, 5
        %v2950 = vsel %vm1293, %v2948, %v2949
        %v2951 = vrot.slane %v2949, 4
        %v2952 = vrot.slane %v2123, 5
        %v2953 = vsel %vm1293, %v2951, %v2952
        %v2954 = vrot.slane %v2872, 5
        %v2955 = vrot.slane %v2954, 4
        %v2956 = vrot.slane %v2125, 5
        %v2957 = vsel %vm1293, %v2955, %v2956
        %v2958 = vrot.slane %v2956, 4
        %v2959 = vrot.slane %v2126, 5
        %v2960 = vsel %vm1293, %v2958, %v2959
        %v2961 = vrot.slane %v2873, 5
        %v2962 = vrot.slane %v2961, 4
        %v2963 = vrot.slane %v2128, 5
        %v2964 = vsel %vm1293, %v2962, %v2963
        %v2965 = vrot.slane %v2963, 4
        %v2966 = vrot.slane %v2129, 5
        %v2967 = vsel %vm1293, %v2965, %v2966
        %v2968 = vrot.slane %v2874, 5
        %v2969 = vrot.slane %v2968, 4
        %v2970 = vrot.slane %v2131, 5
        %v2971 = vsel %vm1293, %v2969, %v2970
        %v2972 = vrot.slane %v2970, 4
        %v2973 = vrot.slane %v2132, 5
        %v2974 = vsel %vm1293, %v2972, %v2973
        %v2975 = vrot.slane %v2875, 5
        %v2976 = vrot.slane %v2975, 4
        %v2977 = vrot.slane %v2134, 5
        %v2978 = vsel %vm1293, %v2976, %v2977
        %v2979 = vrot.slane %v2977, 4
        %v2980 = vrot.slane %v2135, 5
        %v2981 = vsel %vm1293, %v2979, %v2980
        %v2982 = vrot.slane %v2876, 5
        %v2983 = vrot.slane %v2982, 4
        %v2984 = vrot.slane %v2137, 5
        %v2985 = vsel %vm1293, %v2983, %v2984
        %v2986 = vrot.slane %v2984, 4
        %v2987 = vrot.slane %v2138, 5
        %v2988 = vsel %vm1293, %v2986, %v2987
        %v2989 = vrot.slane %v2877, 5
        %v2990 = vrot.slane %v2989, 4
        %v2991 = vrot.slane %v2140, 5
        %v2992 = vsel %vm1293, %v2990, %v2991
        %v2993 = vrot.slane %v2991, 4
        %v2994 = vrot.slane %v2141, 5
        %v2995 = vsel %vm1293, %v2993, %v2994
        %v2996 = vrot.slane %v2878, 5
        %v2997 = vrot.slane %v2996, 4
        %v2998 = vrot.slane %v2143, 5
        %v2999 = vsel %vm1293, %v2997, %v2998
        %v3000 = vrot.slane %v2998, 4
        %v3001 = vrot.slane %v2144, 5
        %v3002 = vsel %vm1293, %v3000, %v3001
        %v3003 = vrot.slane %v2879, 5
        %v3004 = vrot.slane %v3003, 4
        %v3005 = vrot.slane %v2146, 5
        %v3006 = vsel %vm1293, %v3004, %v3005
        %v3007 = vrot.slane %v3005, 4
        %v3008 = vrot.slane %v2147, 5
        %v3009 = vsel %vm1293, %v3007, %v3008
        %v3010 = vrot.slane %v2880, 5
        %v3011 = vrot.slane %v3010, 4
        %v3012 = vrot.slane %v2149, 5
        %v3013 = vsel %vm1293, %v3011, %v3012
        %v3014 = vrot.slane %v3012, 4
        %v3015 = vrot.slane %v2150, 5
        %v3016 = vsel %vm1293, %v3014, %v3015
        %v3017 = vrot.slane %v2881, 5
        %v3018 = vrot.slane %v3017, 4
        %v3019 = vrot.slane %v2152, 5
        %v3020 = vsel %vm1293, %v3018, %v3019
        %v3021 = vrot.slane %v3019, 4
        %v3022 = vrot.slane %v2153, 5
        %v3023 = vsel %vm1293, %v3021, %v3022
        %v3024 = vrot.slane %v2882, 5
        %v3025 = vrot.slane %v3024, 4
        %v3026 = vrot.slane %v2155, 5
        %v3027 = vsel %vm1293, %v3025, %v3026
        %v3028 = vrot.slane %v3026, 4
        %v3029 = vrot.slane %v2156, 5
        %v3030 = vsel %vm1293, %v3028, %v3029
        %v3031 = vrot.slane %v2883, 5
        %v3032 = vrot.slane %v3031, 4
        %v3033 = vrot.slane %v2158, 5
        %v3034 = vsel %vm1293, %v3032, %v3033
        %v3035 = vrot.slane %v3033, 4
        %v3036 = vrot.slane %v2159, 5
        %v3037 = vsel %vm1293, %v3035, %v3036
        %v3038 = vrot.slane %v2884, 5
        %v3039 = vrot.slane %v3038, 4
        %v3040 = vrot.slane %v2161, 5
        %v3041 = vsel %vm1293, %v3039, %v3040
        %v3042 = vrot.slane %v3040, 4
        %v3043 = vrot.slane %v2162, 5
        %v3044 = vsel %vm1293, %v3042, %v3043
        %s3045 = scalar_lea.vmem %s1, 320
        %v3046 = vld [vmem:[%s3045] sm:$0xf]
        %v3047 = vld [vmem:[%s3045 + $0x4] sm:$0xf]
        %v3048 = vld [vmem:[%s3045 + $0x8] sm:$0xf]
        %v3049 = vld [vmem:[%s3045 + $0xc] sm:$0xf]
        %v3050 = vld [vmem:[%s3045 + $0x10] sm:$0xf]
        %v3051 = vld [vmem:[%s3045 + $0x14] sm:$0xf]
        %v3052 = vld [vmem:[%s3045 + $0x18] sm:$0xf]
        %v3053 = vld [vmem:[%s3045 + $0x1c] sm:$0xf]
        %v3054 = vld [vmem:[%s3045 + $0x20] sm:$0xf]
        %v3055 = vld [vmem:[%s3045 + $0x24] sm:$0xf]
        %v3056 = vld [vmem:[%s3045 + $0x28] sm:$0xf]
        %v3057 = vld [vmem:[%s3045 + $0x2c] sm:$0xf]
        %v3058 = vld [vmem:[%s3045 + $0x30] sm:$0xf]
        %v3059 = vld [vmem:[%s3045 + $0x34] sm:$0xf]
        %v3060 = vld [vmem:[%s3045 + $0x38] sm:$0xf]
        %v3061 = vld [vmem:[%s3045 + $0x3c] sm:$0xf]
        %v3062 = vunpack.c.l.b16 %v2936
        %v3063 = vunpack.c.l.b16 %v2939
        %v3064 = vunpack.c.l.b16 %v2943
        %v3065 = vunpack.c.l.b16 %v2946
        %v3066 = vunpack.c.l.b16 %v2950
        %v3067 = vunpack.c.l.b16 %v2953
        %v3068 = vunpack.c.l.b16 %v2957
        %v3069 = vunpack.c.l.b16 %v2960
        %v3070 = vunpack.c.l.b16 %v2964
        %v3071 = vunpack.c.l.b16 %v2967
        %v3072 = vunpack.c.l.b16 %v2971
        %v3073 = vunpack.c.l.b16 %v2974
        %v3074 = vunpack.c.l.b16 %v2978
        %v3075 = vunpack.c.l.b16 %v2981
        %v3076 = vunpack.c.l.b16 %v2985
        %v3077 = vunpack.c.l.b16 %v2988
        %v3078 = vunpack.c.l.b16 %v2992
        %v3079 = vunpack.c.l.b16 %v2995
        %v3080 = vunpack.c.l.b16 %v2999
        %v3081 = vunpack.c.l.b16 %v3002
        %v3082 = vunpack.c.l.b16 %v3006
        %v3083 = vunpack.c.l.b16 %v3009
        %v3084 = vunpack.c.l.b16 %v3013
        %v3085 = vunpack.c.l.b16 %v3016
        %v3086 = vunpack.c.l.b16 %v3020
        %v3087 = vunpack.c.l.b16 %v3023
        %v3088 = vunpack.c.l.b16 %v3027
        %v3089 = vunpack.c.l.b16 %v3030
        %v3090 = vunpack.c.l.b16 %v3034
        %v3091 = vunpack.c.l.b16 %v3037
        %v3092 = vunpack.c.l.b16 %v3041
        %v3093 = vunpack.c.l.b16 %v3044
        %v3094 = vpack.c.b16 %v3063, %v3062
        %v3095 = vpack.c.b16 %v3065, %v3064
        %v3096 = vpack.c.b16 %v3067, %v3066
        %v3097 = vpack.c.b16 %v3069, %v3068
        %v3098 = vpack.c.b16 %v3071, %v3070
        %v3099 = vpack.c.b16 %v3073, %v3072
        %v3100 = vpack.c.b16 %v3075, %v3074
        %v3101 = vpack.c.b16 %v3077, %v3076
        %v3102 = vpack.c.b16 %v3079, %v3078
        %v3103 = vpack.c.b16 %v3081, %v3080
        %v3104 = vpack.c.b16 %v3083, %v3082
        %v3105 = vpack.c.b16 %v3085, %v3084
        %v3106 = vpack.c.b16 %v3087, %v3086
        %v3107 = vpack.c.b16 %v3089, %v3088
        %v3108 = vpack.c.b16 %v3091, %v3090
        %v3109 = vpack.c.b16 %v3093, %v3092
        %v3142 = vunpack.c.l.b16 %v3046
        %v3143 = vunpack.c.l.b16 %v3047
        %v3144 = vunpack.c.l.b16 %v3048
        %v3145 = vunpack.c.l.b16 %v3049
        %v3146 = vunpack.c.l.b16 %v3050
        %v3147 = vunpack.c.l.b16 %v3051
        %v3148 = vunpack.c.l.b16 %v3052
        %v3149 = vunpack.c.l.b16 %v3053
        %v3150 = vunpack.c.l.b16 %v3054
        %v3151 = vunpack.c.l.b16 %v3055
        %v3152 = vunpack.c.l.b16 %v3056
        %v3153 = vunpack.c.l.b16 %v3057
        %v3154 = vunpack.c.l.b16 %v3058
        %v3155 = vunpack.c.l.b16 %v3059
        %v3156 = vunpack.c.l.b16 %v3060
        %v3157 = vunpack.c.l.b16 %v3061
        %v3158 = vpack.c.b16 %v3143, %v3142
        %v3159 = vpack.c.b16 %v3145, %v3144
        %v3160 = vpack.c.b16 %v3147, %v3146
        %v3161 = vpack.c.b16 %v3149, %v3148
        %v3162 = vpack.c.b16 %v3151, %v3150
        %v3163 = vpack.c.b16 %v3153, %v3152
        %v3164 = vpack.c.b16 %v3155, %v3154
        %v3165 = vpack.c.b16 %v3157, %v3156
        %3174 = vmatprep.subr.bf16.mxu0 0
        %3175 = vmatpush1.bf16.msra.mxu0 %v3158
        %3176 = vmatprep.subr.bf16.mxu0 0
        %3177 = vmatpush1.bf16.msra.mxu0 %v3159
        %3178 = vmatprep.subr.bf16.mxu0 0
        %3179 = vmatpush1.bf16.msra.mxu0 %v3160
        %3180 = vmatprep.subr.bf16.mxu0 0
        %3181 = vmatpush1.bf16.msra.mxu0 %v3161
        %3182 = vmatprep.subr.bf16.mxu0 0
        %3183 = vmatpush1.bf16.msra.mxu0 %v3162
        %3184 = vmatprep.subr.bf16.mxu0 0
        %3185 = vmatpush1.bf16.msra.mxu0 %v3163
        %3186 = vmatprep.subr.bf16.mxu0 0
        %3187 = vmatpush1.bf16.msra.mxu0 %v3164
        %3188 = vmatprep.subr.bf16.mxu0 0
        %3189 = vmatpush1.bf16.msra.mxu0 %v3165
        %3190 = vmatprep.subr.bf16.mxu0 0
        %3191 = vmatpush1.bf16.msra.mxu0 0
        %3192 = vmatprep.subr.bf16.mxu0 0
        %3193 = vmatpush1.bf16.msra.mxu0 0
        %3194 = vmatprep.subr.bf16.mxu0 0
        %3195 = vmatpush1.bf16.msra.mxu0 0
        %3196 = vmatprep.subr.bf16.mxu0 0
        %3197 = vmatpush1.bf16.msra.mxu0 0
        %3198 = vmatprep.subr.bf16.mxu0 0
        %3199 = vmatpush1.bf16.msra.mxu0 0
        %3200 = vmatprep.subr.bf16.mxu0 0
        %3201 = vmatpush1.bf16.msra.mxu0 0
        %3202 = vmatprep.subr.bf16.mxu0 0
        %3203 = vmatpush1.bf16.msra.mxu0 0
        %3204 = vmatprep.subr.bf16.mxu0 0
        %3205 = vmatpush1.bf16.msra.mxu0 0
        %3206 = vmatprep.mubr.bf16.mxu0 0
        %3207 = vmatmul.mubr.bf16.gmra.mrb[0].mxu0 %v3094
        %v3208 = vpop.f32.mrb[0].mxu0
        %v3209 = vadd.f32 0.0, %v3208
        %v3210 = vpop.f32.mrb[0].mxu0
        %v3211 = vpop.f32.mrb[0].mxu0
        %v3212 = vadd.f32 0.0, %v3211
        %v3213 = vpop.f32.mrb[0].mxu0
        %3214 = vmatprep.mubr.bf16.mxu0 0
        %3215 = vmatmul.mubr.bf16.gmra.mrb[0].mxu0 %v3095
        %v3216 = vpop.f32.mrb[0].mxu0
        %v3217 = vadd.f32 0.0, %v3216
        %v3218 = vpop.f32.mrb[0].mxu0
        %v3219 = vpop.f32.mrb[0].mxu0
        %v3220 = vadd.f32 0.0, %v3219
        %v3221 = vpop.f32.mrb[0].mxu0
        %3222 = vmatprep.mubr.bf16.mxu0 0
        %3223 = vmatmul.mubr.bf16.gmra.mrb[0].mxu0 %v3096
        %v3224 = vpop.f32.mrb[0].mxu0
        %v3225 = vadd.f32 0.0, %v3224
        %v3226 = vpop.f32.mrb[0].mxu0
        %v3227 = vpop.f32.mrb[0].mxu0
        %v3228 = vadd.f32 0.0, %v3227
        %v3229 = vpop.f32.mrb[0].mxu0
        %3230 = vmatprep.mubr.bf16.mxu0 0
        %3231 = vmatmul.mubr.bf16.gmra.mrb[0].mxu0 %v3097
        %v3232 = vpop.f32.mrb[0].mxu0
        %v3233 = vadd.f32 0.0, %v3232
        %v3234 = vpop.f32.mrb[0].mxu0
        %v3235 = vpop.f32.mrb[0].mxu0
        %v3236 = vadd.f32 0.0, %v3235
        %v3237 = vpop.f32.mrb[0].mxu0
        %3238 = vmatprep.mubr.bf16.mxu0 0
        %3239 = vmatmul.mubr.bf16.gmra.mrb[0].mxu0 %v3098
        %v3240 = vpop.f32.mrb[0].mxu0
        %v3241 = vadd.f32 0.0, %v3240
        %v3242 = vpop.f32.mrb[0].mxu0
        %v3243 = vpop.f32.mrb[0].mxu0
        %v3244 = vadd.f32 0.0, %v3243
        %v3245 = vpop.f32.mrb[0].mxu0
        %3246 = vmatprep.mubr.bf16.mxu0 0
        %3247 = vmatmul.mubr.bf16.gmra.mrb[0].mxu0 %v3099
        %v3248 = vpop.f32.mrb[0].mxu0
        %v3249 = vadd.f32 0.0, %v3248
        %v3250 = vpop.f32.mrb[0].mxu0
        %v3251 = vpop.f32.mrb[0].mxu0
        %v3252 = vadd.f32 0.0, %v3251
        %v3253 = vpop.f32.mrb[0].mxu0
        %3254 = vmatprep.mubr.bf16.mxu0 0
        %3255 = vmatmul.mubr.bf16.gmra.mrb[0].mxu0 %v3100
        %v3256 = vpop.f32.mrb[0].mxu0
        %v3257 = vadd.f32 0.0, %v3256
        %v3258 = vpop.f32.mrb[0].mxu0
        %v3259 = vpop.f32.mrb[0].mxu0
        %v3260 = vadd.f32 0.0, %v3259
        %v3261 = vpop.f32.mrb[0].mxu0
        %3262 = vmatprep.mubr.bf16.mxu0 0
        %3263 = vmatmul.mubr.bf16.gmra.mrb[0].mxu0 %v3101
        %v3264 = vpop.f32.mrb[0].mxu0
        %v3265 = vadd.f32 0.0, %v3264
        %v3266 = vpop.f32.mrb[0].mxu0
        %v3267 = vpop.f32.mrb[0].mxu0
        %v3268 = vadd.f32 0.0, %v3267
        %v3269 = vpop.f32.mrb[0].mxu0
        %3270 = vmatprep.mubr.bf16.mxu0 0
        %3271 = vmatmul.mubr.bf16.gmra.mrb[0].mxu0 %v3102
        %v3272 = vpop.f32.mrb[0].mxu0
        %v3273 = vadd.f32 0.0, %v3272
        %v3274 = vpop.f32.mrb[0].mxu0
        %v3275 = vpop.f32.mrb[0].mxu0
        %v3276 = vadd.f32 0.0, %v3275
        %v3277 = vpop.f32.mrb[0].mxu0
        %3278 = vmatprep.mubr.bf16.mxu0 0
        %3279 = vmatmul.mubr.bf16.gmra.mrb[0].mxu0 %v3103
        %v3280 = vpop.f32.mrb[0].mxu0
        %v3281 = vadd.f32 0.0, %v3280
        %v3282 = vpop.f32.mrb[0].mxu0
        %v3283 = vpop.f32.mrb[0].mxu0
        %v3284 = vadd.f32 0.0, %v3283
        %v3285 = vpop.f32.mrb[0].mxu0
        %3286 = vmatprep.mubr.bf16.mxu0 0
        %3287 = vmatmul.mubr.bf16.gmra.mrb[0].mxu0 %v3104
        %v3288 = vpop.f32.mrb[0].mxu0
        %v3289 = vadd.f32 0.0, %v3288
        %v3290 = vpop.f32.mrb[0].mxu0
        %v3291 = vpop.f32.mrb[0].mxu0
        %v3292 = vadd.f32 0.0, %v3291
        %v3293 = vpop.f32.mrb[0].mxu0
        %3294 = vmatprep.mubr.bf16.mxu0 0
        %3295 = vmatmul.mubr.bf16.gmra.mrb[0].mxu0 %v3105
        %v3296 = vpop.f32.mrb[0].mxu0
        %v3297 = vadd.f32 0.0, %v3296
        %v3298 = vpop.f32.mrb[0].mxu0
        %v3299 = vpop.f32.mrb[0].mxu0
        %v3300 = vadd.f32 0.0, %v3299
        %v3301 = vpop.f32.mrb[0].mxu0
        %3302 = vmatprep.mubr.bf16.mxu0 0
        %3303 = vmatmul.mubr.bf16.gmra.mrb[0].mxu0 %v3106
        %v3304 = vpop.f32.mrb[0].mxu0
        %v3305 = vadd.f32 0.0, %v3304
        %v3306 = vpop.f32.mrb[0].mxu0
        %v3307 = vpop.f32.mrb[0].mxu0
        %v3308 = vadd.f32 0.0, %v3307
        %v3309 = vpop.f32.mrb[0].mxu0
        %3310 = vmatprep.mubr.bf16.mxu0 0
        %3311 = vmatmul.mubr.bf16.gmra.mrb[0].mxu0 %v3107
        %v3312 = vpop.f32.mrb[0].mxu0
        %v3313 = vadd.f32 0.0, %v3312
        %v3314 = vpop.f32.mrb[0].mxu0
        %v3315 = vpop.f32.mrb[0].mxu0
        %v3316 = vadd.f32 0.0, %v3315
        %v3317 = vpop.f32.mrb[0].mxu0
        %3318 = vmatprep.mubr.bf16.mxu0 0
        %3319 = vmatmul.mubr.bf16.gmra.mrb[0].mxu0 %v3108
        %v3320 = vpop.f32.mrb[0].mxu0
        %v3321 = vadd.f32 0.0, %v3320
        %v3322 = vpop.f32.mrb[0].mxu0
        %v3323 = vpop.f32.mrb[0].mxu0
        %v3324 = vadd.f32 0.0, %v3323
        %v3325 = vpop.f32.mrb[0].mxu0
        %3326 = vmatprep.mubr.bf16.mxu0 0
        %3327 = vmatmul.mubr.bf16.gmra.mrb[0].mxu0 %v3109
        %v3328 = vpop.f32.mrb[0].mxu0
        %v3329 = vadd.f32 0.0, %v3328
        %v3330 = vpop.f32.mrb[0].mxu0
        %v3331 = vpop.f32.mrb[0].mxu0
        %v3332 = vadd.f32 0.0, %v3331
        %v3333 = vpop.f32.mrb[0].mxu0
        %3334 = vdwg.mxu0
        %v3335 = vadd.f32 %v2837, %v3209
        %v3336 = vadd.f32 %v2838, %v3212
        %v3337 = vadd.f32 %v2839, %v3217
        %v3338 = vadd.f32 %v2840, %v3220
        %v3339 = vadd.f32 %v2841, %v3225
        %v3340 = vadd.f32 %v2842, %v3228
        %v3341 = vadd.f32 %v2843, %v3233
        %v3342 = vadd.f32 %v2844, %v3236
        %v3343 = vadd.f32 %v2845, %v3241
        %v3344 = vadd.f32 %v2846, %v3244
        %v3345 = vadd.f32 %v2847, %v3249
        %v3346 = vadd.f32 %v2848, %v3252
        %v3347 = vadd.f32 %v2849, %v3257
        %v3348 = vadd.f32 %v2850, %v3260
        %v3349 = vadd.f32 %v2851, %v3265
        %v3350 = vadd.f32 %v2852, %v3268
        %v3351 = vadd.f32 %v2853, %v3273
        %v3352 = vadd.f32 %v2854, %v3276
        %v3353 = vadd.f32 %v2855, %v3281
        %v3354 = vadd.f32 %v2856, %v3284
        %v3355 = vadd.f32 %v2857, %v3289
        %v3356 = vadd.f32 %v2858, %v3292
        %v3357 = vadd.f32 %v2859, %v3297
        %v3358 = vadd.f32 %v2860, %v3300
        %v3359 = vadd.f32 %v2861, %v3305
        %v3360 = vadd.f32 %v2862, %v3308
        %v3361 = vadd.f32 %v2863, %v3313
        %v3362 = vadd.f32 %v2864, %v3316
        %v3363 = vadd.f32 %v2865, %v3321
        %v3364 = vadd.f32 %v2866, %v3324
        %v3365 = vadd.f32 %v2867, %v3329
        %v3366 = vadd.f32 %v2868, %v3332
        %s3367 = scalar_lea.vmem %s195, 24
        %v3368 = vld [vmem:[%s3367] sm:$0xf]
        %v3369 = vld [vmem:[%s3367 + $0x4] sm:$0xf]
        %v3370 = vld [vmem:[%s3367 + $0xc] sm:$0xf]
        %v3371 = vld [vmem:[%s3367 + $0x10] sm:$0xf]
        %v3372 = vld [vmem:[%s3367 + $0x18] sm:$0xf]
        %v3373 = vld [vmem:[%s3367 + $0x1c] sm:$0xf]
        %v3374 = vld [vmem:[%s3367 + $0x24] sm:$0xf]
        %v3375 = vld [vmem:[%s3367 + $0x28] sm:$0xf]
        %v3376 = vld [vmem:[%s3367 + $0x30] sm:$0xf]
        %v3377 = vld [vmem:[%s3367 + $0x34] sm:$0xf]
        %v3378 = vld [vmem:[%s3367 + $0x3c] sm:$0xf]
        %v3379 = vld [vmem:[%s3367 + $0x40] sm:$0xf]
        %v3380 = vld [vmem:[%s3367 + $0x48] sm:$0xf]
        %v3381 = vld [vmem:[%s3367 + $0x4c] sm:$0xf]
        %v3382 = vld [vmem:[%s3367 + $0x54] sm:$0xf]
        %v3383 = vld [vmem:[%s3367 + $0x58] sm:$0xf]
        %v3384 = vld [vmem:[%s3367 + $0x60] sm:$0xf]
        %v3385 = vld [vmem:[%s3367 + $0x64] sm:$0xf]
        %v3386 = vld [vmem:[%s3367 + $0x6c] sm:$0xf]
        %v3387 = vld [vmem:[%s3367 + $0x70] sm:$0xf]
        %v3388 = vld [vmem:[%s3367 + $0x78] sm:$0xf]
        %v3389 = vld [vmem:[%s3367 + $0x7c] sm:$0xf]
        %v3390 = vld [vmem:[%s3367 + $0x84] sm:$0xf]
        %v3391 = vld [vmem:[%s3367 + $0x88] sm:$0xf]
        %v3392 = vld [vmem:[%s3367 + $0x90] sm:$0xf]
        %v3393 = vld [vmem:[%s3367 + $0x94] sm:$0xf]
        %v3394 = vld [vmem:[%s3367 + $0x9c] sm:$0xf]
        %v3395 = vld [vmem:[%s3367 + $0xa0] sm:$0xf]
        %v3396 = vld [vmem:[%s3367 + $0xa8] sm:$0xf]
        %v3397 = vld [vmem:[%s3367 + $0xac] sm:$0xf]
        %v3398 = vld [vmem:[%s3367 + $0xb4] sm:$0xf]
        %v3399 = vld [vmem:[%s3367 + $0xb8] sm:$0xf]
        %s3400 = scalar_lea.vmem %s1, 384
        %v3401 = vld [vmem:[%s3400] sm:$0xf]
        %v3402 = vld [vmem:[%s3400 + $0x4] sm:$0xf]
        %v3403 = vld [vmem:[%s3400 + $0x8] sm:$0xf]
        %v3404 = vld [vmem:[%s3400 + $0xc] sm:$0xf]
        %v3405 = vld [vmem:[%s3400 + $0x10] sm:$0xf]
        %v3406 = vld [vmem:[%s3400 + $0x14] sm:$0xf]
        %v3407 = vld [vmem:[%s3400 + $0x18] sm:$0xf]
        %v3408 = vld [vmem:[%s3400 + $0x1c] sm:$0xf]
        %v3409 = vld [vmem:[%s3400 + $0x20] sm:$0xf]
        %v3410 = vld [vmem:[%s3400 + $0x24] sm:$0xf]
        %v3411 = vld [vmem:[%s3400 + $0x28] sm:$0xf]
        %v3412 = vld [vmem:[%s3400 + $0x2c] sm:$0xf]
        %v3413 = vld [vmem:[%s3400 + $0x30] sm:$0xf]
        %v3414 = vld [vmem:[%s3400 + $0x34] sm:$0xf]
        %v3415 = vld [vmem:[%s3400 + $0x38] sm:$0xf]
        %v3416 = vld [vmem:[%s3400 + $0x3c] sm:$0xf]
        %v3449 = vunpack.c.l.b16 %v3368
        %v3450 = vunpack.c.l.b16 %v3369
        %v3451 = vunpack.c.l.b16 %v3370
        %v3452 = vunpack.c.l.b16 %v3371
        %v3453 = vunpack.c.l.b16 %v3372
        %v3454 = vunpack.c.l.b16 %v3373
        %v3455 = vunpack.c.l.b16 %v3374
        %v3456 = vunpack.c.l.b16 %v3375
        %v3457 = vunpack.c.l.b16 %v3376
        %v3458 = vunpack.c.l.b16 %v3377
        %v3459 = vunpack.c.l.b16 %v3378
        %v3460 = vunpack.c.l.b16 %v3379
        %v3461 = vunpack.c.l.b16 %v3380
        %v3462 = vunpack.c.l.b16 %v3381
        %v3463 = vunpack.c.l.b16 %v3382
        %v3464 = vunpack.c.l.b16 %v3383
        %v3465 = vunpack.c.l.b16 %v3384
        %v3466 = vunpack.c.l.b16 %v3385
        %v3467 = vunpack.c.l.b16 %v3386
        %v3468 = vunpack.c.l.b16 %v3387
        %v3469 = vunpack.c.l.b16 %v3388
        %v3470 = vunpack.c.l.b16 %v3389
        %v3471 = vunpack.c.l.b16 %v3390
        %v3472 = vunpack.c.l.b16 %v3391
        %v3473 = vunpack.c.l.b16 %v3392
        %v3474 = vunpack.c.l.b16 %v3393
        %v3475 = vunpack.c.l.b16 %v3394
        %v3476 = vunpack.c.l.b16 %v3395
        %v3477 = vunpack.c.l.b16 %v3396
        %v3478 = vunpack.c.l.b16 %v3397
        %v3479 = vunpack.c.l.b16 %v3398
        %v3480 = vunpack.c.l.b16 %v3399
        %v3481 = vpack.c.b16 %v3450, %v3449
        %v3482 = vpack.c.b16 %v3452, %v3451
        %v3483 = vpack.c.b16 %v3454, %v3453
        %v3484 = vpack.c.b16 %v3456, %v3455
        %v3485 = vpack.c.b16 %v3458, %v3457
        %v3486 = vpack.c.b16 %v3460, %v3459
        %v3487 = vpack.c.b16 %v3462, %v3461
        %v3488 = vpack.c.b16 %v3464, %v3463
        %v3489 = vpack.c.b16 %v3466, %v3465
        %v3490 = vpack.c.b16 %v3468, %v3467
        %v3491 = vpack.c.b16 %v3470, %v3469
        %v3492 = vpack.c.b16 %v3472, %v3471
        %v3493 = vpack.c.b16 %v3474, %v3473
        %v3494 = vpack.c.b16 %v3476, %v3475
        %v3495 = vpack.c.b16 %v3478, %v3477
        %v3496 = vpack.c.b16 %v3480, %v3479
        %v3529 = vunpack.c.l.b16 %v3401
        %v3530 = vunpack.c.l.b16 %v3402
        %v3531 = vunpack.c.l.b16 %v3403
        %v3532 = vunpack.c.l.b16 %v3404
        %v3533 = vunpack.c.l.b16 %v3405
        %v3534 = vunpack.c.l.b16 %v3406
        %v3535 = vunpack.c.l.b16 %v3407
        %v3536 = vunpack.c.l.b16 %v3408
        %v3537 = vunpack.c.l.b16 %v3409
        %v3538 = vunpack.c.l.b16 %v3410
        %v3539 = vunpack.c.l.b16 %v3411
        %v3540 = vunpack.c.l.b16 %v3412
        %v3541 = vunpack.c.l.b16 %v3413
        %v3542 = vunpack.c.l.b16 %v3414
        %v3543 = vunpack.c.l.b16 %v3415
        %v3544 = vunpack.c.l.b16 %v3416
        %v3545 = vpack.c.b16 %v3530, %v3529
        %v3546 = vpack.c.b16 %v3532, %v3531
        %v3547 = vpack.c.b16 %v3534, %v3533
        %v3548 = vpack.c.b16 %v3536, %v3535
        %v3549 = vpack.c.b16 %v3538, %v3537
        %v3550 = vpack.c.b16 %v3540, %v3539
        %v3551 = vpack.c.b16 %v3542, %v3541
        %v3552 = vpack.c.b16 %v3544, %v3543
        %3561 = vmatprep.subr.bf16.mxu0 0
        %3562 = vmatpush1.bf16.msra.mxu0 %v3545
        %3563 = vmatprep.subr.bf16.mxu0 0
        %3564 = vmatpush1.bf16.msra.mxu0 %v3546
        %3565 = vmatprep.subr.bf16.mxu0 0
        %3566 = vmatpush1.bf16.msra.mxu0 %v3547
        %3567 = vmatprep.subr.bf16.mxu0 0
        %3568 = vmatpush1.bf16.msra.mxu0 %v3548
        %3569 = vmatprep.subr.bf16.mxu0 0
        %3570 = vmatpush1.bf16.msra.mxu0 %v3549
        %3571 = vmatprep.subr.bf16.mxu0 0
        %3572 = vmatpush1.bf16.msra.mxu0 %v3550
        %3573 = vmatprep.subr.bf16.mxu0 0
        %3574 = vmatpush1.bf16.msra.mxu0 %v3551
        %3575 = vmatprep.subr.bf16.mxu0 0
        %3576 = vmatpush1.bf16.msra.mxu0 %v3552
        %3577 = vmatprep.subr.bf16.mxu0 0
        %3578 = vmatpush1.bf16.msra.mxu0 0
        %3579 = vmatprep.subr.bf16.mxu0 0
        %3580 = vmatpush1.bf16.msra.mxu0 0
        %3581 = vmatprep.subr.bf16.mxu0 0
        %3582 = vmatpush1.bf16.msra.mxu0 0
        %3583 = vmatprep.subr.bf16.mxu0 0
        %3584 = vmatpush1.bf16.msra.mxu0 0
        %3585 = vmatprep.subr.bf16.mxu0 0
        %3586 = vmatpush1.bf16.msra.mxu0 0
        %3587 = vmatprep.subr.bf16.mxu0 0
        %3588 = vmatpush1.bf16.msra.mxu0 0
        %3589 = vmatprep.subr.bf16.mxu0 0
        %3590 = vmatpush1.bf16.msra.mxu0 0
        %3591 = vmatprep.subr.bf16.mxu0 0
        %3592 = vmatpush1.bf16.msra.mxu0 0
        %3593 = vmatprep.mubr.bf16.mxu0 0
        %3594 = vmatmul.mubr.bf16.gmra.mrb[0].mxu0 %v3481
        %v3595 = vpop.f32.mrb[0].mxu0
        %v3596 = vadd.f32 0.0, %v3595
        %v3597 = vpop.f32.mrb[0].mxu0
        %v3598 = vpop.f32.mrb[0].mxu0
        %v3599 = vadd.f32 0.0, %v3598
        %v3600 = vpop.f32.mrb[0].mxu0
        %3601 = vmatprep.mubr.bf16.mxu0 0
        %3602 = vmatmul.mubr.bf16.gmra.mrb[0].mxu0 %v3482
        %v3603 = vpop.f32.mrb[0].mxu0
        %v3604 = vadd.f32 0.0, %v3603
        %v3605 = vpop.f32.mrb[0].mxu0
        %v3606 = vpop.f32.mrb[0].mxu0
        %v3607 = vadd.f32 0.0, %v3606
        %v3608 = vpop.f32.mrb[0].mxu0
        %3609 = vmatprep.mubr.bf16.mxu0 0
        %3610 = vmatmul.mubr.bf16.gmra.mrb[0].mxu0 %v3483
        %v3611 = vpop.f32.mrb[0].mxu0
        %v3612 = vadd.f32 0.0, %v3611
        %v3613 = vpop.f32.mrb[0].mxu0
        %v3614 = vpop.f32.mrb[0].mxu0
        %v3615 = vadd.f32 0.0, %v3614
        %v3616 = vpop.f32.mrb[0].mxu0
        %3617 = vmatprep.mubr.bf16.mxu0 0
        %3618 = vmatmul.mubr.bf16.gmra.mrb[0].mxu0 %v3484
        %v3619 = vpop.f32.mrb[0].mxu0
        %v3620 = vadd.f32 0.0, %v3619
        %v3621 = vpop.f32.mrb[0].mxu0
        %v3622 = vpop.f32.mrb[0].mxu0
        %v3623 = vadd.f32 0.0, %v3622
        %v3624 = vpop.f32.mrb[0].mxu0
        %3625 = vmatprep.mubr.bf16.mxu0 0
        %3626 = vmatmul.mubr.bf16.gmra.mrb[0].mxu0 %v3485
        %v3627 = vpop.f32.mrb[0].mxu0
        %v3628 = vadd.f32 0.0, %v3627
        %v3629 = vpop.f32.mrb[0].mxu0
        %v3630 = vpop.f32.mrb[0].mxu0
        %v3631 = vadd.f32 0.0, %v3630
        %v3632 = vpop.f32.mrb[0].mxu0
        %3633 = vmatprep.mubr.bf16.mxu0 0
        %3634 = vmatmul.mubr.bf16.gmra.mrb[0].mxu0 %v3486
        %v3635 = vpop.f32.mrb[0].mxu0
        %v3636 = vadd.f32 0.0, %v3635
        %v3637 = vpop.f32.mrb[0].mxu0
        %v3638 = vpop.f32.mrb[0].mxu0
        %v3639 = vadd.f32 0.0, %v3638
        %v3640 = vpop.f32.mrb[0].mxu0
        %3641 = vmatprep.mubr.bf16.mxu0 0
        %3642 = vmatmul.mubr.bf16.gmra.mrb[0].mxu0 %v3487
        %v3643 = vpop.f32.mrb[0].mxu0
        %v3644 = vadd.f32 0.0, %v3643
        %v3645 = vpop.f32.mrb[0].mxu0
        %v3646 = vpop.f32.mrb[0].mxu0
        %v3647 = vadd.f32 0.0, %v3646
        %v3648 = vpop.f32.mrb[0].mxu0
        %3649 = vmatprep.mubr.bf16.mxu0 0
        %3650 = vmatmul.mubr.bf16.gmra.mrb[0].mxu0 %v3488
        %v3651 = vpop.f32.mrb[0].mxu0
        %v3652 = vadd.f32 0.0, %v3651
        %v3653 = vpop.f32.mrb[0].mxu0
        %v3654 = vpop.f32.mrb[0].mxu0
        %v3655 = vadd.f32 0.0, %v3654
        %v3656 = vpop.f32.mrb[0].mxu0
        %3657 = vmatprep.mubr.bf16.mxu0 0
        %3658 = vmatmul.mubr.bf16.gmra.mrb[0].mxu0 %v3489
        %v3659 = vpop.f32.mrb[0].mxu0
        %v3660 = vadd.f32 0.0, %v3659
        %v3661 = vpop.f32.mrb[0].mxu0
        %v3662 = vpop.f32.mrb[0].mxu0
        %v3663 = vadd.f32 0.0, %v3662
        %v3664 = vpop.f32.mrb[0].mxu0
        %3665 = vmatprep.mubr.bf16.mxu0 0
        %3666 = vmatmul.mubr.bf16.gmra.mrb[0].mxu0 %v3490
        %v3667 = vpop.f32.mrb[0].mxu0
        %v3668 = vadd.f32 0.0, %v3667
        %v3669 = vpop.f32.mrb[0].mxu0
        %v3670 = vpop.f32.mrb[0].mxu0
        %v3671 = vadd.f32 0.0, %v3670
        %v3672 = vpop.f32.mrb[0].mxu0
        %3673 = vmatprep.mubr.bf16.mxu0 0
        %3674 = vmatmul.mubr.bf16.gmra.mrb[0].mxu0 %v3491
        %v3675 = vpop.f32.mrb[0].mxu0
        %v3676 = vadd.f32 0.0, %v3675
        %v3677 = vpop.f32.mrb[0].mxu0
        %v3678 = vpop.f32.mrb[0].mxu0
        %v3679 = vadd.f32 0.0, %v3678
        %v3680 = vpop.f32.mrb[0].mxu0
        %3681 = vmatprep.mubr.bf16.mxu0 0
        %3682 = vmatmul.mubr.bf16.gmra.mrb[0].mxu0 %v3492
        %v3683 = vpop.f32.mrb[0].mxu0
        %v3684 = vadd.f32 0.0, %v3683
        %v3685 = vpop.f32.mrb[0].mxu0
        %v3686 = vpop.f32.mrb[0].mxu0
        %v3687 = vadd.f32 0.0, %v3686
        %v3688 = vpop.f32.mrb[0].mxu0
        %3689 = vmatprep.mubr.bf16.mxu0 0
        %3690 = vmatmul.mubr.bf16.gmra.mrb[0].mxu0 %v3493
        %v3691 = vpop.f32.mrb[0].mxu0
        %v3692 = vadd.f32 0.0, %v3691
        %v3693 = vpop.f32.mrb[0].mxu0
        %v3694 = vpop.f32.mrb[0].mxu0
        %v3695 = vadd.f32 0.0, %v3694
        %v3696 = vpop.f32.mrb[0].mxu0
        %3697 = vmatprep.mubr.bf16.mxu0 0
        %3698 = vmatmul.mubr.bf16.gmra.mrb[0].mxu0 %v3494
        %v3699 = vpop.f32.mrb[0].mxu0
        %v3700 = vadd.f32 0.0, %v3699
        %v3701 = vpop.f32.mrb[0].mxu0
        %v3702 = vpop.f32.mrb[0].mxu0
        %v3703 = vadd.f32 0.0, %v3702
        %v3704 = vpop.f32.mrb[0].mxu0
        %3705 = vmatprep.mubr.bf16.mxu0 0
        %3706 = vmatmul.mubr.bf16.gmra.mrb[0].mxu0 %v3495
        %v3707 = vpop.f32.mrb[0].mxu0
        %v3708 = vadd.f32 0.0, %v3707
        %v3709 = vpop.f32.mrb[0].mxu0
        %v3710 = vpop.f32.mrb[0].mxu0
        %v3711 = vadd.f32 0.0, %v3710
        %v3712 = vpop.f32.mrb[0].mxu0
        %3713 = vmatprep.mubr.bf16.mxu0 0
        %3714 = vmatmul.mubr.bf16.gmra.mrb[0].mxu0 %v3496
        %v3715 = vpop.f32.mrb[0].mxu0
        %v3716 = vadd.f32 0.0, %v3715
        %v3717 = vpop.f32.mrb[0].mxu0
        %v3718 = vpop.f32.mrb[0].mxu0
        %v3719 = vadd.f32 0.0, %v3718
        %v3720 = vpop.f32.mrb[0].mxu0
        %3721 = vdwg.mxu0
        %v3722 = vadd.f32 %v3335, %v3596
        %v3723 = vadd.f32 %v3336, %v3599
        %v3724 = vadd.f32 %v3337, %v3604
        %v3725 = vadd.f32 %v3338, %v3607
        %v3726 = vadd.f32 %v3339, %v3612
        %v3727 = vadd.f32 %v3340, %v3615
        %v3728 = vadd.f32 %v3341, %v3620
        %v3729 = vadd.f32 %v3342, %v3623
        %v3730 = vadd.f32 %v3343, %v3628
        %v3731 = vadd.f32 %v3344, %v3631
        %v3732 = vadd.f32 %v3345, %v3636
        %v3733 = vadd.f32 %v3346, %v3639
        %v3734 = vadd.f32 %v3347, %v3644
        %v3735 = vadd.f32 %v3348, %v3647
        %v3736 = vadd.f32 %v3349, %v3652
        %v3737 = vadd.f32 %v3350, %v3655
        %v3738 = vadd.f32 %v3351, %v3660
        %v3739 = vadd.f32 %v3352, %v3663
        %v3740 = vadd.f32 %v3353, %v3668
        %v3741 = vadd.f32 %v3354, %v3671
        %v3742 = vadd.f32 %v3355, %v3676
        %v3743 = vadd.f32 %v3356, %v3679
        %v3744 = vadd.f32 %v3357, %v3684
        %v3745 = vadd.f32 %v3358, %v3687
        %v3746 = vadd.f32 %v3359, %v3692
        %v3747 = vadd.f32 %v3360, %v3695
        %v3748 = vadd.f32 %v3361, %v3700
        %v3749 = vadd.f32 %v3362, %v3703
        %v3750 = vadd.f32 %v3363, %v3708
        %v3751 = vadd.f32 %v3364, %v3711
        %v3752 = vadd.f32 %v3365, %v3716
        %v3753 = vadd.f32 %v3366, %v3719
        %v3754 = vld [vmem:[%s3367] sm:$0xf]
        %v3755 = vld [vmem:[%s3367 + $0x4] sm:$0xf]
        %v3756 = vld [vmem:[%s3367 + $0x8] sm:$0x1]
        %v3757 = vld [vmem:[%s3367 + $0xc] sm:$0xf]
        %v3758 = vld [vmem:[%s3367 + $0x10] sm:$0xf]
        %v3759 = vld [vmem:[%s3367 + $0x14] sm:$0x1]
        %v3760 = vld [vmem:[%s3367 + $0x18] sm:$0xf]
        %v3761 = vld [vmem:[%s3367 + $0x1c] sm:$0xf]
        %v3762 = vld [vmem:[%s3367 + $0x20] sm:$0x1]
        %v3763 = vld [vmem:[%s3367 + $0x24] sm:$0xf]
        %v3764 = vld [vmem:[%s3367 + $0x28] sm:$0xf]
        %v3765 = vld [vmem:[%s3367 + $0x2c] sm:$0x1]
        %v3766 = vld [vmem:[%s3367 + $0x30] sm:$0xf]
        %v3767 = vld [vmem:[%s3367 + $0x34] sm:$0xf]
        %v3768 = vld [vmem:[%s3367 + $0x38] sm:$0x1]
        %v3769 = vld [vmem:[%s3367 + $0x3c] sm:$0xf]
        %v3770 = vld [vmem:[%s3367 + $0x40] sm:$0xf]
        %v3771 = vld [vmem:[%s3367 + $0x44] sm:$0x1]
        %v3772 = vld [vmem:[%s3367 + $0x48] sm:$0xf]
        %v3773 = vld [vmem:[%s3367 + $0x4c] sm:$0xf]
        %v3774 = vld [vmem:[%s3367 + $0x50] sm:$0x1]
        %v3775 = vld [vmem:[%s3367 + $0x54] sm:$0xf]
        %v3776 = vld [vmem:[%s3367 + $0x58] sm:$0xf]
        %v3777 = vld [vmem:[%s3367 + $0x5c] sm:$0x1]
        %v3778 = vld [vmem:[%s3367 + $0x60] sm:$0xf]
        %v3779 = vld [vmem:[%s3367 + $0x64] sm:$0xf]
        %v3780 = vld [vmem:[%s3367 + $0x68] sm:$0x1]
        %v3781 = vld [vmem:[%s3367 + $0x6c] sm:$0xf]
        %v3782 = vld [vmem:[%s3367 + $0x70] sm:$0xf]
        %v3783 = vld [vmem:[%s3367 + $0x74] sm:$0x1]
        %v3784 = vld [vmem:[%s3367 + $0x78] sm:$0xf]
        %v3785 = vld [vmem:[%s3367 + $0x7c] sm:$0xf]
        %v3786 = vld [vmem:[%s3367 + $0x80] sm:$0x1]
        %v3787 = vld [vmem:[%s3367 + $0x84] sm:$0xf]
        %v3788 = vld [vmem:[%s3367 + $0x88] sm:$0xf]
        %v3789 = vld [vmem:[%s3367 + $0x8c] sm:$0x1]
        %v3790 = vld [vmem:[%s3367 + $0x90] sm:$0xf]
        %v3791 = vld [vmem:[%s3367 + $0x94] sm:$0xf]
        %v3792 = vld [vmem:[%s3367 + $0x98] sm:$0x1]
        %v3793 = vld [vmem:[%s3367 + $0x9c] sm:$0xf]
        %v3794 = vld [vmem:[%s3367 + $0xa0] sm:$0xf]
        %v3795 = vld [vmem:[%s3367 + $0xa4] sm:$0x1]
        %v3796 = vld [vmem:[%s3367 + $0xa8] sm:$0xf]
        %v3797 = vld [vmem:[%s3367 + $0xac] sm:$0xf]
        %v3798 = vld [vmem:[%s3367 + $0xb0] sm:$0x1]
        %v3799 = vld [vmem:[%s3367 + $0xb4] sm:$0xf]
        %v3800 = vld [vmem:[%s3367 + $0xb8] sm:$0xf]
        %v3801 = vld [vmem:[%s3367 + $0xbc] sm:$0x1]
        %v3803 = vshrl.u32 %v3754, 16
        %v3805 = vrot.slane %v3803, 4
        %v3806 = vshll.u32 %v3754, 16
        %v3808 = vrot.slane %v3806, 5
        %v3809 = vor.u32 %v3805, %v3808
        %v3810 = vrot.slane %v3809, 4
        %v3812 = vshll.u32 %v3755, 16
        %v3814 = vrot.slane %v3812, 5
        %v3815 = vsel %vm263, %v3810, %v3814
        %v3816 = vshrl.u32 %v3755, 16
        %v3818 = vrot.slane %v3816, 4
        %v3819 = vor.u32 %v3818, %v3814
        %v3820 = vrot.slane %v3819, 4
        %v3822 = vshll.u32 %v3756, 16
        %v3824 = vrot.slane %v3822, 5
        %v3825 = vsel %vm263, %v3820, %v3824
        %v3827 = vshrl.u32 %v3757, 16
        %v3829 = vrot.slane %v3827, 4
        %v3830 = vshll.u32 %v3757, 16
        %v3832 = vrot.slane %v3830, 5
        %v3833 = vor.u32 %v3829, %v3832
        %v3834 = vrot.slane %v3833, 4
        %v3836 = vshll.u32 %v3758, 16
        %v3838 = vrot.slane %v3836, 5
        %v3839 = vsel %vm263, %v3834, %v3838
        %v3840 = vshrl.u32 %v3758, 16
        %v3842 = vrot.slane %v3840, 4
        %v3843 = vor.u32 %v3842, %v3838
        %v3844 = vrot.slane %v3843, 4
        %v3846 = vshll.u32 %v3759, 16
        %v3848 = vrot.slane %v3846, 5
        %v3849 = vsel %vm263, %v3844, %v3848
        %v3851 = vshrl.u32 %v3760, 16
        %v3853 = vrot.slane %v3851, 4
        %v3854 = vshll.u32 %v3760, 16
        %v3856 = vrot.slane %v3854, 5
        %v3857 = vor.u32 %v3853, %v3856
        %v3858 = vrot.slane %v3857, 4
        %v3860 = vshll.u32 %v3761, 16
        %v3862 = vrot.slane %v3860, 5
        %v3863 = vsel %vm263, %v3858, %v3862
        %v3864 = vshrl.u32 %v3761, 16
        %v3866 = vrot.slane %v3864, 4
        %v3867 = vor.u32 %v3866, %v3862
        %v3868 = vrot.slane %v3867, 4
        %v3870 = vshll.u32 %v3762, 16
        %v3872 = vrot.slane %v3870, 5
        %v3873 = vsel %vm263, %v3868, %v3872
        %v3875 = vshrl.u32 %v3763, 16
        %v3877 = vrot.slane %v3875, 4
        %v3878 = vshll.u32 %v3763, 16
        %v3880 = vrot.slane %v3878, 5
        %v3881 = vor.u32 %v3877, %v3880
        %v3882 = vrot.slane %v3881, 4
        %v3884 = vshll.u32 %v3764, 16
        %v3886 = vrot.slane %v3884, 5
        %v3887 = vsel %vm263, %v3882, %v3886
        %v3888 = vshrl.u32 %v3764, 16
        %v3890 = vrot.slane %v3888, 4
        %v3891 = vor.u32 %v3890, %v3886
        %v3892 = vrot.slane %v3891, 4
        %v3894 = vshll.u32 %v3765, 16
        %v3896 = vrot.slane %v3894, 5
        %v3897 = vsel %vm263, %v3892, %v3896
        %v3899 = vshrl.u32 %v3766, 16
        %v3901 = vrot.slane %v3899, 4
        %v3902 = vshll.u32 %v3766, 16
        %v3904 = vrot.slane %v3902, 5
        %v3905 = vor.u32 %v3901, %v3904
        %v3906 = vrot.slane %v3905, 4
        %v3908 = vshll.u32 %v3767, 16
        %v3910 = vrot.slane %v3908, 5
        %v3911 = vsel %vm263, %v3906, %v3910
        %v3912 = vshrl.u32 %v3767, 16
        %v3914 = vrot.slane %v3912, 4
        %v3915 = vor.u32 %v3914, %v3910
        %v3916 = vrot.slane %v3915, 4
        %v3918 = vshll.u32 %v3768, 16
        %v3920 = vrot.slane %v3918, 5
        %v3921 = vsel %vm263, %v3916, %v3920
        %v3923 = vshrl.u32 %v3769, 16
        %v3925 = vrot.slane %v3923, 4
        %v3926 = vshll.u32 %v3769, 16
        %v3928 = vrot.slane %v3926, 5
        %v3929 = vor.u32 %v3925, %v3928
        %v3930 = vrot.slane %v3929, 4
        %v3932 = vshll.u32 %v3770, 16
        %v3934 = vrot.slane %v3932, 5
        %v3935 = vsel %vm263, %v3930, %v3934
        %v3936 = vshrl.u32 %v3770, 16
        %v3938 = vrot.slane %v3936, 4
        %v3939 = vor.u32 %v3938, %v3934
        %v3940 = vrot.slane %v3939, 4
        %v3942 = vshll.u32 %v3771, 16
        %v3944 = vrot.slane %v3942, 5
        %v3945 = vsel %vm263, %v3940, %v3944
        %v3947 = vshrl.u32 %v3772, 16
        %v3949 = vrot.slane %v3947, 4
        %v3950 = vshll.u32 %v3772, 16
        %v3952 = vrot.slane %v3950, 5
        %v3953 = vor.u32 %v3949, %v3952
        %v3954 = vrot.slane %v3953, 4
        %v3956 = vshll.u32 %v3773, 16
        %v3958 = vrot.slane %v3956, 5
        %v3959 = vsel %vm263, %v3954, %v3958
        %v3960 = vshrl.u32 %v3773, 16
        %v3962 = vrot.slane %v3960, 4
        %v3963 = vor.u32 %v3962, %v3958
        %v3964 = vrot.slane %v3963, 4
        %v3966 = vshll.u32 %v3774, 16
        %v3968 = vrot.slane %v3966, 5
        %v3969 = vsel %vm263, %v3964, %v3968
        %v3971 = vshrl.u32 %v3775, 16
        %v3973 = vrot.slane %v3971, 4
        %v3974 = vshll.u32 %v3775, 16
        %v3976 = vrot.slane %v3974, 5
        %v3977 = vor.u32 %v3973, %v3976
        %v3978 = vrot.slane %v3977, 4
        %v3980 = vshll.u32 %v3776, 16
        %v3982 = vrot.slane %v3980, 5
        %v3983 = vsel %vm263, %v3978, %v3982
        %v3984 = vshrl.u32 %v3776, 16
        %v3986 = vrot.slane %v3984, 4
        %v3987 = vor.u32 %v3986, %v3982
        %v3988 = vrot.slane %v3987, 4
        %v3990 = vshll.u32 %v3777, 16
        %v3992 = vrot.slane %v3990, 5
        %v3993 = vsel %vm263, %v3988, %v3992
        %v3995 = vshrl.u32 %v3778, 16
        %v3997 = vrot.slane %v3995, 4
        %v3998 = vshll.u32 %v3778, 16
        %v4000 = vrot.slane %v3998, 5
        %v4001 = vor.u32 %v3997, %v4000
        %v4002 = vrot.slane %v4001, 4
        %v4004 = vshll.u32 %v3779, 16
        %v4006 = vrot.slane %v4004, 5
        %v4007 = vsel %vm263, %v4002, %v4006
        %v4008 = vshrl.u32 %v3779, 16
        %v4010 = vrot.slane %v4008, 4
        %v4011 = vor.u32 %v4010, %v4006
        %v4012 = vrot.slane %v4011, 4
        %v4014 = vshll.u32 %v3780, 16
        %v4016 = vrot.slane %v4014, 5
        %v4017 = vsel %vm263, %v4012, %v4016
        %v4019 = vshrl.u32 %v3781, 16
        %v4021 = vrot.slane %v4019, 4
        %v4022 = vshll.u32 %v3781, 16
        %v4024 = vrot.slane %v4022, 5
        %v4025 = vor.u32 %v4021, %v4024
        %v4026 = vrot.slane %v4025, 4
        %v4028 = vshll.u32 %v3782, 16
        %v4030 = vrot.slane %v4028, 5
        %v4031 = vsel %vm263, %v4026, %v4030
        %v4032 = vshrl.u32 %v3782, 16
        %v4034 = vrot.slane %v4032, 4
        %v4035 = vor.u32 %v4034, %v4030
        %v4036 = vrot.slane %v4035, 4
        %v4038 = vshll.u32 %v3783, 16
        %v4040 = vrot.slane %v4038, 5
        %v4041 = vsel %vm263, %v4036, %v4040
        %v4043 = vshrl.u32 %v3784, 16
        %v4045 = vrot.slane %v4043, 4
        %v4046 = vshll.u32 %v3784, 16
        %v4048 = vrot.slane %v4046, 5
        %v4049 = vor.u32 %v4045, %v4048
        %v4050 = vrot.slane %v4049, 4
        %v4052 = vshll.u32 %v3785, 16
        %v4054 = vrot.slane %v4052, 5
        %v4055 = vsel %vm263, %v4050, %v4054
        %v4056 = vshrl.u32 %v3785, 16
        %v4058 = vrot.slane %v4056, 4
        %v4059 = vor.u32 %v4058, %v4054
        %v4060 = vrot.slane %v4059, 4
        %v4062 = vshll.u32 %v3786, 16
        %v4064 = vrot.slane %v4062, 5
        %v4065 = vsel %vm263, %v4060, %v4064
        %v4067 = vshrl.u32 %v3787, 16
        %v4069 = vrot.slane %v4067, 4
        %v4070 = vshll.u32 %v3787, 16
        %v4072 = vrot.slane %v4070, 5
        %v4073 = vor.u32 %v4069, %v4072
        %v4074 = vrot.slane %v4073, 4
        %v4076 = vshll.u32 %v3788, 16
        %v4078 = vrot.slane %v4076, 5
        %v4079 = vsel %vm263, %v4074, %v4078
        %v4080 = vshrl.u32 %v3788, 16
        %v4082 = vrot.slane %v4080, 4
        %v4083 = vor.u32 %v4082, %v4078
        %v4084 = vrot.slane %v4083, 4
        %v4086 = vshll.u32 %v3789, 16
        %v4088 = vrot.slane %v4086, 5
        %v4089 = vsel %vm263, %v4084, %v4088
        %v4091 = vshrl.u32 %v3790, 16
        %v4093 = vrot.slane %v4091, 4
        %v4094 = vshll.u32 %v3790, 16
        %v4096 = vrot.slane %v4094, 5
        %v4097 = vor.u32 %v4093, %v4096
        %v4098 = vrot.slane %v4097, 4
        %v4100 = vshll.u32 %v3791, 16
        %v4102 = vrot.slane %v4100, 5
        %v4103 = vsel %vm263, %v4098, %v4102
        %v4104 = vshrl.u32 %v3791, 16
        %v4106 = vrot.slane %v4104, 4
        %v4107 = vor.u32 %v4106, %v4102
        %v4108 = vrot.slane %v4107, 4
        %v4110 = vshll.u32 %v3792, 16
        %v4112 = vrot.slane %v4110, 5
        %v4113 = vsel %vm263, %v4108, %v4112
        %v4115 = vshrl.u32 %v3793, 16
        %v4117 = vrot.slane %v4115, 4
        %v4118 = vshll.u32 %v3793, 16
        %v4120 = vrot.slane %v4118, 5
        %v4121 = vor.u32 %v4117, %v4120
        %v4122 = vrot.slane %v4121, 4
        %v4124 = vshll.u32 %v3794, 16
        %v4126 = vrot.slane %v4124, 5
        %v4127 = vsel %vm263, %v4122, %v4126
        %v4128 = vshrl.u32 %v3794, 16
        %v4130 = vrot.slane %v4128, 4
        %v4131 = vor.u32 %v4130, %v4126
        %v4132 = vrot.slane %v4131, 4
        %v4134 = vshll.u32 %v3795, 16
        %v4136 = vrot.slane %v4134, 5
        %v4137 = vsel %vm263, %v4132, %v4136
        %v4139 = vshrl.u32 %v3796, 16
        %v4141 = vrot.slane %v4139, 4
        %v4142 = vshll.u32 %v3796, 16
        %v4144 = vrot.slane %v4142, 5
        %v4145 = vor.u32 %v4141, %v4144
        %v4146 = vrot.slane %v4145, 4
        %v4148 = vshll.u32 %v3797, 16
        %v4150 = vrot.slane %v4148, 5
        %v4151 = vsel %vm263, %v4146, %v4150
        %v4152 = vshrl.u32 %v3797, 16
        %v4154 = vrot.slane %v4152, 4
        %v4155 = vor.u32 %v4154, %v4150
        %v4156 = vrot.slane %v4155, 4
        %v4158 = vshll.u32 %v3798, 16
        %v4160 = vrot.slane %v4158, 5
        %v4161 = vsel %vm263, %v4156, %v4160
        %v4163 = vshrl.u32 %v3799, 16
        %v4165 = vrot.slane %v4163, 4
        %v4166 = vshll.u32 %v3799, 16
        %v4168 = vrot.slane %v4166, 5
        %v4169 = vor.u32 %v4165, %v4168
        %v4170 = vrot.slane %v4169, 4
        %v4172 = vshll.u32 %v3800, 16
        %v4174 = vrot.slane %v4172, 5
        %v4175 = vsel %vm263, %v4170, %v4174
        %v4176 = vshrl.u32 %v3800, 16
        %v4178 = vrot.slane %v4176, 4
        %v4179 = vor.u32 %v4178, %v4174
        %v4180 = vrot.slane %v4179, 4
        %v4182 = vshll.u32 %v3801, 16
        %v4184 = vrot.slane %v4182, 5
        %v4185 = vsel %vm263, %v4180, %v4184
        %s4186 = scalar_lea.vmem %s1, 448
        %v4187 = vld [vmem:[%s4186] sm:$0xf]
        %v4188 = vld [vmem:[%s4186 + $0x4] sm:$0xf]
        %v4189 = vld [vmem:[%s4186 + $0x8] sm:$0xf]
        %v4190 = vld [vmem:[%s4186 + $0xc] sm:$0xf]
        %v4191 = vld [vmem:[%s4186 + $0x10] sm:$0xf]
        %v4192 = vld [vmem:[%s4186 + $0x14] sm:$0xf]
        %v4193 = vld [vmem:[%s4186 + $0x18] sm:$0xf]
        %v4194 = vld [vmem:[%s4186 + $0x1c] sm:$0xf]
        %v4195 = vld [vmem:[%s4186 + $0x20] sm:$0xf]
        %v4196 = vld [vmem:[%s4186 + $0x24] sm:$0xf]
        %v4197 = vld [vmem:[%s4186 + $0x28] sm:$0xf]
        %v4198 = vld [vmem:[%s4186 + $0x2c] sm:$0xf]
        %v4199 = vld [vmem:[%s4186 + $0x30] sm:$0xf]
        %v4200 = vld [vmem:[%s4186 + $0x34] sm:$0xf]
        %v4201 = vld [vmem:[%s4186 + $0x38] sm:$0xf]
        %v4202 = vld [vmem:[%s4186 + $0x3c] sm:$0xf]
        %v4203 = vunpack.c.l.b16 %v3815
        %v4204 = vunpack.c.l.b16 %v3825
        %v4205 = vunpack.c.l.b16 %v3839
        %v4206 = vunpack.c.l.b16 %v3849
        %v4207 = vunpack.c.l.b16 %v3863
        %v4208 = vunpack.c.l.b16 %v3873
        %v4209 = vunpack.c.l.b16 %v3887
        %v4210 = vunpack.c.l.b16 %v3897
        %v4211 = vunpack.c.l.b16 %v3911
        %v4212 = vunpack.c.l.b16 %v3921
        %v4213 = vunpack.c.l.b16 %v3935
        %v4214 = vunpack.c.l.b16 %v3945
        %v4215 = vunpack.c.l.b16 %v3959
        %v4216 = vunpack.c.l.b16 %v3969
        %v4217 = vunpack.c.l.b16 %v3983
        %v4218 = vunpack.c.l.b16 %v3993
        %v4219 = vunpack.c.l.b16 %v4007
        %v4220 = vunpack.c.l.b16 %v4017
        %v4221 = vunpack.c.l.b16 %v4031
        %v4222 = vunpack.c.l.b16 %v4041
        %v4223 = vunpack.c.l.b16 %v4055
        %v4224 = vunpack.c.l.b16 %v4065
        %v4225 = vunpack.c.l.b16 %v4079
        %v4226 = vunpack.c.l.b16 %v4089
        %v4227 = vunpack.c.l.b16 %v4103
        %v4228 = vunpack.c.l.b16 %v4113
        %v4229 = vunpack.c.l.b16 %v4127
        %v4230 = vunpack.c.l.b16 %v4137
        %v4231 = vunpack.c.l.b16 %v4151
        %v4232 = vunpack.c.l.b16 %v4161
        %v4233 = vunpack.c.l.b16 %v4175
        %v4234 = vunpack.c.l.b16 %v4185
        %v4235 = vpack.c.b16 %v4204, %v4203
        %v4236 = vpack.c.b16 %v4206, %v4205
        %v4237 = vpack.c.b16 %v4208, %v4207
        %v4238 = vpack.c.b16 %v4210, %v4209
        %v4239 = vpack.c.b16 %v4212, %v4211
        %v4240 = vpack.c.b16 %v4214, %v4213
        %v4241 = vpack.c.b16 %v4216, %v4215
        %v4242 = vpack.c.b16 %v4218, %v4217
        %v4243 = vpack.c.b16 %v4220, %v4219
        %v4244 = vpack.c.b16 %v4222, %v4221
        %v4245 = vpack.c.b16 %v4224, %v4223
        %v4246 = vpack.c.b16 %v4226, %v4225
        %v4247 = vpack.c.b16 %v4228, %v4227
        %v4248 = vpack.c.b16 %v4230, %v4229
        %v4249 = vpack.c.b16 %v4232, %v4231
        %v4250 = vpack.c.b16 %v4234, %v4233
        %v4283 = vunpack.c.l.b16 %v4187
        %v4284 = vunpack.c.l.b16 %v4188
        %v4285 = vunpack.c.l.b16 %v4189
        %v4286 = vunpack.c.l.b16 %v4190
        %v4287 = vunpack.c.l.b16 %v4191
        %v4288 = vunpack.c.l.b16 %v4192
        %v4289 = vunpack.c.l.b16 %v4193
        %v4290 = vunpack.c.l.b16 %v4194
        %v4291 = vunpack.c.l.b16 %v4195
        %v4292 = vunpack.c.l.b16 %v4196
        %v4293 = vunpack.c.l.b16 %v4197
        %v4294 = vunpack.c.l.b16 %v4198
        %v4295 = vunpack.c.l.b16 %v4199
        %v4296 = vunpack.c.l.b16 %v4200
        %v4297 = vunpack.c.l.b16 %v4201
        %v4298 = vunpack.c.l.b16 %v4202
        %v4299 = vpack.c.b16 %v4284, %v4283
        %v4300 = vpack.c.b16 %v4286, %v4285
        %v4301 = vpack.c.b16 %v4288, %v4287
        %v4302 = vpack.c.b16 %v4290, %v4289
        %v4303 = vpack.c.b16 %v4292, %v4291
        %v4304 = vpack.c.b16 %v4294, %v4293
        %v4305 = vpack.c.b16 %v4296, %v4295
        %v4306 = vpack.c.b16 %v4298, %v4297
        %4315 = vmatprep.subr.bf16.mxu0 0
        %4316 = vmatpush1.bf16.msra.mxu0 %v4299
        %4317 = vmatprep.subr.bf16.mxu0 0
        %4318 = vmatpush1.bf16.msra.mxu0 %v4300
        %4319 = vmatprep.subr.bf16.mxu0 0
        %4320 = vmatpush1.bf16.msra.mxu0 %v4301
        %4321 = vmatprep.subr.bf16.mxu0 0
        %4322 = vmatpush1.bf16.msra.mxu0 %v4302
        %4323 = vmatprep.subr.bf16.mxu0 0
        %4324 = vmatpush1.bf16.msra.mxu0 %v4303
        %4325 = vmatprep.subr.bf16.mxu0 0
        %4326 = vmatpush1.bf16.msra.mxu0 %v4304
        %4327 = vmatprep.subr.bf16.mxu0 0
        %4328 = vmatpush1.bf16.msra.mxu0 %v4305
        %4329 = vmatprep.subr.bf16.mxu0 0
        %4330 = vmatpush1.bf16.msra.mxu0 %v4306
        %4331 = vmatprep.subr.bf16.mxu0 0
        %4332 = vmatpush1.bf16.msra.mxu0 0
        %4333 = vmatprep.subr.bf16.mxu0 0
        %4334 = vmatpush1.bf16.msra.mxu0 0
        %4335 = vmatprep.subr.bf16.mxu0 0
        %4336 = vmatpush1.bf16.msra.mxu0 0
        %4337 = vmatprep.subr.bf16.mxu0 0
        %4338 = vmatpush1.bf16.msra.mxu0 0
        %4339 = vmatprep.subr.bf16.mxu0 0
        %4340 = vmatpush1.bf16.msra.mxu0 0
        %4341 = vmatprep.subr.bf16.mxu0 0
        %4342 = vmatpush1.bf16.msra.mxu0 0
        %4343 = vmatprep.subr.bf16.mxu0 0
        %4344 = vmatpush1.bf16.msra.mxu0 0
        %4345 = vmatprep.subr.bf16.mxu0 0
        %4346 = vmatpush1.bf16.msra.mxu0 0
        %4347 = vmatprep.mubr.bf16.mxu0 0
        %4348 = vmatmul.mubr.bf16.gmra.mrb[0].mxu0 %v4235
        %v4349 = vpop.f32.mrb[0].mxu0
        %v4350 = vadd.f32 0.0, %v4349
        %v4351 = vpop.f32.mrb[0].mxu0
        %v4352 = vpop.f32.mrb[0].mxu0
        %v4353 = vadd.f32 0.0, %v4352
        %v4354 = vpop.f32.mrb[0].mxu0
        %4355 = vmatprep.mubr.bf16.mxu0 0
        %4356 = vmatmul.mubr.bf16.gmra.mrb[0].mxu0 %v4236
        %v4357 = vpop.f32.mrb[0].mxu0
        %v4358 = vadd.f32 0.0, %v4357
        %v4359 = vpop.f32.mrb[0].mxu0
        %v4360 = vpop.f32.mrb[0].mxu0
        %v4361 = vadd.f32 0.0, %v4360
        %v4362 = vpop.f32.mrb[0].mxu0
        %4363 = vmatprep.mubr.bf16.mxu0 0
        %4364 = vmatmul.mubr.bf16.gmra.mrb[0].mxu0 %v4237
        %v4365 = vpop.f32.mrb[0].mxu0
        %v4366 = vadd.f32 0.0, %v4365
        %v4367 = vpop.f32.mrb[0].mxu0
        %v4368 = vpop.f32.mrb[0].mxu0
        %v4369 = vadd.f32 0.0, %v4368
        %v4370 = vpop.f32.mrb[0].mxu0
        %4371 = vmatprep.mubr.bf16.mxu0 0
        %4372 = vmatmul.mubr.bf16.gmra.mrb[0].mxu0 %v4238
        %v4373 = vpop.f32.mrb[0].mxu0
        %v4374 = vadd.f32 0.0, %v4373
        %v4375 = vpop.f32.mrb[0].mxu0
        %v4376 = vpop.f32.mrb[0].mxu0
        %v4377 = vadd.f32 0.0, %v4376
        %v4378 = vpop.f32.mrb[0].mxu0
        %4379 = vmatprep.mubr.bf16.mxu0 0
        %4380 = vmatmul.mubr.bf16.gmra.mrb[0].mxu0 %v4239
        %v4381 = vpop.f32.mrb[0].mxu0
        %v4382 = vadd.f32 0.0, %v4381
        %v4383 = vpop.f32.mrb[0].mxu0
        %v4384 = vpop.f32.mrb[0].mxu0
        %v4385 = vadd.f32 0.0, %v4384
        %v4386 = vpop.f32.mrb[0].mxu0
        %4387 = vmatprep.mubr.bf16.mxu0 0
        %4388 = vmatmul.mubr.bf16.gmra.mrb[0].mxu0 %v4240
        %v4389 = vpop.f32.mrb[0].mxu0
        %v4390 = vadd.f32 0.0, %v4389
        %v4391 = vpop.f32.mrb[0].mxu0
        %v4392 = vpop.f32.mrb[0].mxu0
        %v4393 = vadd.f32 0.0, %v4392
        %v4394 = vpop.f32.mrb[0].mxu0
        %4395 = vmatprep.mubr.bf16.mxu0 0
        %4396 = vmatmul.mubr.bf16.gmra.mrb[0].mxu0 %v4241
        %v4397 = vpop.f32.mrb[0].mxu0
        %v4398 = vadd.f32 0.0, %v4397
        %v4399 = vpop.f32.mrb[0].mxu0
        %v4400 = vpop.f32.mrb[0].mxu0
        %v4401 = vadd.f32 0.0, %v4400
        %v4402 = vpop.f32.mrb[0].mxu0
        %4403 = vmatprep.mubr.bf16.mxu0 0
        %4404 = vmatmul.mubr.bf16.gmra.mrb[0].mxu0 %v4242
        %v4405 = vpop.f32.mrb[0].mxu0
        %v4406 = vadd.f32 0.0, %v4405
        %v4407 = vpop.f32.mrb[0].mxu0
        %v4408 = vpop.f32.mrb[0].mxu0
        %v4409 = vadd.f32 0.0, %v4408
        %v4410 = vpop.f32.mrb[0].mxu0
        %4411 = vmatprep.mubr.bf16.mxu0 0
        %4412 = vmatmul.mubr.bf16.gmra.mrb[0].mxu0 %v4243
        %v4413 = vpop.f32.mrb[0].mxu0
        %v4414 = vadd.f32 0.0, %v4413
        %v4415 = vpop.f32.mrb[0].mxu0
        %v4416 = vpop.f32.mrb[0].mxu0
        %v4417 = vadd.f32 0.0, %v4416
        %v4418 = vpop.f32.mrb[0].mxu0
        %4419 = vmatprep.mubr.bf16.mxu0 0
        %4420 = vmatmul.mubr.bf16.gmra.mrb[0].mxu0 %v4244
        %v4421 = vpop.f32.mrb[0].mxu0
        %v4422 = vadd.f32 0.0, %v4421
        %v4423 = vpop.f32.mrb[0].mxu0
        %v4424 = vpop.f32.mrb[0].mxu0
        %v4425 = vadd.f32 0.0, %v4424
        %v4426 = vpop.f32.mrb[0].mxu0
        %4427 = vmatprep.mubr.bf16.mxu0 0
        %4428 = vmatmul.mubr.bf16.gmra.mrb[0].mxu0 %v4245
        %v4429 = vpop.f32.mrb[0].mxu0
        %v4430 = vadd.f32 0.0, %v4429
        %v4431 = vpop.f32.mrb[0].mxu0
        %v4432 = vpop.f32.mrb[0].mxu0
        %v4433 = vadd.f32 0.0, %v4432
        %v4434 = vpop.f32.mrb[0].mxu0
        %4435 = vmatprep.mubr.bf16.mxu0 0
        %4436 = vmatmul.mubr.bf16.gmra.mrb[0].mxu0 %v4246
        %v4437 = vpop.f32.mrb[0].mxu0
        %v4438 = vadd.f32 0.0, %v4437
        %v4439 = vpop.f32.mrb[0].mxu0
        %v4440 = vpop.f32.mrb[0].mxu0
        %v4441 = vadd.f32 0.0, %v4440
        %v4442 = vpop.f32.mrb[0].mxu0
        %4443 = vmatprep.mubr.bf16.mxu0 0
        %4444 = vmatmul.mubr.bf16.gmra.mrb[0].mxu0 %v4247
        %v4445 = vpop.f32.mrb[0].mxu0
        %v4446 = vadd.f32 0.0, %v4445
        %v4447 = vpop.f32.mrb[0].mxu0
        %v4448 = vpop.f32.mrb[0].mxu0
        %v4449 = vadd.f32 0.0, %v4448
        %v4450 = vpop.f32.mrb[0].mxu0
        %4451 = vmatprep.mubr.bf16.mxu0 0
        %4452 = vmatmul.mubr.bf16.gmra.mrb[0].mxu0 %v4248
        %v4453 = vpop.f32.mrb[0].mxu0
        %v4454 = vadd.f32 0.0, %v4453
        %v4455 = vpop.f32.mrb[0].mxu0
        %v4456 = vpop.f32.mrb[0].mxu0
        %v4457 = vadd.f32 0.0, %v4456
        %v4458 = vpop.f32.mrb[0].mxu0
        %4459 = vmatprep.mubr.bf16.mxu0 0
        %4460 = vmatmul.mubr.bf16.gmra.mrb[0].mxu0 %v4249
        %v4461 = vpop.f32.mrb[0].mxu0
        %v4462 = vadd.f32 0.0, %v4461
        %v4463 = vpop.f32.mrb[0].mxu0
        %v4464 = vpop.f32.mrb[0].mxu0
        %v4465 = vadd.f32 0.0, %v4464
        %v4466 = vpop.f32.mrb[0].mxu0
        %4467 = vmatprep.mubr.bf16.mxu0 0
        %4468 = vmatmul.mubr.bf16.gmra.mrb[0].mxu0 %v4250
        %v4469 = vpop.f32.mrb[0].mxu0
        %v4470 = vadd.f32 0.0, %v4469
        %v4471 = vpop.f32.mrb[0].mxu0
        %v4472 = vpop.f32.mrb[0].mxu0
        %v4473 = vadd.f32 0.0, %v4472
        %v4474 = vpop.f32.mrb[0].mxu0
        %4475 = vdwg.mxu0
        %v4476 = vadd.f32 %v3722, %v4350
        %v4477 = vadd.f32 %v3723, %v4353
        %v4478 = vadd.f32 %v3724, %v4358
        %v4479 = vadd.f32 %v3725, %v4361
        %v4480 = vadd.f32 %v3726, %v4366
        %v4481 = vadd.f32 %v3727, %v4369
        %v4482 = vadd.f32 %v3728, %v4374
        %v4483 = vadd.f32 %v3729, %v4377
        %v4484 = vadd.f32 %v3730, %v4382
        %v4485 = vadd.f32 %v3731, %v4385
        %v4486 = vadd.f32 %v3732, %v4390
        %v4487 = vadd.f32 %v3733, %v4393
        %v4488 = vadd.f32 %v3734, %v4398
        %v4489 = vadd.f32 %v3735, %v4401
        %v4490 = vadd.f32 %v3736, %v4406
        %v4491 = vadd.f32 %v3737, %v4409
        %v4492 = vadd.f32 %v3738, %v4414
        %v4493 = vadd.f32 %v3739, %v4417
        %v4494 = vadd.f32 %v3740, %v4422
        %v4495 = vadd.f32 %v3741, %v4425
        %v4496 = vadd.f32 %v3742, %v4430
        %v4497 = vadd.f32 %v3743, %v4433
        %v4498 = vadd.f32 %v3744, %v4438
        %v4499 = vadd.f32 %v3745, %v4441
        %v4500 = vadd.f32 %v3746, %v4446
        %v4501 = vadd.f32 %v3747, %v4449
        %v4502 = vadd.f32 %v3748, %v4454
        %v4503 = vadd.f32 %v3749, %v4457
        %v4504 = vadd.f32 %v3750, %v4462
        %v4505 = vadd.f32 %v3751, %v4465
        %v4506 = vadd.f32 %v3752, %v4470
        %v4507 = vadd.f32 %v3753, %v4473
        %v4508 = vld [vmem:[%s3367] sm:$0xe]
        %v4509 = vld [vmem:[%s3367 + $0xc] sm:$0xe]
        %v4510 = vld [vmem:[%s3367 + $0x18] sm:$0xe]
        %v4511 = vld [vmem:[%s3367 + $0x24] sm:$0xe]
        %v4512 = vld [vmem:[%s3367 + $0x30] sm:$0xe]
        %v4513 = vld [vmem:[%s3367 + $0x3c] sm:$0xe]
        %v4514 = vld [vmem:[%s3367 + $0x48] sm:$0xe]
        %v4515 = vld [vmem:[%s3367 + $0x54] sm:$0xe]
        %v4516 = vld [vmem:[%s3367 + $0x60] sm:$0xe]
        %v4517 = vld [vmem:[%s3367 + $0x6c] sm:$0xe]
        %v4518 = vld [vmem:[%s3367 + $0x78] sm:$0xe]
        %v4519 = vld [vmem:[%s3367 + $0x84] sm:$0xe]
        %v4520 = vld [vmem:[%s3367 + $0x90] sm:$0xe]
        %v4521 = vld [vmem:[%s3367 + $0x9c] sm:$0xe]
        %v4522 = vld [vmem:[%s3367 + $0xa8] sm:$0xe]
        %v4523 = vld [vmem:[%s3367 + $0xb4] sm:$0xe]
        %v4572 = vrot.slane %v4508, 5
        %v4573 = vrot.slane %v4572, 4
        %v4574 = vrot.slane %v3755, 5
        %v4575 = vsel %vm1293, %v4573, %v4574
        %v4576 = vrot.slane %v4574, 4
        %v4577 = vrot.slane %v3756, 5
        %v4578 = vsel %vm1293, %v4576, %v4577
        %v4579 = vrot.slane %v4509, 5
        %v4580 = vrot.slane %v4579, 4
        %v4581 = vrot.slane %v3758, 5
        %v4582 = vsel %vm1293, %v4580, %v4581
        %v4583 = vrot.slane %v4581, 4
        %v4584 = vrot.slane %v3759, 5
        %v4585 = vsel %vm1293, %v4583, %v4584
        %v4586 = vrot.slane %v4510, 5
        %v4587 = vrot.slane %v4586, 4
        %v4588 = vrot.slane %v3761, 5
        %v4589 = vsel %vm1293, %v4587, %v4588
        %v4590 = vrot.slane %v4588, 4
        %v4591 = vrot.slane %v3762, 5
        %v4592 = vsel %vm1293, %v4590, %v4591
        %v4593 = vrot.slane %v4511, 5
        %v4594 = vrot.slane %v4593, 4
        %v4595 = vrot.slane %v3764, 5
        %v4596 = vsel %vm1293, %v4594, %v4595
        %v4597 = vrot.slane %v4595, 4
        %v4598 = vrot.slane %v3765, 5
        %v4599 = vsel %vm1293, %v4597, %v4598
        %v4600 = vrot.slane %v4512, 5
        %v4601 = vrot.slane %v4600, 4
        %v4602 = vrot.slane %v3767, 5
        %v4603 = vsel %vm1293, %v4601, %v4602
        %v4604 = vrot.slane %v4602, 4
        %v4605 = vrot.slane %v3768, 5
        %v4606 = vsel %vm1293, %v4604, %v4605
        %v4607 = vrot.slane %v4513, 5
        %v4608 = vrot.slane %v4607, 4
        %v4609 = vrot.slane %v3770, 5
        %v4610 = vsel %vm1293, %v4608, %v4609
        %v4611 = vrot.slane %v4609, 4
        %v4612 = vrot.slane %v3771, 5
        %v4613 = vsel %vm1293, %v4611, %v4612
        %v4614 = vrot.slane %v4514, 5
        %v4615 = vrot.slane %v4614, 4
        %v4616 = vrot.slane %v3773, 5
        %v4617 = vsel %vm1293, %v4615, %v4616
        %v4618 = vrot.slane %v4616, 4
        %v4619 = vrot.slane %v3774, 5
        %v4620 = vsel %vm1293, %v4618, %v4619
        %v4621 = vrot.slane %v4515, 5
        %v4622 = vrot.slane %v4621, 4
        %v4623 = vrot.slane %v3776, 5
        %v4624 = vsel %vm1293, %v4622, %v4623
        %v4625 = vrot.slane %v4623, 4
        %v4626 = vrot.slane %v3777, 5
        %v4627 = vsel %vm1293, %v4625, %v4626
        %v4628 = vrot.slane %v4516, 5
        %v4629 = vrot.slane %v4628, 4
        %v4630 = vrot.slane %v3779, 5
        %v4631 = vsel %vm1293, %v4629, %v4630
        %v4632 = vrot.slane %v4630, 4
        %v4633 = vrot.slane %v3780, 5
        %v4634 = vsel %vm1293, %v4632, %v4633
        %v4635 = vrot.slane %v4517, 5
        %v4636 = vrot.slane %v4635, 4
        %v4637 = vrot.slane %v3782, 5
        %v4638 = vsel %vm1293, %v4636, %v4637
        %v4639 = vrot.slane %v4637, 4
        %v4640 = vrot.slane %v3783, 5
        %v4641 = vsel %vm1293, %v4639, %v4640
        %v4642 = vrot.slane %v4518, 5
        %v4643 = vrot.slane %v4642, 4
        %v4644 = vrot.slane %v3785, 5
        %v4645 = vsel %vm1293, %v4643, %v4644
        %v4646 = vrot.slane %v4644, 4
        %v4647 = vrot.slane %v3786, 5
        %v4648 = vsel %vm1293, %v4646, %v4647
        %v4649 = vrot.slane %v4519, 5
        %v4650 = vrot.slane %v4649, 4
        %v4651 = vrot.slane %v3788, 5
        %v4652 = vsel %vm1293, %v4650, %v4651
        %v4653 = vrot.slane %v4651, 4
        %v4654 = vrot.slane %v3789, 5
        %v4655 = vsel %vm1293, %v4653, %v4654
        %v4656 = vrot.slane %v4520, 5
        %v4657 = vrot.slane %v4656, 4
        %v4658 = vrot.slane %v3791, 5
        %v4659 = vsel %vm1293, %v4657, %v4658
        %v4660 = vrot.slane %v4658, 4
        %v4661 = vrot.slane %v3792, 5
        %v4662 = vsel %vm1293, %v4660, %v4661
        %v4663 = vrot.slane %v4521, 5
        %v4664 = vrot.slane %v4663, 4
        %v4665 = vrot.slane %v3794, 5
        %v4666 = vsel %vm1293, %v4664, %v4665
        %v4667 = vrot.slane %v4665, 4
        %v4668 = vrot.slane %v3795, 5
        %v4669 = vsel %vm1293, %v4667, %v4668
        %v4670 = vrot.slane %v4522, 5
        %v4671 = vrot.slane %v4670, 4
        %v4672 = vrot.slane %v3797, 5
        %v4673 = vsel %vm1293, %v4671, %v4672
        %v4674 = vrot.slane %v4672, 4
        %v4675 = vrot.slane %v3798, 5
        %v4676 = vsel %vm1293, %v4674, %v4675
        %v4677 = vrot.slane %v4523, 5
        %v4678 = vrot.slane %v4677, 4
        %v4679 = vrot.slane %v3800, 5
        %v4680 = vsel %vm1293, %v4678, %v4679
        %v4681 = vrot.slane %v4679, 4
        %v4682 = vrot.slane %v3801, 5
        %v4683 = vsel %vm1293, %v4681, %v4682
        %s4684 = scalar_lea.vmem %s1, 512
        %v4685 = vld [vmem:[%s4684] sm:$0xf]
        %v4686 = vld [vmem:[%s4684 + $0x4] sm:$0xf]
        %v4687 = vld [vmem:[%s4684 + $0x8] sm:$0xf]
        %v4688 = vld [vmem:[%s4684 + $0xc] sm:$0xf]
        %v4689 = vld [vmem:[%s4684 + $0x10] sm:$0xf]
        %v4690 = vld [vmem:[%s4684 + $0x14] sm:$0xf]
        %v4691 = vld [vmem:[%s4684 + $0x18] sm:$0xf]
        %v4692 = vld [vmem:[%s4684 + $0x1c] sm:$0xf]
        %v4693 = vld [vmem:[%s4684 + $0x20] sm:$0xf]
        %v4694 = vld [vmem:[%s4684 + $0x24] sm:$0xf]
        %v4695 = vld [vmem:[%s4684 + $0x28] sm:$0xf]
        %v4696 = vld [vmem:[%s4684 + $0x2c] sm:$0xf]
        %v4697 = vld [vmem:[%s4684 + $0x30] sm:$0xf]
        %v4698 = vld [vmem:[%s4684 + $0x34] sm:$0xf]
        %v4699 = vld [vmem:[%s4684 + $0x38] sm:$0xf]
        %v4700 = vld [vmem:[%s4684 + $0x3c] sm:$0xf]
        %v4701 = vunpack.c.l.b16 %v4575
        %v4702 = vunpack.c.l.b16 %v4578
        %v4703 = vunpack.c.l.b16 %v4582
        %v4704 = vunpack.c.l.b16 %v4585
        %v4705 = vunpack.c.l.b16 %v4589
        %v4706 = vunpack.c.l.b16 %v4592
        %v4707 = vunpack.c.l.b16 %v4596
        %v4708 = vunpack.c.l.b16 %v4599
        %v4709 = vunpack.c.l.b16 %v4603
        %v4710 = vunpack.c.l.b16 %v4606
        %v4711 = vunpack.c.l.b16 %v4610
        %v4712 = vunpack.c.l.b16 %v4613
        %v4713 = vunpack.c.l.b16 %v4617
        %v4714 = vunpack.c.l.b16 %v4620
        %v4715 = vunpack.c.l.b16 %v4624
        %v4716 = vunpack.c.l.b16 %v4627
        %v4717 = vunpack.c.l.b16 %v4631
        %v4718 = vunpack.c.l.b16 %v4634
        %v4719 = vunpack.c.l.b16 %v4638
        %v4720 = vunpack.c.l.b16 %v4641
        %v4721 = vunpack.c.l.b16 %v4645
        %v4722 = vunpack.c.l.b16 %v4648
        %v4723 = vunpack.c.l.b16 %v4652
        %v4724 = vunpack.c.l.b16 %v4655
        %v4725 = vunpack.c.l.b16 %v4659
        %v4726 = vunpack.c.l.b16 %v4662
        %v4727 = vunpack.c.l.b16 %v4666
        %v4728 = vunpack.c.l.b16 %v4669
        %v4729 = vunpack.c.l.b16 %v4673
        %v4730 = vunpack.c.l.b16 %v4676
        %v4731 = vunpack.c.l.b16 %v4680
        %v4732 = vunpack.c.l.b16 %v4683
        %v4733 = vpack.c.b16 %v4702, %v4701
        %v4734 = vpack.c.b16 %v4704, %v4703
        %v4735 = vpack.c.b16 %v4706, %v4705
        %v4736 = vpack.c.b16 %v4708, %v4707
        %v4737 = vpack.c.b16 %v4710, %v4709
        %v4738 = vpack.c.b16 %v4712, %v4711
        %v4739 = vpack.c.b16 %v4714, %v4713
        %v4740 = vpack.c.b16 %v4716, %v4715
        %v4741 = vpack.c.b16 %v4718, %v4717
        %v4742 = vpack.c.b16 %v4720, %v4719
        %v4743 = vpack.c.b16 %v4722, %v4721
        %v4744 = vpack.c.b16 %v4724, %v4723
        %v4745 = vpack.c.b16 %v4726, %v4725
        %v4746 = vpack.c.b16 %v4728, %v4727
        %v4747 = vpack.c.b16 %v4730, %v4729
        %v4748 = vpack.c.b16 %v4732, %v4731
        %v4781 = vunpack.c.l.b16 %v4685
        %v4782 = vunpack.c.l.b16 %v4686
        %v4783 = vunpack.c.l.b16 %v4687
        %v4784 = vunpack.c.l.b16 %v4688
        %v4785 = vunpack.c.l.b16 %v4689
        %v4786 = vunpack.c.l.b16 %v4690
        %v4787 = vunpack.c.l.b16 %v4691
        %v4788 = vunpack.c.l.b16 %v4692
        %v4789 = vunpack.c.l.b16 %v4693
        %v4790 = vunpack.c.l.b16 %v4694
        %v4791 = vunpack.c.l.b16 %v4695
        %v4792 = vunpack.c.l.b16 %v4696
        %v4793 = vunpack.c.l.b16 %v4697
        %v4794 = vunpack.c.l.b16 %v4698
        %v4795 = vunpack.c.l.b16 %v4699
        %v4796 = vunpack.c.l.b16 %v4700
        %v4797 = vpack.c.b16 %v4782, %v4781
        %v4798 = vpack.c.b16 %v4784, %v4783
        %v4799 = vpack.c.b16 %v4786, %v4785
        %v4800 = vpack.c.b16 %v4788, %v4787
        %v4801 = vpack.c.b16 %v4790, %v4789
        %v4802 = vpack.c.b16 %v4792, %v4791
        %v4803 = vpack.c.b16 %v4794, %v4793
        %v4804 = vpack.c.b16 %v4796, %v4795
        %4813 = vmatprep.subr.bf16.mxu0 0
        %4814 = vmatpush1.bf16.msra.mxu0 %v4797
        %4815 = vmatprep.subr.bf16.mxu0 0
        %4816 = vmatpush1.bf16.msra.mxu0 %v4798
        %4817 = vmatprep.subr.bf16.mxu0 0
        %4818 = vmatpush1.bf16.msra.mxu0 %v4799
        %4819 = vmatprep.subr.bf16.mxu0 0
        %4820 = vmatpush1.bf16.msra.mxu0 %v4800
        %4821 = vmatprep.subr.bf16.mxu0 0
        %4822 = vmatpush1.bf16.msra.mxu0 %v4801
        %4823 = vmatprep.subr.bf16.mxu0 0
        %4824 = vmatpush1.bf16.msra.mxu0 %v4802
        %4825 = vmatprep.subr.bf16.mxu0 0
        %4826 = vmatpush1.bf16.msra.mxu0 %v4803
        %4827 = vmatprep.subr.bf16.mxu0 0
        %4828 = vmatpush1.bf16.msra.mxu0 %v4804
        %4829 = vmatprep.subr.bf16.mxu0 0
        %4830 = vmatpush1.bf16.msra.mxu0 0
        %4831 = vmatprep.subr.bf16.mxu0 0
        %4832 = vmatpush1.bf16.msra.mxu0 0
        %4833 = vmatprep.subr.bf16.mxu0 0
        %4834 = vmatpush1.bf16.msra.mxu0 0
        %4835 = vmatprep.subr.bf16.mxu0 0
        %4836 = vmatpush1.bf16.msra.mxu0 0
        %4837 = vmatprep.subr.bf16.mxu0 0
        %4838 = vmatpush1.bf16.msra.mxu0 0
        %4839 = vmatprep.subr.bf16.mxu0 0
        %4840 = vmatpush1.bf16.msra.mxu0 0
        %4841 = vmatprep.subr.bf16.mxu0 0
        %4842 = vmatpush1.bf16.msra.mxu0 0
        %4843 = vmatprep.subr.bf16.mxu0 0
        %4844 = vmatpush1.bf16.msra.mxu0 0
        %4845 = vmatprep.mubr.bf16.mxu0 0
        %4846 = vmatmul.mubr.bf16.gmra.mrb[0].mxu0 %v4733
        %v4847 = vpop.f32.mrb[0].mxu0
        %v4848 = vadd.f32 0.0, %v4847
        %v4849 = vpop.f32.mrb[0].mxu0
        %v4850 = vpop.f32.mrb[0].mxu0
        %v4851 = vadd.f32 0.0, %v4850
        %v4852 = vpop.f32.mrb[0].mxu0
        %4853 = vmatprep.mubr.bf16.mxu0 0
        %4854 = vmatmul.mubr.bf16.gmra.mrb[0].mxu0 %v4734
        %v4855 = vpop.f32.mrb[0].mxu0
        %v4856 = vadd.f32 0.0, %v4855
        %v4857 = vpop.f32.mrb[0].mxu0
        %v4858 = vpop.f32.mrb[0].mxu0
        %v4859 = vadd.f32 0.0, %v4858
        %v4860 = vpop.f32.mrb[0].mxu0
        %4861 = vmatprep.mubr.bf16.mxu0 0
        %4862 = vmatmul.mubr.bf16.gmra.mrb[0].mxu0 %v4735
        %v4863 = vpop.f32.mrb[0].mxu0
        %v4864 = vadd.f32 0.0, %v4863
        %v4865 = vpop.f32.mrb[0].mxu0
        %v4866 = vpop.f32.mrb[0].mxu0
        %v4867 = vadd.f32 0.0, %v4866
        %v4868 = vpop.f32.mrb[0].mxu0
        %4869 = vmatprep.mubr.bf16.mxu0 0
        %4870 = vmatmul.mubr.bf16.gmra.mrb[0].mxu0 %v4736
        %v4871 = vpop.f32.mrb[0].mxu0
        %v4872 = vadd.f32 0.0, %v4871
        %v4873 = vpop.f32.mrb[0].mxu0
        %v4874 = vpop.f32.mrb[0].mxu0
        %v4875 = vadd.f32 0.0, %v4874
        %v4876 = vpop.f32.mrb[0].mxu0
        %4877 = vmatprep.mubr.bf16.mxu0 0
        %4878 = vmatmul.mubr.bf16.gmra.mrb[0].mxu0 %v4737
        %v4879 = vpop.f32.mrb[0].mxu0
        %v4880 = vadd.f32 0.0, %v4879
        %v4881 = vpop.f32.mrb[0].mxu0
        %v4882 = vpop.f32.mrb[0].mxu0
        %v4883 = vadd.f32 0.0, %v4882
        %v4884 = vpop.f32.mrb[0].mxu0
        %4885 = vmatprep.mubr.bf16.mxu0 0
        %4886 = vmatmul.mubr.bf16.gmra.mrb[0].mxu0 %v4738
        %v4887 = vpop.f32.mrb[0].mxu0
        %v4888 = vadd.f32 0.0, %v4887
        %v4889 = vpop.f32.mrb[0].mxu0
        %v4890 = vpop.f32.mrb[0].mxu0
        %v4891 = vadd.f32 0.0, %v4890
        %v4892 = vpop.f32.mrb[0].mxu0
        %4893 = vmatprep.mubr.bf16.mxu0 0
        %4894 = vmatmul.mubr.bf16.gmra.mrb[0].mxu0 %v4739
        %v4895 = vpop.f32.mrb[0].mxu0
        %v4896 = vadd.f32 0.0, %v4895
        %v4897 = vpop.f32.mrb[0].mxu0
        %v4898 = vpop.f32.mrb[0].mxu0
        %v4899 = vadd.f32 0.0, %v4898
        %v4900 = vpop.f32.mrb[0].mxu0
        %4901 = vmatprep.mubr.bf16.mxu0 0
        %4902 = vmatmul.mubr.bf16.gmra.mrb[0].mxu0 %v4740
        %v4903 = vpop.f32.mrb[0].mxu0
        %v4904 = vadd.f32 0.0, %v4903
        %v4905 = vpop.f32.mrb[0].mxu0
        %v4906 = vpop.f32.mrb[0].mxu0
        %v4907 = vadd.f32 0.0, %v4906
        %v4908 = vpop.f32.mrb[0].mxu0
        %4909 = vmatprep.mubr.bf16.mxu0 0
        %4910 = vmatmul.mubr.bf16.gmra.mrb[0].mxu0 %v4741
        %v4911 = vpop.f32.mrb[0].mxu0
        %v4912 = vadd.f32 0.0, %v4911
        %v4913 = vpop.f32.mrb[0].mxu0
        %v4914 = vpop.f32.mrb[0].mxu0
        %v4915 = vadd.f32 0.0, %v4914
        %v4916 = vpop.f32.mrb[0].mxu0
        %4917 = vmatprep.mubr.bf16.mxu0 0
        %4918 = vmatmul.mubr.bf16.gmra.mrb[0].mxu0 %v4742
        %v4919 = vpop.f32.mrb[0].mxu0
        %v4920 = vadd.f32 0.0, %v4919
        %v4921 = vpop.f32.mrb[0].mxu0
        %v4922 = vpop.f32.mrb[0].mxu0
        %v4923 = vadd.f32 0.0, %v4922
        %v4924 = vpop.f32.mrb[0].mxu0
        %4925 = vmatprep.mubr.bf16.mxu0 0
        %4926 = vmatmul.mubr.bf16.gmra.mrb[0].mxu0 %v4743
        %v4927 = vpop.f32.mrb[0].mxu0
        %v4928 = vadd.f32 0.0, %v4927
        %v4929 = vpop.f32.mrb[0].mxu0
        %v4930 = vpop.f32.mrb[0].mxu0
        %v4931 = vadd.f32 0.0, %v4930
        %v4932 = vpop.f32.mrb[0].mxu0
        %4933 = vmatprep.mubr.bf16.mxu0 0
        %4934 = vmatmul.mubr.bf16.gmra.mrb[0].mxu0 %v4744
        %v4935 = vpop.f32.mrb[0].mxu0
        %v4936 = vadd.f32 0.0, %v4935
        %v4937 = vpop.f32.mrb[0].mxu0
        %v4938 = vpop.f32.mrb[0].mxu0
        %v4939 = vadd.f32 0.0, %v4938
        %v4940 = vpop.f32.mrb[0].mxu0
        %4941 = vmatprep.mubr.bf16.mxu0 0
        %4942 = vmatmul.mubr.bf16.gmra.mrb[0].mxu0 %v4745
        %v4943 = vpop.f32.mrb[0].mxu0
        %v4944 = vadd.f32 0.0, %v4943
        %v4945 = vpop.f32.mrb[0].mxu0
        %v4946 = vpop.f32.mrb[0].mxu0
        %v4947 = vadd.f32 0.0, %v4946
        %v4948 = vpop.f32.mrb[0].mxu0
        %4949 = vmatprep.mubr.bf16.mxu0 0
        %4950 = vmatmul.mubr.bf16.gmra.mrb[0].mxu0 %v4746
        %v4951 = vpop.f32.mrb[0].mxu0
        %v4952 = vadd.f32 0.0, %v4951
        %v4953 = vpop.f32.mrb[0].mxu0
        %v4954 = vpop.f32.mrb[0].mxu0
        %v4955 = vadd.f32 0.0, %v4954
        %v4956 = vpop.f32.mrb[0].mxu0
        %4957 = vmatprep.mubr.bf16.mxu0 0
        %4958 = vmatmul.mubr.bf16.gmra.mrb[0].mxu0 %v4747
        %v4959 = vpop.f32.mrb[0].mxu0
        %v4960 = vadd.f32 0.0, %v4959
        %v4961 = vpop.f32.mrb[0].mxu0
        %v4962 = vpop.f32.mrb[0].mxu0
        %v4963 = vadd.f32 0.0, %v4962
        %v4964 = vpop.f32.mrb[0].mxu0
        %4965 = vmatprep.mubr.bf16.mxu0 0
        %4966 = vmatmul.mubr.bf16.gmra.mrb[0].mxu0 %v4748
        %v4967 = vpop.f32.mrb[0].mxu0
        %v4968 = vadd.f32 0.0, %v4967
        %v4969 = vpop.f32.mrb[0].mxu0
        %v4970 = vpop.f32.mrb[0].mxu0
        %v4971 = vadd.f32 0.0, %v4970
        %v4972 = vpop.f32.mrb[0].mxu0
        %4973 = vdwg.mxu0
        %v4974 = vadd.f32 %v4476, %v4848
        %v4975 = vadd.f32 %v4477, %v4851
        %v4976 = vadd.f32 %v4478, %v4856
        %v4977 = vadd.f32 %v4479, %v4859
        %v4978 = vadd.f32 %v4480, %v4864
        %v4979 = vadd.f32 %v4481, %v4867
        %v4980 = vadd.f32 %v4482, %v4872
        %v4981 = vadd.f32 %v4483, %v4875
        %v4982 = vadd.f32 %v4484, %v4880
        %v4983 = vadd.f32 %v4485, %v4883
        %v4984 = vadd.f32 %v4486, %v4888
        %v4985 = vadd.f32 %v4487, %v4891
        %v4986 = vadd.f32 %v4488, %v4896
        %v4987 = vadd.f32 %v4489, %v4899
        %v4988 = vadd.f32 %v4490, %v4904
        %v4989 = vadd.f32 %v4491, %v4907
        %v4990 = vadd.f32 %v4492, %v4912
        %v4991 = vadd.f32 %v4493, %v4915
        %v4992 = vadd.f32 %v4494, %v4920
        %v4993 = vadd.f32 %v4495, %v4923
        %v4994 = vadd.f32 %v4496, %v4928
        %v4995 = vadd.f32 %v4497, %v4931
        %v4996 = vadd.f32 %v4498, %v4936
        %v4997 = vadd.f32 %v4499, %v4939
        %v4998 = vadd.f32 %v4500, %v4944
        %v4999 = vadd.f32 %v4501, %v4947
        %v5000 = vadd.f32 %v4502, %v4952
        %v5001 = vadd.f32 %v4503, %v4955
        %v5002 = vadd.f32 %v4504, %v4960
        %v5003 = vadd.f32 %v4505, %v4963
        %v5004 = vadd.f32 %v4506, %v4968
        %v5005 = vadd.f32 %v4507, %v4971
        %v5006 = vpack.c.bf16 %v4975, %v4974
        %v5007 = vpack.c.bf16 %v4977, %v4976
        %v5008 = vpack.c.bf16 %v4979, %v4978
        %v5009 = vpack.c.bf16 %v4981, %v4980
        %v5010 = vpack.c.bf16 %v4983, %v4982
        %v5011 = vpack.c.bf16 %v4985, %v4984
        %v5012 = vpack.c.bf16 %v4987, %v4986
        %v5013 = vpack.c.bf16 %v4989, %v4988
        %v5014 = vpack.c.bf16 %v4991, %v4990
        %v5015 = vpack.c.bf16 %v4993, %v4992
        %v5016 = vpack.c.bf16 %v4995, %v4994
        %v5017 = vpack.c.bf16 %v4997, %v4996
        %v5018 = vpack.c.bf16 %v4999, %v4998
        %v5019 = vpack.c.bf16 %v5001, %v5000
        %v5020 = vpack.c.bf16 %v5003, %v5002
        %v5021 = vpack.c.bf16 %v5005, %v5004
        %v5038 = vunpack.c.l.b16 %v5006
        %v5039 = vunpack.c.h.b16 %v5006
        %v5040 = vunpack.c.l.b16 %v5007
        %v5041 = vunpack.c.h.b16 %v5007
        %v5042 = vunpack.c.l.b16 %v5008
        %v5043 = vunpack.c.h.b16 %v5008
        %v5044 = vunpack.c.l.b16 %v5009
        %v5045 = vunpack.c.h.b16 %v5009
        %v5046 = vunpack.c.l.b16 %v5010
        %v5047 = vunpack.c.h.b16 %v5010
        %v5048 = vunpack.c.l.b16 %v5011
        %v5049 = vunpack.c.h.b16 %v5011
        %v5050 = vunpack.c.l.b16 %v5012
        %v5051 = vunpack.c.h.b16 %v5012
        %v5052 = vunpack.c.l.b16 %v5013
        %v5053 = vunpack.c.h.b16 %v5013
        %v5054 = vunpack.c.l.b16 %v5014
        %v5055 = vunpack.c.h.b16 %v5014
        %v5056 = vunpack.c.l.b16 %v5015
        %v5057 = vunpack.c.h.b16 %v5015
        %v5058 = vunpack.c.l.b16 %v5016
        %v5059 = vunpack.c.h.b16 %v5016
        %v5060 = vunpack.c.l.b16 %v5017
        %v5061 = vunpack.c.h.b16 %v5017
        %v5062 = vunpack.c.l.b16 %v5018
        %v5063 = vunpack.c.h.b16 %v5018
        %v5064 = vunpack.c.l.b16 %v5019
        %v5065 = vunpack.c.h.b16 %v5019
        %v5066 = vunpack.c.l.b16 %v5020
        %v5067 = vunpack.c.h.b16 %v5020
        %v5068 = vunpack.c.l.b16 %v5021
        %v5069 = vunpack.c.h.b16 %v5021
        %v5070 = vpack.c.b16 %v5038, %v5038
        %v5071 = vpack.c.b16 %v5039, %v5039
        %v5072 = vpack.c.b16 %v5040, %v5040
        %v5073 = vpack.c.b16 %v5041, %v5041
        %v5074 = vpack.c.b16 %v5042, %v5042
        %v5075 = vpack.c.b16 %v5043, %v5043
        %v5076 = vpack.c.b16 %v5044, %v5044
        %v5077 = vpack.c.b16 %v5045, %v5045
        %v5078 = vpack.c.b16 %v5046, %v5046
        %v5079 = vpack.c.b16 %v5047, %v5047
        %v5080 = vpack.c.b16 %v5048, %v5048
        %v5081 = vpack.c.b16 %v5049, %v5049
        %v5082 = vpack.c.b16 %v5050, %v5050
        %v5083 = vpack.c.b16 %v5051, %v5051
        %v5084 = vpack.c.b16 %v5052, %v5052
        %v5085 = vpack.c.b16 %v5053, %v5053
        %v5086 = vpack.c.b16 %v5054, %v5054
        %v5087 = vpack.c.b16 %v5055, %v5055
        %v5088 = vpack.c.b16 %v5056, %v5056
        %v5089 = vpack.c.b16 %v5057, %v5057
        %v5090 = vpack.c.b16 %v5058, %v5058
        %v5091 = vpack.c.b16 %v5059, %v5059
        %v5092 = vpack.c.b16 %v5060, %v5060
        %v5093 = vpack.c.b16 %v5061, %v5061
        %v5094 = vpack.c.b16 %v5062, %v5062
        %v5095 = vpack.c.b16 %v5063, %v5063
        %v5096 = vpack.c.b16 %v5064, %v5064
        %v5097 = vpack.c.b16 %v5065, %v5065
        %v5098 = vpack.c.b16 %v5066, %v5066
        %v5099 = vpack.c.b16 %v5067, %v5067
        %v5100 = vpack.c.b16 %v5068, %v5068
        %v5101 = vpack.c.b16 %v5069, %v5069
        %5134 = vst [vmem:[%s183] sm:$0xf] %v5070
        %5135 = vst [vmem:[%s183 + $0x4] sm:$0xf] %v5071
        %5136 = vst [vmem:[%s183 + $0x8] sm:$0xf] %v5072
        %5137 = vst [vmem:[%s183 + $0xc] sm:$0xf] %v5073
        %5138 = vst [vmem:[%s183 + $0x10] sm:$0xf] %v5074
        %5139 = vst [vmem:[%s183 + $0x14] sm:$0xf] %v5075
        %5140 = vst [vmem:[%s183 + $0x18] sm:$0xf] %v5076
        %5141 = vst [vmem:[%s183 + $0x1c] sm:$0xf] %v5077
        %5142 = vst [vmem:[%s183 + $0x20] sm:$0xf] %v5078
        %5143 = vst [vmem:[%s183 + $0x24] sm:$0xf] %v5079
        %5144 = vst [vmem:[%s183 + $0x28] sm:$0xf] %v5080
        %5145 = vst [vmem:[%s183 + $0x2c] sm:$0xf] %v5081
        %5146 = vst [vmem:[%s183 + $0x30] sm:$0xf] %v5082
        %5147 = vst [vmem:[%s183 + $0x34] sm:$0xf] %v5083
        %5148 = vst [vmem:[%s183 + $0x38] sm:$0xf] %v5084
        %5149 = vst [vmem:[%s183 + $0x3c] sm:$0xf] %v5085
        %5150 = vst [vmem:[%s183 + $0x40] sm:$0xf] %v5086
        %5151 = vst [vmem:[%s183 + $0x44] sm:$0xf] %v5087
        %5152 = vst [vmem:[%s183 + $0x48] sm:$0xf] %v5088
        %5153 = vst [vmem:[%s183 + $0x4c] sm:$0xf] %v5089
        %5154 = vst [vmem:[%s183 + $0x50] sm:$0xf] %v5090
        %5155 = vst [vmem:[%s183 + $0x54] sm:$0xf] %v5091
        %5156 = vst [vmem:[%s183 + $0x58] sm:$0xf] %v5092
        %5157 = vst [vmem:[%s183 + $0x5c] sm:$0xf] %v5093
        %5158 = vst [vmem:[%s183 + $0x60] sm:$0xf] %v5094
        %5159 = vst [vmem:[%s183 + $0x64] sm:$0xf] %v5095
        %5160 = vst [vmem:[%s183 + $0x68] sm:$0xf] %v5096
        %5161 = vst [vmem:[%s183 + $0x6c] sm:$0xf] %v5097
        %5162 = vst [vmem:[%s183 + $0x70] sm:$0xf] %v5098
        %5163 = vst [vmem:[%s183 + $0x74] sm:$0xf] %v5099
        %5164 = vst [vmem:[%s183 + $0x78] sm:$0xf] %v5100
        %5165 = vst [vmem:[%s183 + $0x7c] sm:$0xf] %v5101
        %v5166 = vadd.f32 %v4974, %v4975
        %v5167 = vadd.f32 %v5166, %v4976
        %v5168 = vadd.f32 %v5167, %v4977
        %v5169 = vadd.f32 %v5168, %v4978
        %v5170 = vadd.f32 %v5169, %v4979
        %v5171 = vadd.f32 %v5170, %v4980
        %v5172 = vadd.f32 %v5171, %v4981
        %v5173 = vadd.f32 %v5172, %v4982
        %v5174 = vadd.f32 %v5173, %v4983
        %v5175 = vadd.f32 %v5174, %v4984
        %v5176 = vadd.f32 %v5175, %v4985
        %v5177 = vadd.f32 %v5176, %v4986
        %v5178 = vadd.f32 %v5177, %v4987
        %v5179 = vadd.f32 %v5178, %v4988
        %v5180 = vadd.f32 %v5179, %v4989
        %v5181 = vadd.f32 %v5180, %v4990
        %v5182 = vadd.f32 %v5181, %v4991
        %v5183 = vadd.f32 %v5182, %v4992
        %v5184 = vadd.f32 %v5183, %v4993
        %v5185 = vadd.f32 %v5184, %v4994
        %v5186 = vadd.f32 %v5185, %v4995
        %v5187 = vadd.f32 %v5186, %v4996
        %v5188 = vadd.f32 %v5187, %v4997
        %v5189 = vadd.f32 %v5188, %v4998
        %v5190 = vadd.f32 %v5189, %v4999
        %v5191 = vadd.f32 %v5190, %v5000
        %v5192 = vadd.f32 %v5191, %v5001
        %v5193 = vadd.f32 %v5192, %v5002
        %v5194 = vadd.f32 %v5193, %v5003
        %v5195 = vadd.f32 %v5194, %v5004
        %v5196 = vadd.f32 %v5195, %v5005
        %v5197 = vrot.slane %v5196, 4
        %v5198 = vadd.f32 %v5196, %v5197
        %v5199 = vrot.slane %v5198, 2
        %v5200 = vadd.f32 %v5198, %v5199
        %v5201 = vrot.slane %v5200, 1
        %v5202 = vadd.f32 %v5200, %v5201
        %v5203 = vadd.f32 %v5202, 0.0
        %v5204 = vmul.f32 %v4974, %v4974
        %v5205 = vmul.f32 %v4975, %v4975
        %v5206 = vmul.f32 %v4976, %v4976
        %v5207 = vmul.f32 %v4977, %v4977
        %v5208 = vmul.f32 %v4978, %v4978
        %v5209 = vmul.f32 %v4979, %v4979
        %v5210 = vmul.f32 %v4980, %v4980
        %v5211 = vmul.f32 %v4981, %v4981
        %v5212 = vmul.f32 %v4982, %v4982
        %v5213 = vmul.f32 %v4983, %v4983
        %v5214 = vmul.f32 %v4984, %v4984
        %v5215 = vmul.f32 %v4985, %v4985
        %v5216 = vmul.f32 %v4986, %v4986
        %v5217 = vmul.f32 %v4987, %v4987
        %v5218 = vmul.f32 %v4988, %v4988
        %v5219 = vmul.f32 %v4989, %v4989
        %v5220 = vmul.f32 %v4990, %v4990
        %v5221 = vmul.f32 %v4991, %v4991
        %v5222 = vmul.f32 %v4992, %v4992
        %v5223 = vmul.f32 %v4993, %v4993
        %v5224 = vmul.f32 %v4994, %v4994
        %v5225 = vmul.f32 %v4995, %v4995
        %v5226 = vmul.f32 %v4996, %v4996
        %v5227 = vmul.f32 %v4997, %v4997
        %v5228 = vmul.f32 %v4998, %v4998
        %v5229 = vmul.f32 %v4999, %v4999
        %v5230 = vmul.f32 %v5000, %v5000
        %v5231 = vmul.f32 %v5001, %v5001
        %v5232 = vmul.f32 %v5002, %v5002
        %v5233 = vmul.f32 %v5003, %v5003
        %v5234 = vmul.f32 %v5004, %v5004
        %v5235 = vmul.f32 %v5005, %v5005
        %v5236 = vadd.f32 %v5204, %v5205
        %v5237 = vadd.f32 %v5236, %v5206
        %v5238 = vadd.f32 %v5237, %v5207
        %v5239 = vadd.f32 %v5238, %v5208
        %v5240 = vadd.f32 %v5239, %v5209
        %v5241 = vadd.f32 %v5240, %v5210
        %v5242 = vadd.f32 %v5241, %v5211
        %v5243 = vadd.f32 %v5242, %v5212
        %v5244 = vadd.f32 %v5243, %v5213
        %v5245 = vadd.f32 %v5244, %v5214
        %v5246 = vadd.f32 %v5245, %v5215
        %v5247 = vadd.f32 %v5246, %v5216
        %v5248 = vadd.f32 %v5247, %v5217
        %v5249 = vadd.f32 %v5248, %v5218
        %v5250 = vadd.f32 %v5249, %v5219
        %v5251 = vadd.f32 %v5250, %v5220
        %v5252 = vadd.f32 %v5251, %v5221
        %v5253 = vadd.f32 %v5252, %v5222
        %v5254 = vadd.f32 %v5253, %v5223
        %v5255 = vadd.f32 %v5254, %v5224
        %v5256 = vadd.f32 %v5255, %v5225
        %v5257 = vadd.f32 %v5256, %v5226
        %v5258 = vadd.f32 %v5257, %v5227
        %v5259 = vadd.f32 %v5258, %v5228
        %v5260 = vadd.f32 %v5259, %v5229
        %v5261 = vadd.f32 %v5260, %v5230
        %v5262 = vadd.f32 %v5261, %v5231
        %v5263 = vadd.f32 %v5262, %v5232
        %v5264 = vadd.f32 %v5263, %v5233
        %v5265 = vadd.f32 %v5264, %v5234
        %v5266 = vadd.f32 %v5265, %v5235
        %v5267 = vrot.slane %v5266, 4
        %v5268 = vadd.f32 %v5266, %v5267
        %v5269 = vrot.slane %v5268, 2
        %v5270 = vadd.f32 %v5268, %v5269
        %v5271 = vrot.slane %v5270, 1
        %v5272 = vadd.f32 %v5270, %v5271
        %v5273 = vadd.f32 %v5272, 0.0
        %5274 = vst [vmem:[%s190] sm:$0x1] %v5203
        %5275 = vst [vmem:[%s190 + $0x1] sm:$0x1] %v5273
        %s5276 = sand.u32 %s90, 1
        %s5277 = scalar_lea.sflag [#allocation3], %s5276
        %s5278 = sand.u32 %s90, 1
        %s5279 = smul.addr %s5278, 128
        %s5280 = scalar_lea.vmem [#allocation2], %s5279
        %s5281 = sand.u32 %s118, 1
        %s5282 = scalar_lea.sflag [#allocation5], %s5281
        %s5283 = sand.u32 %s118, 1
        %s5284 = smul.addr %s5283, 2
        %s5285 = scalar_lea.vmem [#allocation4], %s5284
        // Predicated region
        $region29: #{tpu_custom_call.1} parent=27 // pred_check
          %p5286 = pneg %p100
        $region30: #{tpu_custom_call.1} parent=27 // pred_check_branch
          %5288 = sbr.rel (%p5286) target = $region32
        $region31: #{tpu_custom_call.1} parent=27 // pred_region
          %s5290 = ssub.s32 2048, 2048
          %5291 = vsyncadd %s5277, %s5290
          %s5292 = smul.addr %s25, 32
          %s5293 = sadd.s32 %s26, %s5292
          %s5294 = smul.addr %s5293, 64
          %s5295 = scalar_lea.hbm %s2, %s5294
          %s5296 = sshll.u32 %s5280, 4
          %s5297 = int_to_ptr.vmem [resolvable:$true] %s5296
          %5302 = dma.vmem_to_hbm [thread:$0]  %s5297, 2048, %s5295, %s5277, 64, 64, 4
        $region32: #{tpu_custom_call.1} parent=27 // pred_fallthru
          _
        // Predicated region
        $region33: #{tpu_custom_call.1} parent=27 // pred_check
          %p5303 = pneg %p128
        $region34: #{tpu_custom_call.1} parent=27 // pred_check_branch
          %5305 = sbr.rel (%p5303) target = $region36
        $region35: #{tpu_custom_call.1} parent=27 // pred_region
          %s5307 = ssub.s32 32, 32
          %5308 = vsyncadd %s5282, %s5307
          %s5309 = sadd.s32 %s26, %s25
          %s5310 = smul.addr %s5309, 32
          %s5311 = scalar_lea.hbm %s3, %s5310
          %s5313 = sshll.u32 %s5285, 4
          %s5314 = int_to_ptr.vmem [resolvable:$true] %s5313
          %5316 = dma.vmem_to_hbm [thread:$0]  %s5314, 32, %s5311, %s5282
        $region36: #{tpu_custom_call.1} parent=27 // pred_fallthru
          _
      $region28: #{tpu_custom_call.1} parent=5 // pred_fallthru
        _
      %p5317 = scmp.le.s32.totalorder 2, %s16
      // Predicated region
      $region37: #{tpu_custom_call.1} parent=5 // pred_check
        %p5318 = pneg %p5317
      $region38: #{tpu_custom_call.1} parent=5 // pred_check_branch
        %5320 = sbr.rel (%p5318) target = $region40
      $region39: #{tpu_custom_call.1} parent=5 // pred_region
        %s5321 = ssub.s32 %s16, 2
        // Predicated region
        $region41: #{tpu_custom_call.1} parent=39 // pred_check
          %p5322 = pneg %p106
        $region42: #{tpu_custom_call.1} parent=39 // pred_check_branch
          %5324 = sbr.rel (%p5322) target = $region44
        $region43: #{tpu_custom_call.1} parent=39 // pred_region
          %s5325 = sand.u32 %s91, 1
          %s5326 = scalar_lea.sflag [#allocation3], %s5325
          %s5327 = sand.u32 %s91, 1
          %s5328 = smul.addr %s5327, 128
          %s5329 = scalar_lea.vmem [#allocation2], %s5328
          %5330 = dma.done %s5326, 2048
        $region44: #{tpu_custom_call.1} parent=39 // pred_fallthru
          _
        // Predicated region
        $region45: #{tpu_custom_call.1} parent=39 // pred_check
          %p5331 = pneg %p134
        $region46: #{tpu_custom_call.1} parent=39 // pred_check_branch
          %5333 = sbr.rel (%p5331) target = $region48
        $region47: #{tpu_custom_call.1} parent=39 // pred_region
          %s5334 = sand.u32 %s119, 1
          %s5335 = scalar_lea.sflag [#allocation5], %s5334
          %s5336 = sand.u32 %s119, 1
          %s5337 = smul.addr %s5336, 2
          %s5338 = scalar_lea.vmem [#allocation4], %s5337
          %5339 = dma.done %s5335, 32
        $region48: #{tpu_custom_call.1} parent=39 // pred_fallthru
          _
      $region40: #{tpu_custom_call.1} parent=5 // pred_fallthru
        _
    $region6: #{tpu_custom_call.1} parent=1 // loop_footer
      %s20 = sadd.s32 1, %s16
    $region7: #{tpu_custom_call.1} parent=1 // loop_footer_branch
      %15 = sbr.rel target = $region3
    $region8: #{tpu_custom_call.1} parent=1 // loop_exit
      _
    %5340 = vsyncpa [#allocation3], 1
    %s5341 = scalar_lea.sflag [#allocation3], 1
    %5342 = vsyncpa %s5341, 1
    %5343 = vsyncpa [#allocation5], 1
    %s5344 = scalar_lea.sflag [#allocation5], 1
    %5345 = vsyncpa %s5344, 1

</llo_original>
